<compile_context>
chip_gen: v7x
topology: tpu7x:2x2x1
jax: 0.10.0
libtpu: 0.0.40
codegen_flags: <defaults>
</compile_context>

<pallas_src>
import jax
import jax.numpy as jnp
from jax.experimental import pallas as pl
from jax.experimental.pallas import tpu as pltpu


_SQRT_2_OVER_PI = 0.7978845608028654


def _gelu_tanh(x):
    # tanh-approximate GELU (EUP tanh path; safe Mosaic lowering).
    return 0.5 * x * (1.0 + jnp.tanh(_SQRT_2_OVER_PI * (x + 0.044715 * x * x * x)))


def _round_up(x, m):
    return ((x + m - 1) // m) * m


def _grounding_kernel(encT_ref, encI_ref, mask_ref,
                      wq_ref, bq_ref, wk_ref, bk_ref,
                      w2_ref, b2_ref,
                      out_ref, q_scratch):
    # Q projection: only recompute when the RoI-block index resets (r == 0);
    # the result is cached in VMEM scratch and reused across RoI blocks.
    @pl.when(pl.program_id(2) == 0)
    def _():
        q = jnp.dot(encT_ref[0], wq_ref[...],
                    preferred_element_type=jnp.float32) + bq_ref[...]
        q_scratch[...] = _gelu_tanh(q)                      # (TT, P) f32

    # K projection for this RoI block (bf16 MXU, f32 accumulation).
    k = jnp.dot(encI_ref[0], wk_ref[...],
                preferred_element_type=jnp.float32) + bk_ref[...]
    k = _gelu_tanh(k)                                       # (TR, P)

    q = q_scratch[...]                                      # (TT, P)

    # fusion = tanh(Q[t] + K[r])  -> (TT, TR, P), bounded by tile choice.
    h = jnp.tanh(q[:, None, :] + k[None, :, :])

    # Linear(P -> 1): broadcast-mul (VPU) + lane reduce (XLU), not a 1-wide matmul.
    logits = jnp.sum(h * w2_ref[...][None, :, :], axis=-1)  # (TT, TR)
    logits = logits + b2_ref[0, 0]                          # scalar from SMEM

    out_ref[0] = logits + mask_ref[0, 0]


def linear_sum_grounding(encT, encI, mask, params):
    """Pallas wrapper. Grid = (batch, n_tok blocks, n_RoI blocks)."""
    wq, bq, wk, bk, w2, b2 = params
    B, n_tok, T_hidden = encT.shape
    _, n_RoI, I_hidden = encI.shape
    P = wq.shape[1]

    # ---- tile sizes: lane-dense TR (multiple of 128), TT multiple of 16
    #      (bf16 sublane packing), (TT, TR, P) f32 intermediate <= ~4 MiB. ----
    budget = 4 * 1024 * 1024
    TT = min(64, _round_up(n_tok, 16))
    TR = 128
    while TR < _round_up(n_RoI, 128) and TR < 512 and TT * (2 * TR) * P * 4 <= budget:
        TR *= 2
    T_pad = _round_up(n_tok, TT)
    R_pad = _round_up(n_RoI, TR)

    # ---- pad + cast activations (bf16 matmul inputs, f32 accumulation). ----
    encT_p = jnp.pad(encT, ((0, 0), (0, T_pad - n_tok), (0, 0))).astype(jnp.bfloat16)
    encI_p = jnp.pad(encI, ((0, 0), (0, R_pad - n_RoI), (0, 0))).astype(jnp.bfloat16)
    mask_p = jnp.pad(mask, ((0, 0), (0, 0), (0, T_pad - n_tok), (0, R_pad - n_RoI)))
    wq_b = wq.astype(jnp.bfloat16)
    wk_b = wk.astype(jnp.bfloat16)

    grid = (B, T_pad // TT, R_pad // TR)
    full = lambda a: pl.BlockSpec(a.shape, lambda b, t, r: (0,) * a.ndim)

    out = pl.pallas_call(
        _grounding_kernel,
        out_shape=jax.ShapeDtypeStruct((B, T_pad, R_pad), jnp.float32),
        grid_spec=pltpu.PrefetchScalarGridSpec(
            num_scalar_prefetch=0,
            grid=grid,
            in_specs=[
                pl.BlockSpec((1, TT, T_hidden), lambda b, t, r: (b, t, 0)),
                pl.BlockSpec((1, TR, I_hidden), lambda b, t, r: (b, r, 0)),
                pl.BlockSpec((1, 1, TT, TR), lambda b, t, r: (b, 0, t, r)),
                full(wq_b), full(bq),
                full(wk_b), full(bk),
                full(w2),
                pl.BlockSpec(memory_space=pltpu.MemorySpace.SMEM),   # b2 scalar
            ],
            out_specs=pl.BlockSpec((1, TT, TR), lambda b, t, r: (b, t, r)),
            scratch_shapes=[pltpu.VMEM((TT, P), jnp.float32)],       # cached Q
        ),
        compiler_params=pltpu.CompilerParams(
            dimension_semantics=("parallel", "parallel", "arbitrary"),
            vmem_limit_bytes=32 * 1024 * 1024),
    )(encT_p, encI_p, mask_p, wq_b, bq, wk_b, bk, w2, b2)

    return out[:, :n_tok, :n_RoI]


def reference(encT, encI, mask, params):
    """Pure-JAX reference mirroring the PyTorch forward exactly (erf GELU, f32)."""
    wq, bq, wk, bk, w2, b2 = params
    q = jax.nn.gelu(encT @ wq + bq[0], approximate=False)   # (B, n_tok, P)
    k = jax.nn.gelu(encI @ wk + bk[0], approximate=False)   # (B, n_RoI, P)
    fusion = jnp.tanh(q[:, :, None, :] + k[:, None, :, :])  # (B, n_tok, n_RoI, P)
    logits = jnp.einsum('btrp,p->btr', fusion, w2[0]) + b2[0, 0]
    return logits + mask[:, 0]


if __name__ == "__main__":
    # Small, module-consistent shapes.
    B, n_tok, n_RoI = 2, 8, 16
    T_hidden, I_hidden = 32, 32
    P = I_hidden // 2                       # self.projection

    key = jax.random.PRNGKey(0)
    ks = jax.random.split(key, 10)
    scale = 0.1
    encT = jax.random.normal(ks[0], (B, n_tok, T_hidden), jnp.float32)
    encI = jax.random.normal(ks[1], (B, n_RoI, I_hidden), jnp.float32)
    mask = jnp.where(jax.random.uniform(ks[2], (B, 1, n_tok, n_RoI)) > 0.2,
                     0.0, -1e4).astype(jnp.float32)

    # Parameters stored as (in, out); biases as (1, out).
    wq = scale * jax.random.normal(ks[3], (T_hidden, P), jnp.float32)
    bq = scale * jax.random.normal(ks[4], (1, P), jnp.float32)
    wk = scale * jax.random.normal(ks[5], (I_hidden, P), jnp.float32)
    bk = scale * jax.random.normal(ks[6], (1, P), jnp.float32)
    w2 = scale * jax.random.normal(ks[7], (1, P), jnp.float32)   # Linear(P -> 1) weight
    b2 = scale * jax.random.normal(ks[8], (1, 1), jnp.float32)   # Linear(P -> 1) bias
    params = (wq, bq, wk, bk, w2, b2)

    out = linear_sum_grounding(encT, encI, mask, params)
    out = jax.block_until_ready(out)

    ref = reference(encT, encI, mask, params)
    assert out.shape == (B, n_tok, n_RoI)
    err = jnp.max(jnp.abs(out - ref))
    # Tolerance loosened for bf16 matmul inputs + tanh-approx GELU.
    assert jnp.allclose(out, ref, atol=2e-2, rtol=2e-2), f"max abs err {err}"

    print("KERNEL_OK")
</pallas_src>

<mosaic_0001>
module attributes {stable_mosaic.version = 11 : i64} {
  func.func @_grounding_kernel(%arg0: i32, %arg1: i32, %arg2: i32, %arg3: memref<1x16x32xbf16, #tpu.memory_space<vmem>>, %arg4: memref<1x128x32xbf16, #tpu.memory_space<vmem>>, %arg5: memref<1x1x16x128xf32, #tpu.memory_space<vmem>>, %arg6: memref<32x16xbf16, #tpu.memory_space<vmem>>, %arg7: memref<1x16xf32, #tpu.memory_space<vmem>>, %arg8: memref<32x16xbf16, #tpu.memory_space<vmem>>, %arg9: memref<1x16xf32, #tpu.memory_space<vmem>>, %arg10: memref<1x16xf32, #tpu.memory_space<vmem>>, %arg11: memref<1x1xf32, #tpu.memory_space<smem>>, %arg12: memref<1x16x128xf32, #tpu.memory_space<vmem>>, %arg13: memref<16x16xf32, #tpu.memory_space<vmem>>) attributes {dimension_semantics = [#tpu.dimension_semantics<parallel>, #tpu.dimension_semantics<parallel>, #tpu.dimension_semantics<arbitrary>], iteration_bounds = array<i64: 2, 1, 1>, scalar_prefetch = 0 : i64, scratch_operands = 1 : i64, tpu.core_type = #tpu.core_type<tc>, window_params = [{transform_indices = @transform_0, window_bounds = array<i64: 1, 16, 32>}, {transform_indices = @transform_1, window_bounds = array<i64: 1, 128, 32>}, {transform_indices = @transform_2, window_bounds = array<i64: 1, 1, 16, 128>}, {pipeline_mode = #tpu.pipeline_mode<synchronous>, transform_indices = @transform_3, window_bounds = array<i64: 32, 16>}, {pipeline_mode = #tpu.pipeline_mode<synchronous>, transform_indices = @transform_4, window_bounds = array<i64: 1, 16>}, {pipeline_mode = #tpu.pipeline_mode<synchronous>, transform_indices = @transform_5, window_bounds = array<i64: 32, 16>}, {pipeline_mode = #tpu.pipeline_mode<synchronous>, transform_indices = @transform_6, window_bounds = array<i64: 1, 16>}, {pipeline_mode = #tpu.pipeline_mode<synchronous>, transform_indices = @transform_7, window_bounds = array<i64: 1, 16>}, {transform_indices = @transform_8, window_bounds = array<i64: 1, 1>}, {transform_indices = @transform_9, window_bounds = array<i64: 1, 16, 128>}]} {
    %c0_i32 = arith.constant 0 : i32
    %0 = arith.cmpi eq, %arg2, %c0_i32 : i32
    %1 = arith.extui %0 : i1 to i32
    %c0_i32_0 = arith.constant 0 : i32
    %2 = arith.cmpi ne, %1, %c0_i32_0 : i32
    scf.if %2 {
      %c0_25 = arith.constant 0 : index
      %c0_26 = arith.constant 0 : index
      %c0_27 = arith.constant 0 : index
      %44 = vector.load %arg3[%c0_25, %c0_26, %c0_27] : memref<1x16x32xbf16, #tpu.memory_space<vmem>>, vector<1x16x32xbf16>
      %45 = vector.shape_cast %44 : vector<1x16x32xbf16> to vector<16x32xbf16>
      %c0_28 = arith.constant 0 : index
      %c0_29 = arith.constant 0 : index
      %46 = vector.load %arg6[%c0_28, %c0_29] : memref<32x16xbf16, #tpu.memory_space<vmem>>, vector<32x16xbf16>
      %cst_30 = arith.constant dense<0.000000e+00> : vector<16x16xf32>
      %47 = tpu.matmul %45, %46, %cst_30 {dimension_numbers = #tpu.dot_dimension_numbers<[1], [0], [0], [1], [0, 0, 1, 1], [], []>} : vector<16x32xbf16>, vector<32x16xbf16>, vector<16x16xf32> -> vector<16x16xf32>
      %c0_31 = arith.constant 0 : index
      %c0_32 = arith.constant 0 : index
      %48 = vector.load %arg7[%c0_31, %c0_32] : memref<1x16xf32, #tpu.memory_space<vmem>>, vector<1x16xf32>
      %49 = vector.broadcast %48 : vector<1x16xf32> to vector<16x16xf32>
      %50 = arith.addf %47, %49 : vector<16x16xf32>
      %cst_33 = arith.constant 5.000000e-01 : f32
      %51 = vector.broadcast %cst_33 : f32 to vector<16x16xf32>
      %52 = arith.mulf %51, %50 : vector<16x16xf32>
      %cst_34 = arith.constant 4.471500e-02 : f32
      %53 = vector.broadcast %cst_34 : f32 to vector<16x16xf32>
      %54 = arith.mulf %53, %50 : vector<16x16xf32>
      %55 = arith.mulf %54, %50 : vector<16x16xf32>
      %56 = arith.mulf %55, %50 : vector<16x16xf32>
      %57 = arith.addf %50, %56 : vector<16x16xf32>
      %cst_35 = arith.constant 0.797884583 : f32
      %58 = vector.broadcast %cst_35 : f32 to vector<16x16xf32>
      %59 = arith.mulf %58, %57 : vector<16x16xf32>
      %60 = math.tanh %59 : vector<16x16xf32>
      %cst_36 = arith.constant 1.000000e+00 : f32
      %61 = vector.broadcast %cst_36 : f32 to vector<16x16xf32>
      %62 = arith.addf %61, %60 : vector<16x16xf32>
      %63 = arith.mulf %52, %62 : vector<16x16xf32>
      %c0_37 = arith.constant 0 : index
      %c0_38 = arith.constant 0 : index
      %64 = vector.load %arg13[%c0_37, %c0_38] : memref<16x16xf32, #tpu.memory_space<vmem>>, vector<16x16xf32>
      tpu.vector_store %arg13[%c0_37, %c0_38], %63 {strides = array<i32>} : memref<16x16xf32, #tpu.memory_space<vmem>>, vector<16x16xf32>,
    } else {
    }
    %c0 = arith.constant 0 : index
    %c0_1 = arith.constant 0 : index
    %c0_2 = arith.constant 0 : index
    %3 = vector.load %arg4[%c0, %c0_1, %c0_2] : memref<1x128x32xbf16, #tpu.memory_space<vmem>>, vector<1x128x32xbf16>
    %4 = vector.shape_cast %3 : vector<1x128x32xbf16> to vector<128x32xbf16>
    %c0_3 = arith.constant 0 : index
    %c0_4 = arith.constant 0 : index
    %5 = vector.load %arg8[%c0_3, %c0_4] : memref<32x16xbf16, #tpu.memory_space<vmem>>, vector<32x16xbf16>
    %cst = arith.constant dense<0.000000e+00> : vector<128x16xf32>
    %6 = tpu.matmul %4, %5, %cst {dimension_numbers = #tpu.dot_dimension_numbers<[1], [0], [0], [1], [0, 0, 1, 1], [], []>} : vector<128x32xbf16>, vector<32x16xbf16>, vector<128x16xf32> -> vector<128x16xf32>
    %c0_5 = arith.constant 0 : index
    %c0_6 = arith.constant 0 : index
    %7 = vector.load %arg9[%c0_5, %c0_6] : memref<1x16xf32, #tpu.memory_space<vmem>>, vector<1x16xf32>
    %8 = vector.broadcast %7 : vector<1x16xf32> to vector<128x16xf32>
    %9 = arith.addf %6, %8 : vector<128x16xf32>
    %cst_7 = arith.constant 5.000000e-01 : f32
    %10 = vector.broadcast %cst_7 : f32 to vector<128x16xf32>
    %11 = arith.mulf %10, %9 : vector<128x16xf32>
    %cst_8 = arith.constant 4.471500e-02 : f32
    %12 = vector.broadcast %cst_8 : f32 to vector<128x16xf32>
    %13 = arith.mulf %12, %9 : vector<128x16xf32>
    %14 = arith.mulf %13, %9 : vector<128x16xf32>
    %15 = arith.mulf %14, %9 : vector<128x16xf32>
    %16 = arith.addf %9, %15 : vector<128x16xf32>
    %cst_9 = arith.constant 0.797884583 : f32
    %17 = vector.broadcast %cst_9 : f32 to vector<128x16xf32>
    %18 = arith.mulf %17, %16 : vector<128x16xf32>
    %19 = math.tanh %18 : vector<128x16xf32>
    %cst_10 = arith.constant 1.000000e+00 : f32
    %20 = vector.broadcast %cst_10 : f32 to vector<128x16xf32>
    %21 = arith.addf %20, %19 : vector<128x16xf32>
    %22 = arith.mulf %11, %21 : vector<128x16xf32>
    %c0_11 = arith.constant 0 : index
    %c0_12 = arith.constant 0 : index
    %23 = vector.load %arg13[%c0_11, %c0_12] : memref<16x16xf32, #tpu.memory_space<vmem>>, vector<16x16xf32>
    %24 = vector.shape_cast %23 : vector<16x16xf32> to vector<16x1x16xf32>
    %25 = vector.shape_cast %22 : vector<128x16xf32> to vector<1x128x16xf32>
    %26 = vector.broadcast %24 : vector<16x1x16xf32> to vector<16x128x16xf32>
    %27 = vector.broadcast %25 : vector<1x128x16xf32> to vector<16x128x16xf32>
    %28 = arith.addf %26, %27 : vector<16x128x16xf32>
    %29 = math.tanh %28 : vector<16x128x16xf32>
    %c0_13 = arith.constant 0 : index
    %c0_14 = arith.constant 0 : index
    %30 = vector.load %arg10[%c0_13, %c0_14] : memref<1x16xf32, #tpu.memory_space<vmem>>, vector<1x16xf32>
    %31 = vector.shape_cast %30 : vector<1x16xf32> to vector<1x1x16xf32>
    %32 = vector.broadcast %31 : vector<1x1x16xf32> to vector<16x128x16xf32>
    %33 = arith.mulf %29, %32 : vector<16x128x16xf32>
    %cst_15 = arith.constant dense<0.000000e+00> : vector<16x128xf32>
    %34 = vector.multi_reduction <add>, %33, %cst_15 [2] : vector<16x128x16xf32> to vector<16x128xf32>
    %c0_16 = arith.constant 0 : index
    %c0_17 = arith.constant 0 : index
    %35 = memref.load %arg11[%c0_16, %c0_17] : memref<1x1xf32, #tpu.memory_space<smem>>
    %36 = vector.broadcast %35 : f32 to vector<16x128xf32>
    %37 = arith.addf %34, %36 : vector<16x128xf32>
    %c0_18 = arith.constant 0 : index
    %c0_19 = arith.constant 0 : index
    %c0_20 = arith.constant 0 : index
    %c0_21 = arith.constant 0 : index
    %38 = vector.load %arg5[%c0_18, %c0_19, %c0_20, %c0_21] : memref<1x1x16x128xf32, #tpu.memory_space<vmem>>, vector<1x1x16x128xf32>
    %39 = vector.shape_cast %38 : vector<1x1x16x128xf32> to vector<16x128xf32>
    %40 = arith.addf %37, %39 : vector<16x128xf32>
    %c0_22 = arith.constant 0 : index
    %c0_23 = arith.constant 0 : index
    %c0_24 = arith.constant 0 : index
    %41 = vector.load %arg12[%c0_22, %c0_23, %c0_24] : memref<1x16x128xf32, #tpu.memory_space<vmem>>, vector<1x16x128xf32>
    %42 = vector.shape_cast %41 : vector<1x16x128xf32> to vector<16x128xf32>
    %43 = vector.shape_cast %40 : vector<16x128xf32> to vector<1x16x128xf32>
    tpu.vector_store %arg12[%c0_22, %c0_23, %c0_24], %43 {strides = array<i32>} : memref<1x16x128xf32, #tpu.memory_space<vmem>>, vector<1x16x128xf32>,
    return
  }
  func.func @transform_0(%arg0: i32, %arg1: i32, %arg2: i32) -> (i32, i32, i32) {
    %c0_i32 = arith.constant 0 : i32
    %c0_i32_0 = arith.constant 0 : i32
    return %arg0, %arg1, %c0_i32 : i32, i32, i32
  }
  func.func @transform_1(%arg0: i32, %arg1: i32, %arg2: i32) -> (i32, i32, i32) {
    %c0_i32 = arith.constant 0 : i32
    %c0_i32_0 = arith.constant 0 : i32
    return %arg0, %arg2, %c0_i32 : i32, i32, i32
  }
  func.func @transform_2(%arg0: i32, %arg1: i32, %arg2: i32) -> (i32, i32, i32, i32) {
    %c0_i32 = arith.constant 0 : i32
    %c0_i32_0 = arith.constant 0 : i32
    return %arg0, %c0_i32, %arg1, %arg2 : i32, i32, i32, i32
  }
  func.func @transform_3(%arg0: i32, %arg1: i32, %arg2: i32) -> (i32, i32) {
    %c0_i32 = arith.constant 0 : i32
    %c0_i32_0 = arith.constant 0 : i32
    %c0_i32_1 = arith.constant 0 : i32
    return %c0_i32, %c0_i32_0 : i32, i32
  }
  func.func @transform_4(%arg0: i32, %arg1: i32, %arg2: i32) -> (i32, i32) {
    %c0_i32 = arith.constant 0 : i32
    %c0_i32_0 = arith.constant 0 : i32
    %c0_i32_1 = arith.constant 0 : i32
    return %c0_i32, %c0_i32_0 : i32, i32
  }
  func.func @transform_5(%arg0: i32, %arg1: i32, %arg2: i32) -> (i32, i32) {
    %c0_i32 = arith.constant 0 : i32
    %c0_i32_0 = arith.constant 0 : i32
    %c0_i32_1 = arith.constant 0 : i32
    return %c0_i32, %c0_i32_0 : i32, i32
  }
  func.func @transform_6(%arg0: i32, %arg1: i32, %arg2: i32) -> (i32, i32) {
    %c0_i32 = arith.constant 0 : i32
    %c0_i32_0 = arith.constant 0 : i32
    %c0_i32_1 = arith.constant 0 : i32
    return %c0_i32, %c0_i32_0 : i32, i32
  }
  func.func @transform_7(%arg0: i32, %arg1: i32, %arg2: i32) -> (i32, i32) {
    %c0_i32 = arith.constant 0 : i32
    %c0_i32_0 = arith.constant 0 : i32
    %c0_i32_1 = arith.constant 0 : i32
    return %c0_i32, %c0_i32_0 : i32, i32
  }
  func.func @transform_8(%arg0: i32, %arg1: i32, %arg2: i32) -> (i32, i32) {
    %c0_i32 = arith.constant 0 : i32
    %c0_i32_0 = arith.constant 0 : i32
    %c0_i32_1 = arith.constant 0 : i32
    return %c0_i32, %c0_i32_0 : i32, i32
  }
  func.func @transform_9(%arg0: i32, %arg1: i32, %arg2: i32) -> (i32, i32, i32) {
    %c0_i32 = arith.constant 0 : i32
    return %arg0, %arg1, %arg2 : i32, i32, i32
  }
}

</mosaic_0001>

<llo_original>
// kernel: tpu_custom_call.1
$region0: #{tpu_custom_call.1}
  #allocation0 [shape = 'u32[]', space=smem, size = 0x4, offset = 0x4, fixed_abs, tag = 'smem constant byte address 0x4 - core index']
  #allocation1 [shape = 'u32[144,128]{1,0:T(1,128)}', space=vmem, size = 0x12000, scoped, tag = 'internal scratch']
  #allocation2 [shape = 'f32[16,16]{1,0:T(8,128)}', space=vmem, size = 0x2000, scoped, tag = 'scratch operand']
  #allocation3 [shape = 'f32[1,1]{1,0:T(1,128)S(6)}', space=smem, size = 0x200, scoped, tag = 'scoped memory for tpu_custom_call.1']
  %s0 = inlined_call_operand.vmem [shape: bf16[2,16,32], index: 0, kind: input, shape index: {}]
  %s1 = inlined_call_operand.vmem [shape: bf16[2,128,32], index: 1, kind: input, shape index: {}]
  %s2 = inlined_call_operand.vmem [shape: f32[2,1,16,128], index: 2, kind: input, shape index: {}]
  %s3 = inlined_call_operand.vmem [shape: bf16[32,16], index: 3, kind: input, shape index: {}]
  %s4 = inlined_call_operand.vmem [shape: f32[1,16], index: 4, kind: input, shape index: {}]
  %s5 = inlined_call_operand.vmem [shape: bf16[32,16], index: 5, kind: input, shape index: {}]
  %s6 = inlined_call_operand.vmem [shape: f32[1,16], index: 6, kind: input, shape index: {}]
  %s7 = inlined_call_operand.vmem [shape: f32[1,16], index: 7, kind: input, shape index: {}]
  %s8 = inlined_call_operand.<no memory space> [shape: f32[1,1], index: 8, kind: input, shape index: {}]
  %s9 = inlined_call_operand.hbm [shape: f32[2,16,128], index: 9, kind: output, shape index: {}]
  %s10 = sld [smem:[#allocation0]]
  $region73: #{tpu_custom_call.1} parent=0
    _
  %s12 = ssub.s32 1, %s10
  %s13 = scalar_select 0, %s12, %s10
  %14 = sst [smem:[#allocation3]] %s8
  $region1: #{tpu_custom_call.1} parent=0
    #allocation4 [shape = 'u8[16384]{0}', space=vmem, size = 0x4000, scoped, tag = 'output window, operand 0']
    #allocation5 [shape = 's32[2]{0}', space=sflag, size = 0x8, scoped, tag = 'scoped memory for tpu_custom_call.1']
    %15 = vsyncpa [#allocation5], 0
    %s16 = scalar_lea.sflag [#allocation5], 1
    %17 = vsyncpa %s16, 0
    loop: start=0, step=1, limit=4
    $region2: #{tpu_custom_call.1} parent=1 // loop_pre_header
      _
    $region3: #{tpu_custom_call.1} parent=1 // loop_header
      %s19 = sphi 0, %s23
      %p20 = scmp.ge.s32.totalorder %s19, 4
      %s26 = sphi 0, %s45
      %s27 = sphi 0, %s41
      %s28 = sphi 0, %s37
      %s29 = sphi 0, %s26
      %s30 = sphi 0, %s27
      %s31 = sphi 0, %s28
      %s32 = sphi 0, %s29
      %s33 = sphi 0, %s30
      %s34 = sphi 0, %s31
      %s50 = sphi 0, %s52
      %s53 = sphi 0, %s50
      %s54 = sphi 0, %s53
      %s70 = sphi 0, %s54
      %s78 = sphi 0, %s80
      %s81 = sphi 0, %s78
      %s82 = sphi 0, %s81
      %s98 = sphi 0, %s82
      %s108 = sphi 0, %s110
      %s111 = sphi 0, %s108
      %s112 = sphi 0, %s111
      %s128 = sphi 0, %s112
      %s132 = sphi 0, %s132
      %s134 = sphi 0, %s132
      %s135 = sphi 0, %s134
      %s149 = sphi 0, %s135
      %s153 = sphi 0, %s153
      %s155 = sphi 0, %s153
      %s156 = sphi 0, %s155
      %s170 = sphi 0, %s156
      %s174 = sphi 0, %s174
      %s176 = sphi 0, %s174
      %s177 = sphi 0, %s176
      %s191 = sphi 0, %s177
      %s195 = sphi 0, %s195
      %s197 = sphi 0, %s195
      %s198 = sphi 0, %s197
      %s212 = sphi 0, %s198
      %s216 = sphi 0, %s216
      %s218 = sphi 0, %s216
      %s219 = sphi 0, %s218
      %s233 = sphi 0, %s219
      %s237 = sphi 0, %s237
      %s239 = sphi 0, %s237
      %s240 = sphi 0, %s239
      %s254 = sphi 0, %s240
      %s264 = sphi 0, %s266
      %s267 = sphi 0, %s264
      %s268 = sphi 0, %s267
      %s284 = sphi 0, %s268
    $region4: #{tpu_custom_call.1} parent=1 // loop_header_branch
      %22 = sbr.rel (%p20) target = $region8
    $region5: #{tpu_custom_call.1} parent=1 // loop_body
      %s24 = ssub.s32 %s19, 1
      %s25 = ssub.s32 %s19, 2
      %s35 = sadd.s32 1, %s28
      %p36 = scmp.ge.s32.totalorder %s35, 1
      %s37 = scalar_select %p36, 0, %s35
      %s38 = sadd.s32 1, %s27
      %s39 = scalar_select %p36, %s38, %s27
      %p40 = scmp.ge.s32.totalorder %s39, 1
      %s41 = scalar_select %p40, 0, %s39
      %s42 = sadd.s32 1, %s26
      %s43 = scalar_select %p40, %s42, %s26
      %p44 = scmp.ge.s32.totalorder %s43, 2
      %s45 = scalar_select %p44, 0, %s43
      %s46 = ssub.s32 %s26, %s45
      %s47 = ssub.s32 %s27, %s41
      %s48 = sor.u32 %s46, %s47
      %p49 = scmp.eq.s32.totalorder %s48, 0
      %s51 = sadd.s32 %s50, 1
      %s52 = scalar_select %p49, %s50, %s51
      %p55 = pneg %p49
      %p56 = scmp.eq.s32.totalorder %s19, 1
      %p57 = por %p55, %p56
      %p58 = scmp.ne.s32.totalorder %s50, %s53
      %p59 = scmp.eq.s32.totalorder %s19, 0
      %p60 = por %p58, %p59
      %p61 = scmp.ne.s32.totalorder %s50, %s53
      %p62 = scmp.eq.s32.totalorder %s24, 1
      %p63 = por %p61, %p62
      %p64 = scmp.ne.s32.totalorder %s53, %s54
      %p65 = scmp.eq.s32.totalorder %s24, 0
      %p66 = por %p64, %p65
      %p67 = scmp.ne.s32.totalorder %s53, %s54
      %p68 = scmp.eq.s32.totalorder %s25, 1
      %p69 = por %p67, %p68
      %p71 = scmp.ne.s32.totalorder %s54, %s70
      %p72 = scmp.eq.s32.totalorder %s25, 0
      %p73 = por %p71, %p72
      %s74 = ssub.s32 %s26, %s45
      %s75 = ssub.s32 %s28, %s37
      %s76 = sor.u32 %s74, %s75
      %p77 = scmp.eq.s32.totalorder %s76, 0
      %s79 = sadd.s32 %s78, 1
      %s80 = scalar_select %p77, %s78, %s79
      %p83 = pneg %p77
      %p84 = scmp.eq.s32.totalorder %s19, 1
      %p85 = por %p83, %p84
      %p86 = scmp.ne.s32.totalorder %s78, %s81
      %p87 = scmp.eq.s32.totalorder %s19, 0
      %p88 = por %p86, %p87
      %p89 = scmp.ne.s32.totalorder %s78, %s81
      %p90 = scmp.eq.s32.totalorder %s24, 1
      %p91 = por %p89, %p90
      %p92 = scmp.ne.s32.totalorder %s81, %s82
      %p93 = scmp.eq.s32.totalorder %s24, 0
      %p94 = por %p92, %p93
      %p95 = scmp.ne.s32.totalorder %s81, %s82
      %p96 = scmp.eq.s32.totalorder %s25, 1
      %p97 = por %p95, %p96
      %p99 = scmp.ne.s32.totalorder %s82, %s98
      %p100 = scmp.eq.s32.totalorder %s25, 0
      %p101 = por %p99, %p100
      %s102 = ssub.s32 %s26, %s45
      %s103 = ssub.s32 %s27, %s41
      %s104 = sor.u32 %s102, %s103
      %s105 = ssub.s32 %s28, %s37
      %s106 = sor.u32 %s104, %s105
      %p107 = scmp.eq.s32.totalorder %s106, 0
      %s109 = sadd.s32 %s108, 1
      %s110 = scalar_select %p107, %s108, %s109
      %p113 = pneg %p107
      %p114 = scmp.eq.s32.totalorder %s19, 1
      %p115 = por %p113, %p114
      %p116 = scmp.ne.s32.totalorder %s108, %s111
      %p117 = scmp.eq.s32.totalorder %s19, 0
      %p118 = por %p116, %p117
      %p119 = scmp.ne.s32.totalorder %s108, %s111
      %p120 = scmp.eq.s32.totalorder %s24, 1
      %p121 = por %p119, %p120
      %p122 = scmp.ne.s32.totalorder %s111, %s112
      %p123 = scmp.eq.s32.totalorder %s24, 0
      %p124 = por %p122, %p123
      %p125 = scmp.ne.s32.totalorder %s111, %s112
      %p126 = scmp.eq.s32.totalorder %s25, 1
      %p127 = por %p125, %p126
      %p129 = scmp.ne.s32.totalorder %s112, %s128
      %p130 = scmp.eq.s32.totalorder %s25, 0
      %p131 = por %p129, %p130
      %s133 = sadd.s32 %s132, 1
      %p136 = scmp.eq.s32.totalorder %s19, 1
      %p137 = scmp.ne.s32.totalorder %s132, %s134
      %p138 = scmp.eq.s32.totalorder %s19, 0
      %p139 = por %p137, %p138
      %p140 = scmp.ne.s32.totalorder %s132, %s134
      %p141 = scmp.eq.s32.totalorder %s24, 1
      %p142 = por %p140, %p141
      %p143 = scmp.ne.s32.totalorder %s134, %s135
      %p144 = scmp.eq.s32.totalorder %s24, 0
      %p145 = por %p143, %p144
      %p146 = scmp.ne.s32.totalorder %s134, %s135
      %p147 = scmp.eq.s32.totalorder %s25, 1
      %p148 = por %p146, %p147
      %p150 = scmp.ne.s32.totalorder %s135, %s149
      %p151 = scmp.eq.s32.totalorder %s25, 0
      %p152 = por %p150, %p151
      %s154 = sadd.s32 %s153, 1
      %p157 = scmp.eq.s32.totalorder %s19, 1
      %p158 = scmp.ne.s32.totalorder %s153, %s155
      %p159 = scmp.eq.s32.totalorder %s19, 0
      %p160 = por %p158, %p159
      %p161 = scmp.ne.s32.totalorder %s153, %s155
      %p162 = scmp.eq.s32.totalorder %s24, 1
      %p163 = por %p161, %p162
      %p164 = scmp.ne.s32.totalorder %s155, %s156
      %p165 = scmp.eq.s32.totalorder %s24, 0
      %p166 = por %p164, %p165
      %p167 = scmp.ne.s32.totalorder %s155, %s156
      %p168 = scmp.eq.s32.totalorder %s25, 1
      %p169 = por %p167, %p168
      %p171 = scmp.ne.s32.totalorder %s156, %s170
      %p172 = scmp.eq.s32.totalorder %s25, 0
      %p173 = por %p171, %p172
      %s175 = sadd.s32 %s174, 1
      %p178 = scmp.eq.s32.totalorder %s19, 1
      %p179 = scmp.ne.s32.totalorder %s174, %s176
      %p180 = scmp.eq.s32.totalorder %s19, 0
      %p181 = por %p179, %p180
      %p182 = scmp.ne.s32.totalorder %s174, %s176
      %p183 = scmp.eq.s32.totalorder %s24, 1
      %p184 = por %p182, %p183
      %p185 = scmp.ne.s32.totalorder %s176, %s177
      %p186 = scmp.eq.s32.totalorder %s24, 0
      %p187 = por %p185, %p186
      %p188 = scmp.ne.s32.totalorder %s176, %s177
      %p189 = scmp.eq.s32.totalorder %s25, 1
      %p190 = por %p188, %p189
      %p192 = scmp.ne.s32.totalorder %s177, %s191
      %p193 = scmp.eq.s32.totalorder %s25, 0
      %p194 = por %p192, %p193
      %s196 = sadd.s32 %s195, 1
      %p199 = scmp.eq.s32.totalorder %s19, 1
      %p200 = scmp.ne.s32.totalorder %s195, %s197
      %p201 = scmp.eq.s32.totalorder %s19, 0
      %p202 = por %p200, %p201
      %p203 = scmp.ne.s32.totalorder %s195, %s197
      %p204 = scmp.eq.s32.totalorder %s24, 1
      %p205 = por %p203, %p204
      %p206 = scmp.ne.s32.totalorder %s197, %s198
      %p207 = scmp.eq.s32.totalorder %s24, 0
      %p208 = por %p206, %p207
      %p209 = scmp.ne.s32.totalorder %s197, %s198
      %p210 = scmp.eq.s32.totalorder %s25, 1
      %p211 = por %p209, %p210
      %p213 = scmp.ne.s32.totalorder %s198, %s212
      %p214 = scmp.eq.s32.totalorder %s25, 0
      %p215 = por %p213, %p214
      %s217 = sadd.s32 %s216, 1
      %p220 = scmp.eq.s32.totalorder %s19, 1
      %p221 = scmp.ne.s32.totalorder %s216, %s218
      %p222 = scmp.eq.s32.totalorder %s19, 0
      %p223 = por %p221, %p222
      %p224 = scmp.ne.s32.totalorder %s216, %s218
      %p225 = scmp.eq.s32.totalorder %s24, 1
      %p226 = por %p224, %p225
      %p227 = scmp.ne.s32.totalorder %s218, %s219
      %p228 = scmp.eq.s32.totalorder %s24, 0
      %p229 = por %p227, %p228
      %p230 = scmp.ne.s32.totalorder %s218, %s219
      %p231 = scmp.eq.s32.totalorder %s25, 1
      %p232 = por %p230, %p231
      %p234 = scmp.ne.s32.totalorder %s219, %s233
      %p235 = scmp.eq.s32.totalorder %s25, 0
      %p236 = por %p234, %p235
      %s238 = sadd.s32 %s237, 1
      %p241 = scmp.eq.s32.totalorder %s19, 1
      %p242 = scmp.ne.s32.totalorder %s237, %s239
      %p243 = scmp.eq.s32.totalorder %s19, 0
      %p244 = por %p242, %p243
      %p245 = scmp.ne.s32.totalorder %s237, %s239
      %p246 = scmp.eq.s32.totalorder %s24, 1
      %p247 = por %p245, %p246
      %p248 = scmp.ne.s32.totalorder %s239, %s240
      %p249 = scmp.eq.s32.totalorder %s24, 0
      %p250 = por %p248, %p249
      %p251 = scmp.ne.s32.totalorder %s239, %s240
      %p252 = scmp.eq.s32.totalorder %s25, 1
      %p253 = por %p251, %p252
      %p255 = scmp.ne.s32.totalorder %s240, %s254
      %p256 = scmp.eq.s32.totalorder %s25, 0
      %p257 = por %p255, %p256
      %s258 = ssub.s32 %s26, %s45
      %s259 = ssub.s32 %s27, %s41
      %s260 = sor.u32 %s258, %s259
      %s261 = ssub.s32 %s28, %s37
      %s262 = sor.u32 %s260, %s261
      %p263 = scmp.eq.s32.totalorder %s262, 0
      %s265 = sadd.s32 %s264, 1
      %s266 = scalar_select %p263, %s264, %s265
      %p269 = pneg %p263
      %p270 = scmp.eq.s32.totalorder %s19, 1
      %p271 = por %p269, %p270
      %p272 = scmp.ne.s32.totalorder %s264, %s267
      %p273 = scmp.eq.s32.totalorder %s19, 0
      %p274 = por %p272, %p273
      %p275 = scmp.ne.s32.totalorder %s264, %s267
      %p276 = scmp.eq.s32.totalorder %s24, 1
      %p277 = por %p275, %p276
      %p278 = scmp.ne.s32.totalorder %s267, %s268
      %p279 = scmp.eq.s32.totalorder %s24, 0
      %p280 = por %p278, %p279
      %p281 = scmp.ne.s32.totalorder %s267, %s268
      %p282 = scmp.eq.s32.totalorder %s25, 1
      %p283 = por %p281, %p282
      %p285 = scmp.ne.s32.totalorder %s268, %s284
      %p286 = scmp.eq.s32.totalorder %s25, 0
      %p287 = por %p285, %p286
      %p288 = scmp.le.s32.totalorder 1, %s19
      %p289 = scmp.lt.s32.totalorder %s19, 3
      %p290 = pnand %p288, %p289
      %p291 = pneg %p290
      // Predicated region
      $region9: #{tpu_custom_call.1} parent=5 // pred_check
        _
      $region10: #{tpu_custom_call.1} parent=5 // pred_check_branch
        %293 = sbr.rel (%p290) target = $region12
      $region11: #{tpu_custom_call.1} parent=5 // pred_region
        %s294 = ssub.s32 %s19, 1
        // Predicated region
        $region13: #{tpu_custom_call.1} parent=11 // pred_check
          %p295 = pneg %p145
        $region14: #{tpu_custom_call.1} parent=11 // pred_check_branch
          %297 = sbr.rel (%p295) target = $region16
        $region15: #{tpu_custom_call.1} parent=11 // pred_region
          _
        $region16: #{tpu_custom_call.1} parent=11 // pred_fallthru
          _
        // Predicated region
        $region17: #{tpu_custom_call.1} parent=11 // pred_check
          %p298 = pneg %p166
        $region18: #{tpu_custom_call.1} parent=11 // pred_check_branch
          %300 = sbr.rel (%p298) target = $region20
        $region19: #{tpu_custom_call.1} parent=11 // pred_region
          _
        $region20: #{tpu_custom_call.1} parent=11 // pred_fallthru
          _
        // Predicated region
        $region21: #{tpu_custom_call.1} parent=11 // pred_check
          %p301 = pneg %p187
        $region22: #{tpu_custom_call.1} parent=11 // pred_check_branch
          %303 = sbr.rel (%p301) target = $region24
        $region23: #{tpu_custom_call.1} parent=11 // pred_region
          _
        $region24: #{tpu_custom_call.1} parent=11 // pred_fallthru
          _
        // Predicated region
        $region25: #{tpu_custom_call.1} parent=11 // pred_check
          %p304 = pneg %p208
        $region26: #{tpu_custom_call.1} parent=11 // pred_check_branch
          %306 = sbr.rel (%p304) target = $region28
        $region27: #{tpu_custom_call.1} parent=11 // pred_region
          _
        $region28: #{tpu_custom_call.1} parent=11 // pred_fallthru
          _
        // Predicated region
        $region29: #{tpu_custom_call.1} parent=11 // pred_check
          %p307 = pneg %p229
        $region30: #{tpu_custom_call.1} parent=11 // pred_check_branch
          %309 = sbr.rel (%p307) target = $region32
        $region31: #{tpu_custom_call.1} parent=11 // pred_region
          _
        $region32: #{tpu_custom_call.1} parent=11 // pred_fallthru
          _
        // Predicated region
        $region33: #{tpu_custom_call.1} parent=11 // pred_check
          %p310 = pneg %p250
        $region34: #{tpu_custom_call.1} parent=11 // pred_check_branch
          %312 = sbr.rel (%p310) target = $region36
        $region35: #{tpu_custom_call.1} parent=11 // pred_region
          _
        $region36: #{tpu_custom_call.1} parent=11 // pred_fallthru
          _
      $region12: #{tpu_custom_call.1} parent=5 // pred_fallthru
        _
      %p313 = scmp.lt.s32.totalorder %s19, 2
      // Predicated region
      $region37: #{tpu_custom_call.1} parent=5 // pred_check
        %p314 = pneg %p313
      $region38: #{tpu_custom_call.1} parent=5 // pred_check_branch
        %316 = sbr.rel (%p314) target = $region40
      $region39: #{tpu_custom_call.1} parent=5 // pred_region
        // Predicated region
        $region41: #{tpu_custom_call.1} parent=39 // pred_check
          %p317 = pneg %p60
        $region42: #{tpu_custom_call.1} parent=39 // pred_check_branch
          %319 = sbr.rel (%p317) target = $region44
        $region43: #{tpu_custom_call.1} parent=39 // pred_region
          %s320 = smul.u32 2, %s27
          %p321 = scmp.lt.s32.totalorder %s26, 1
          %s322 = scalar_select %p321, %s26, 1
          %p323 = scmp.lt.s32.totalorder %s320, 1
          %s324 = scalar_select %p323, %s320, 1
          %s325 = smul.addr %s322, 2
          %s326 = sadd.s32 %s324, %s325
          %s327 = smul.addr %s326, 4
          %s328 = scalar_lea.vmem %s0, %s327
          %s329 = smul.u32 2, %s27
        $region44: #{tpu_custom_call.1} parent=39 // pred_fallthru
          _
        // Predicated region
        $region45: #{tpu_custom_call.1} parent=39 // pred_check
          %p330 = pneg %p88
        $region46: #{tpu_custom_call.1} parent=39 // pred_check_branch
          %332 = sbr.rel (%p330) target = $region48
        $region47: #{tpu_custom_call.1} parent=39 // pred_region
          %s333 = smul.u32 16, %s28
          %p334 = scmp.lt.s32.totalorder %s26, 1
          %s335 = scalar_select %p334, %s26, 1
          %p336 = scmp.lt.s32.totalorder %s333, 15
          %s337 = scalar_select %p336, %s333, 15
          %s338 = smul.addr %s335, 16
          %s339 = sadd.s32 %s337, %s338
          %s340 = smul.addr %s339, 4
          %s341 = scalar_lea.vmem %s1, %s340
          %s342 = smul.u32 16, %s28
        $region48: #{tpu_custom_call.1} parent=39 // pred_fallthru
          _
        // Predicated region
        $region49: #{tpu_custom_call.1} parent=39 // pred_check
          %p343 = pneg %p118
        $region50: #{tpu_custom_call.1} parent=39 // pred_check_branch
          %345 = sbr.rel (%p343) target = $region52
        $region51: #{tpu_custom_call.1} parent=39 // pred_region
          %s346 = smul.u32 2, %s27
          %p347 = scmp.lt.s32.totalorder %s26, 1
          %s348 = scalar_select %p347, %s26, 1
          %p349 = scmp.lt.s32.totalorder %s346, 1
          %s350 = scalar_select %p349, %s346, 1
          %p351 = scmp.lt.s32.totalorder %s28, 0
          %s352 = scalar_select %p351, %s28, 0
          %s353 = sadd.s32 %s352, %s350
          %s354 = smul.addr %s348, 2
          %s355 = sadd.s32 %s353, %s354
          %s356 = smul.addr %s355, 8
          %s357 = scalar_lea.vmem %s2, %s356
          %s358 = smul.u32 2, %s27
        $region52: #{tpu_custom_call.1} parent=39 // pred_fallthru
          _
      $region40: #{tpu_custom_call.1} parent=5 // pred_fallthru
        _
      %p359 = scmp.le.s32.totalorder 1, %s19
      %p360 = scmp.lt.s32.totalorder %s19, 3
      %p361 = pnand %p359, %p360
      %p362 = pneg %p361
      // Predicated region
      $region53: #{tpu_custom_call.1} parent=5 // pred_check
        _
      $region54: #{tpu_custom_call.1} parent=5 // pred_check_branch
        %364 = sbr.rel (%p361) target = $region56
      $region55: #{tpu_custom_call.1} parent=5 // pred_region
        %s365 = ssub.s32 %s19, 1
        %s366 = smul.u32 2, %s30
        %p367 = scmp.lt.s32.totalorder %s29, 1
        %s368 = scalar_select %p367, %s29, 1
        %p369 = scmp.lt.s32.totalorder %s366, 1
        %s370 = scalar_select %p369, %s366, 1
        %s371 = smul.addr %s368, 2
        %s372 = sadd.s32 %s370, %s371
        %s373 = smul.addr %s372, 4
        %s374 = scalar_lea.vmem %s0, %s373
        %p375 = pneg %p66
        %p376 = pneg %p63
        %s377 = smul.u32 16, %s31
        %p378 = scmp.lt.s32.totalorder %s29, 1
        %s379 = scalar_select %p378, %s29, 1
        %p380 = scmp.lt.s32.totalorder %s377, 15
        %s381 = scalar_select %p380, %s377, 15
        %s382 = smul.addr %s379, 16
        %s383 = sadd.s32 %s381, %s382
        %s384 = smul.addr %s383, 4
        %s385 = scalar_lea.vmem %s1, %s384
        %p386 = pneg %p94
        %p387 = pneg %p91
        %s388 = smul.u32 2, %s30
        %p389 = scmp.lt.s32.totalorder %s29, 1
        %s390 = scalar_select %p389, %s29, 1
        %p391 = scmp.lt.s32.totalorder %s388, 1
        %s392 = scalar_select %p391, %s388, 1
        %p393 = scmp.lt.s32.totalorder %s31, 0
        %s394 = scalar_select %p393, %s31, 0
        %s395 = sadd.s32 %s394, %s392
        %s396 = smul.addr %s390, 2
        %s397 = sadd.s32 %s395, %s396
        %s398 = smul.addr %s397, 8
        %s399 = scalar_lea.vmem %s2, %s398
        %p400 = pneg %p124
        %p401 = pneg %p121
        %p402 = pneg %p145
        %p403 = pneg %p142
        %p404 = pneg %p166
        %p405 = pneg %p163
        %p406 = pneg %p187
        %p407 = pneg %p184
        %p408 = pneg %p208
        %p409 = pneg %p205
        %p410 = pneg %p229
        %p411 = pneg %p226
        %p412 = pneg %p250
        %p413 = pneg %p247
        %p414 = pneg %p280
        %p415 = pneg %p277
        %s416 = sand.u32 %s267, 1
        %s417 = scalar_lea.sflag [#allocation5], %s416
        %s418 = sand.u32 %s267, 1
        %s419 = smul.addr %s418, 16
        %s420 = scalar_lea.vmem [#allocation4], %s419
        %s421 = smul.u32 2, %s30
        %p422 = scmp.lt.s32.totalorder %s29, 1
        %s423 = scalar_select %p422, %s29, 1
        %p424 = scmp.lt.s32.totalorder %s421, 1
        %s425 = scalar_select %p424, %s421, 1
        %s426 = smul.addr %s423, 2
        %s427 = sadd.s32 %s425, %s426
        %s428 = smul.addr %s427, 4
        %s429 = scalar_lea.vmem %s0, %s428
        %s430 = smul.u32 2, %s30
        %s431 = smul.u32 16, %s31
        %p432 = scmp.lt.s32.totalorder %s29, 1
        %s433 = scalar_select %p432, %s29, 1
        %p434 = scmp.lt.s32.totalorder %s431, 15
        %s435 = scalar_select %p434, %s431, 15
        %s436 = smul.addr %s433, 16
        %s437 = sadd.s32 %s435, %s436
        %s438 = smul.addr %s437, 4
        %s439 = scalar_lea.vmem %s1, %s438
        %s440 = smul.u32 16, %s31
        %s441 = smul.u32 2, %s30
        %p442 = scmp.lt.s32.totalorder %s29, 1
        %s443 = scalar_select %p442, %s29, 1
        %p444 = scmp.lt.s32.totalorder %s441, 1
        %s445 = scalar_select %p444, %s441, 1
        %p446 = scmp.lt.s32.totalorder %s31, 0
        %s447 = scalar_select %p446, %s31, 0
        %s448 = sadd.s32 %s447, %s445
        %s449 = smul.addr %s443, 2
        %s450 = sadd.s32 %s448, %s449
        %s451 = smul.addr %s450, 8
        %s452 = scalar_lea.vmem %s2, %s451
        %s453 = smul.u32 2, %s30
        %s454 = smul.u32 2, %s30
        %p456 = scmp.eq.s32.totalorder %s31, 0
        // Predicated region
        $region57: #{tpu_custom_call.1} parent=55 // pred_check
          %p457 = pneg %p456
        $region58: #{tpu_custom_call.1} parent=55 // pred_check_branch
          %459 = sbr.rel (%p457) target = $region60
        $region59: #{tpu_custom_call.1} parent=55 // pred_region
          %v460 = vld [vmem:[%s429] sm:$0xf]
          %v461 = vld [vmem:[%s429 + $0x4] sm:$0xf]
          %v462 = vld [vmem:[%s3] sm:$0xf]
          %v463 = vld [vmem:[%s3 + $0x4] sm:$0xf]
          %v464 = vld [vmem:[%s3 + $0x8] sm:$0xf]
          %v465 = vld [vmem:[%s3 + $0xc] sm:$0xf]
          %v466 = vld [vmem:[%s4] sm:$0x1]
          %v468 = vlaneseq
          %v469 = vshrl.u32 %v468, 7
          %v470 = vsub.s32 0, %v469
          %v471 = vrot.slane %v466, %v470
          %v475 = vunpack.c.l.b16 %v460
          %v476 = vunpack.c.l.b16 %v461
          %v477 = vpack.c.b16 %v476, %v475
          %v482 = vunpack.c.l.b16 %v462
          %v483 = vunpack.c.l.b16 %v463
          %v484 = vunpack.c.l.b16 %v464
          %v485 = vunpack.c.l.b16 %v465
          %v486 = vpack.c.b16 %v483, %v482
          %v487 = vpack.c.b16 %v485, %v484
          %vm490 = vcmask 261120
          %v492 = vsel %vm490, %v477, 0
          %494 = vmatprep.subr.bf16.mxu0 0
          %495 = vmatpush1.bf16.msra.mxu0 %v486
          %496 = vmatprep.subr.bf16.mxu0 0
          %497 = vmatpush1.bf16.msra.mxu0 %v487
          %498 = vmatprep.subr.bf16.mxu0 0
          %499 = vmatpush1.bf16.msra.mxu0 0
          %500 = vmatprep.subr.bf16.mxu0 0
          %501 = vmatpush1.bf16.msra.mxu0 0
          %502 = vmatprep.subr.bf16.mxu0 0
          %503 = vmatpush1.bf16.msra.mxu0 0
          %504 = vmatprep.subr.bf16.mxu0 0
          %505 = vmatpush1.bf16.msra.mxu0 0
          %506 = vmatprep.subr.bf16.mxu0 0
          %507 = vmatpush1.bf16.msra.mxu0 0
          %508 = vmatprep.subr.bf16.mxu0 0
          %509 = vmatpush1.bf16.msra.mxu0 0
          %510 = vmatprep.subr.bf16.mxu0 0
          %511 = vmatpush1.bf16.msra.mxu0 0
          %512 = vmatprep.subr.bf16.mxu0 0
          %513 = vmatpush1.bf16.msra.mxu0 0
          %514 = vmatprep.subr.bf16.mxu0 0
          %515 = vmatpush1.bf16.msra.mxu0 0
          %516 = vmatprep.subr.bf16.mxu0 0
          %517 = vmatpush1.bf16.msra.mxu0 0
          %518 = vmatprep.subr.bf16.mxu0 0
          %519 = vmatpush1.bf16.msra.mxu0 0
          %520 = vmatprep.subr.bf16.mxu0 0
          %521 = vmatpush1.bf16.msra.mxu0 0
          %522 = vmatprep.subr.bf16.mxu0 0
          %523 = vmatpush1.bf16.msra.mxu0 0
          %524 = vmatprep.subr.bf16.mxu0 0
          %525 = vmatpush1.bf16.msra.mxu0 0
          %526 = vmatprep.mubr.bf16.mxu0 0
          %527 = vmatmul.mubr.bf16.gmra.mrb[0].mxu0 %v492
          %v528 = vpop.f32.mrb[0].mxu0
          %v529 = vadd.f32 %v471, %v528
          %v530 = vpop.f32.mrb[0].mxu0
          %v531 = vpop.f32.mrb[0].mxu0
          %v532 = vadd.f32 %v471, %v531
          %v533 = vpop.f32.mrb[0].mxu0
          %534 = vdwg.mxu0
          %v535 = vmul.f32 %v529, 0.5
          %v536 = vmul.f32 %v532, 0.5
          %v537 = vmul.f32 %v529, 0.044715
          %v538 = vmul.f32 %v532, 0.044715
          %v539 = vmul.f32 %v537, %v529
          %v540 = vmul.f32 %v538, %v532
          %v541 = vmul.f32 %v539, %v529
          %v542 = vmul.f32 %v540, %v532
          %v543 = vadd.f32 %v529, %v541
          %v544 = vadd.f32 %v532, %v542
          %v545 = vmul.f32 %v543, 0.7978846
          %v546 = vmul.f32 %v544, 0.7978846
          %v547 = vtanh.pop %v545
          %v548 = vtanh.pop %v546
          %v549 = vadd.f32 %v547, 1.0
          %v550 = vadd.f32 %v548, 1.0
          %v551 = vmul.f32 %v535, %v549
          %v552 = vmul.f32 %v536, %v550
          %vm553 = vcmask 130048
          %554 = vst.msk [vmem:[#allocation2] sm:$0xff] %vm553, %v551
          %555 = vst.msk [vmem:[#allocation2 + $0x8] sm:$0xff] %vm553, %v552
        $region60: #{tpu_custom_call.1} parent=55 // pred_fallthru
          _
        %v556 = vld [vmem:[%s439] sm:$0xf]
        %v557 = vld [vmem:[%s439 + $0x4] sm:$0xf]
        %v558 = vld [vmem:[%s439 + $0x8] sm:$0xf]
        %v559 = vld [vmem:[%s439 + $0xc] sm:$0xf]
        %v560 = vld [vmem:[%s439 + $0x10] sm:$0xf]
        %v561 = vld [vmem:[%s439 + $0x14] sm:$0xf]
        %v562 = vld [vmem:[%s439 + $0x18] sm:$0xf]
        %v563 = vld [vmem:[%s439 + $0x1c] sm:$0xf]
        %v564 = vld [vmem:[%s439 + $0x20] sm:$0xf]
        %v565 = vld [vmem:[%s439 + $0x24] sm:$0xf]
        %v566 = vld [vmem:[%s439 + $0x28] sm:$0xf]
        %v567 = vld [vmem:[%s439 + $0x2c] sm:$0xf]
        %v568 = vld [vmem:[%s439 + $0x30] sm:$0xf]
        %v569 = vld [vmem:[%s439 + $0x34] sm:$0xf]
        %v570 = vld [vmem:[%s439 + $0x38] sm:$0xf]
        %v571 = vld [vmem:[%s439 + $0x3c] sm:$0xf]
        %v572 = vld [vmem:[%s5] sm:$0xf]
        %v573 = vld [vmem:[%s5 + $0x4] sm:$0xf]
        %v574 = vld [vmem:[%s5 + $0x8] sm:$0xf]
        %v575 = vld [vmem:[%s5 + $0xc] sm:$0xf]
        %v576 = vld [vmem:[%s6] sm:$0x1]
        %v578 = vlaneseq
        %v579 = vshrl.u32 %v578, 7
        %v580 = vsub.s32 0, %v579
        %v581 = vrot.slane %v576, %v580
        %v599 = vunpack.c.l.b16 %v556
        %v600 = vunpack.c.l.b16 %v557
        %v601 = vunpack.c.l.b16 %v558
        %v602 = vunpack.c.l.b16 %v559
        %v603 = vunpack.c.l.b16 %v560
        %v604 = vunpack.c.l.b16 %v561
        %v605 = vunpack.c.l.b16 %v562
        %v606 = vunpack.c.l.b16 %v563
        %v607 = vunpack.c.l.b16 %v564
        %v608 = vunpack.c.l.b16 %v565
        %v609 = vunpack.c.l.b16 %v566
        %v610 = vunpack.c.l.b16 %v567
        %v611 = vunpack.c.l.b16 %v568
        %v612 = vunpack.c.l.b16 %v569
        %v613 = vunpack.c.l.b16 %v570
        %v614 = vunpack.c.l.b16 %v571
        %v615 = vpack.c.b16 %v600, %v599
        %v616 = vpack.c.b16 %v602, %v601
        %v617 = vpack.c.b16 %v604, %v603
        %v618 = vpack.c.b16 %v606, %v605
        %v619 = vpack.c.b16 %v608, %v607
        %v620 = vpack.c.b16 %v610, %v609
        %v621 = vpack.c.b16 %v612, %v611
        %v622 = vpack.c.b16 %v614, %v613
        %v627 = vunpack.c.l.b16 %v572
        %v628 = vunpack.c.l.b16 %v573
        %v629 = vunpack.c.l.b16 %v574
        %v630 = vunpack.c.l.b16 %v575
        %v631 = vpack.c.b16 %v628, %v627
        %v632 = vpack.c.b16 %v630, %v629
        %vm635 = vcmask 261120
        %v637 = vsel %vm635, %v615, 0
        %v640 = vsel %vm635, %v616, 0
        %v643 = vsel %vm635, %v617, 0
        %v646 = vsel %vm635, %v618, 0
        %v649 = vsel %vm635, %v619, 0
        %v652 = vsel %vm635, %v620, 0
        %v655 = vsel %vm635, %v621, 0
        %v658 = vsel %vm635, %v622, 0
        %660 = vmatprep.subr.bf16.mxu0 0
        %661 = vmatpush1.bf16.msra.mxu0 %v631
        %662 = vmatprep.subr.bf16.mxu0 0
        %663 = vmatpush1.bf16.msra.mxu0 %v632
        %664 = vmatprep.subr.bf16.mxu0 0
        %665 = vmatpush1.bf16.msra.mxu0 0
        %666 = vmatprep.subr.bf16.mxu0 0
        %667 = vmatpush1.bf16.msra.mxu0 0
        %668 = vmatprep.subr.bf16.mxu0 0
        %669 = vmatpush1.bf16.msra.mxu0 0
        %670 = vmatprep.subr.bf16.mxu0 0
        %671 = vmatpush1.bf16.msra.mxu0 0
        %672 = vmatprep.subr.bf16.mxu0 0
        %673 = vmatpush1.bf16.msra.mxu0 0
        %674 = vmatprep.subr.bf16.mxu0 0
        %675 = vmatpush1.bf16.msra.mxu0 0
        %676 = vmatprep.subr.bf16.mxu0 0
        %677 = vmatpush1.bf16.msra.mxu0 0
        %678 = vmatprep.subr.bf16.mxu0 0
        %679 = vmatpush1.bf16.msra.mxu0 0
        %680 = vmatprep.subr.bf16.mxu0 0
        %681 = vmatpush1.bf16.msra.mxu0 0
        %682 = vmatprep.subr.bf16.mxu0 0
        %683 = vmatpush1.bf16.msra.mxu0 0
        %684 = vmatprep.subr.bf16.mxu0 0
        %685 = vmatpush1.bf16.msra.mxu0 0
        %686 = vmatprep.subr.bf16.mxu0 0
        %687 = vmatpush1.bf16.msra.mxu0 0
        %688 = vmatprep.subr.bf16.mxu0 0
        %689 = vmatpush1.bf16.msra.mxu0 0
        %690 = vmatprep.subr.bf16.mxu0 0
        %691 = vmatpush1.bf16.msra.mxu0 0
        %692 = vmatprep.mubr.bf16.mxu0 0
        %693 = vmatmul.mubr.bf16.gmra.mrb[0].mxu0 %v637
        %v694 = vpop.f32.mrb[0].mxu0
        %v695 = vadd.f32 %v581, %v694
        %v696 = vpop.f32.mrb[0].mxu0
        %v697 = vpop.f32.mrb[0].mxu0
        %v698 = vadd.f32 %v581, %v697
        %v699 = vpop.f32.mrb[0].mxu0
        %700 = vmatprep.mubr.bf16.mxu0 0
        %701 = vmatmul.mubr.bf16.gmra.mrb[0].mxu0 %v640
        %v702 = vpop.f32.mrb[0].mxu0
        %v703 = vadd.f32 %v581, %v702
        %v704 = vpop.f32.mrb[0].mxu0
        %v705 = vpop.f32.mrb[0].mxu0
        %v706 = vadd.f32 %v581, %v705
        %v707 = vpop.f32.mrb[0].mxu0
        %708 = vmatprep.mubr.bf16.mxu0 0
        %709 = vmatmul.mubr.bf16.gmra.mrb[0].mxu0 %v643
        %v710 = vpop.f32.mrb[0].mxu0
        %v711 = vadd.f32 %v581, %v710
        %v712 = vpop.f32.mrb[0].mxu0
        %v713 = vpop.f32.mrb[0].mxu0
        %v714 = vadd.f32 %v581, %v713
        %v715 = vpop.f32.mrb[0].mxu0
        %716 = vmatprep.mubr.bf16.mxu0 0
        %717 = vmatmul.mubr.bf16.gmra.mrb[0].mxu0 %v646
        %v718 = vpop.f32.mrb[0].mxu0
        %v719 = vadd.f32 %v581, %v718
        %v720 = vpop.f32.mrb[0].mxu0
        %v721 = vpop.f32.mrb[0].mxu0
        %v722 = vadd.f32 %v581, %v721
        %v723 = vpop.f32.mrb[0].mxu0
        %724 = vmatprep.mubr.bf16.mxu0 0
        %725 = vmatmul.mubr.bf16.gmra.mrb[0].mxu0 %v649
        %v726 = vpop.f32.mrb[0].mxu0
        %v727 = vadd.f32 %v581, %v726
        %v728 = vpop.f32.mrb[0].mxu0
        %v729 = vpop.f32.mrb[0].mxu0
        %v730 = vadd.f32 %v581, %v729
        %v731 = vpop.f32.mrb[0].mxu0
        %732 = vmatprep.mubr.bf16.mxu0 0
        %733 = vmatmul.mubr.bf16.gmra.mrb[0].mxu0 %v652
        %v734 = vpop.f32.mrb[0].mxu0
        %v735 = vadd.f32 %v581, %v734
        %v736 = vpop.f32.mrb[0].mxu0
        %v737 = vpop.f32.mrb[0].mxu0
        %v738 = vadd.f32 %v581, %v737
        %v739 = vpop.f32.mrb[0].mxu0
        %740 = vmatprep.mubr.bf16.mxu0 0
        %741 = vmatmul.mubr.bf16.gmra.mrb[0].mxu0 %v655
        %v742 = vpop.f32.mrb[0].mxu0
        %v743 = vadd.f32 %v581, %v742
        %v744 = vpop.f32.mrb[0].mxu0
        %v745 = vpop.f32.mrb[0].mxu0
        %v746 = vadd.f32 %v581, %v745
        %v747 = vpop.f32.mrb[0].mxu0
        %748 = vmatprep.mubr.bf16.mxu0 0
        %749 = vmatmul.mubr.bf16.gmra.mrb[0].mxu0 %v658
        %v750 = vpop.f32.mrb[0].mxu0
        %v751 = vadd.f32 %v581, %v750
        %v752 = vpop.f32.mrb[0].mxu0
        %v753 = vpop.f32.mrb[0].mxu0
        %v754 = vadd.f32 %v581, %v753
        %v755 = vpop.f32.mrb[0].mxu0
        %756 = vdwg.mxu0
        %v757 = vmul.f32 %v695, 0.5
        %v758 = vmul.f32 %v698, 0.5
        %v759 = vmul.f32 %v703, 0.5
        %v760 = vmul.f32 %v706, 0.5
        %v761 = vmul.f32 %v711, 0.5
        %v762 = vmul.f32 %v714, 0.5
        %v763 = vmul.f32 %v719, 0.5
        %v764 = vmul.f32 %v722, 0.5
        %v765 = vmul.f32 %v727, 0.5
        %v766 = vmul.f32 %v730, 0.5
        %v767 = vmul.f32 %v735, 0.5
        %v768 = vmul.f32 %v738, 0.5
        %v769 = vmul.f32 %v743, 0.5
        %v770 = vmul.f32 %v746, 0.5
        %v771 = vmul.f32 %v751, 0.5
        %v772 = vmul.f32 %v754, 0.5
        %v773 = vmul.f32 %v695, 0.044715
        %v774 = vmul.f32 %v698, 0.044715
        %v775 = vmul.f32 %v703, 0.044715
        %v776 = vmul.f32 %v706, 0.044715
        %v777 = vmul.f32 %v711, 0.044715
        %v778 = vmul.f32 %v714, 0.044715
        %v779 = vmul.f32 %v719, 0.044715
        %v780 = vmul.f32 %v722, 0.044715
        %v781 = vmul.f32 %v727, 0.044715
        %v782 = vmul.f32 %v730, 0.044715
        %v783 = vmul.f32 %v735, 0.044715
        %v784 = vmul.f32 %v738, 0.044715
        %v785 = vmul.f32 %v743, 0.044715
        %v786 = vmul.f32 %v746, 0.044715
        %v787 = vmul.f32 %v751, 0.044715
        %v788 = vmul.f32 %v754, 0.044715
        %v789 = vmul.f32 %v773, %v695
        %v790 = vmul.f32 %v774, %v698
        %v791 = vmul.f32 %v775, %v703
        %v792 = vmul.f32 %v776, %v706
        %v793 = vmul.f32 %v777, %v711
        %v794 = vmul.f32 %v778, %v714
        %v795 = vmul.f32 %v779, %v719
        %v796 = vmul.f32 %v780, %v722
        %v797 = vmul.f32 %v781, %v727
        %v798 = vmul.f32 %v782, %v730
        %v799 = vmul.f32 %v783, %v735
        %v800 = vmul.f32 %v784, %v738
        %v801 = vmul.f32 %v785, %v743
        %v802 = vmul.f32 %v786, %v746
        %v803 = vmul.f32 %v787, %v751
        %v804 = vmul.f32 %v788, %v754
        %v805 = vmul.f32 %v789, %v695
        %v806 = vmul.f32 %v790, %v698
        %v807 = vmul.f32 %v791, %v703
        %v808 = vmul.f32 %v792, %v706
        %v809 = vmul.f32 %v793, %v711
        %v810 = vmul.f32 %v794, %v714
        %v811 = vmul.f32 %v795, %v719
        %v812 = vmul.f32 %v796, %v722
        %v813 = vmul.f32 %v797, %v727
        %v814 = vmul.f32 %v798, %v730
        %v815 = vmul.f32 %v799, %v735
        %v816 = vmul.f32 %v800, %v738
        %v817 = vmul.f32 %v801, %v743
        %v818 = vmul.f32 %v802, %v746
        %v819 = vmul.f32 %v803, %v751
        %v820 = vmul.f32 %v804, %v754
        %v821 = vadd.f32 %v695, %v805
        %v822 = vadd.f32 %v698, %v806
        %v823 = vadd.f32 %v703, %v807
        %v824 = vadd.f32 %v706, %v808
        %v825 = vadd.f32 %v711, %v809
        %v826 = vadd.f32 %v714, %v810
        %v827 = vadd.f32 %v719, %v811
        %v828 = vadd.f32 %v722, %v812
        %v829 = vadd.f32 %v727, %v813
        %v830 = vadd.f32 %v730, %v814
        %v831 = vadd.f32 %v735, %v815
        %v832 = vadd.f32 %v738, %v816
        %v833 = vadd.f32 %v743, %v817
        %v834 = vadd.f32 %v746, %v818
        %v835 = vadd.f32 %v751, %v819
        %v836 = vadd.f32 %v754, %v820
        %v837 = vmul.f32 %v821, 0.7978846
        %v838 = vmul.f32 %v822, 0.7978846
        %v839 = vmul.f32 %v823, 0.7978846
        %v840 = vmul.f32 %v824, 0.7978846
        %v841 = vmul.f32 %v825, 0.7978846
        %v842 = vmul.f32 %v826, 0.7978846
        %v843 = vmul.f32 %v827, 0.7978846
        %v844 = vmul.f32 %v828, 0.7978846
        %v845 = vmul.f32 %v829, 0.7978846
        %v846 = vmul.f32 %v830, 0.7978846
        %v847 = vmul.f32 %v831, 0.7978846
        %v848 = vmul.f32 %v832, 0.7978846
        %v849 = vmul.f32 %v833, 0.7978846
        %v850 = vmul.f32 %v834, 0.7978846
        %v851 = vmul.f32 %v835, 0.7978846
        %v852 = vmul.f32 %v836, 0.7978846
        %v853 = vtanh.pop %v837
        %v854 = vtanh.pop %v838
        %v855 = vtanh.pop %v839
        %v856 = vtanh.pop %v840
        %v857 = vtanh.pop %v841
        %v858 = vtanh.pop %v842
        %v859 = vtanh.pop %v843
        %v860 = vtanh.pop %v844
        %v861 = vtanh.pop %v845
        %v862 = vtanh.pop %v846
        %v863 = vtanh.pop %v847
        %v864 = vtanh.pop %v848
        %v865 = vtanh.pop %v849
        %v866 = vtanh.pop %v850
        %v867 = vtanh.pop %v851
        %v868 = vtanh.pop %v852
        %v869 = vadd.f32 %v853, 1.0
        %v870 = vadd.f32 %v854, 1.0
        %v871 = vadd.f32 %v855, 1.0
        %v872 = vadd.f32 %v856, 1.0
        %v873 = vadd.f32 %v857, 1.0
        %v874 = vadd.f32 %v858, 1.0
        %v875 = vadd.f32 %v859, 1.0
        %v876 = vadd.f32 %v860, 1.0
        %v877 = vadd.f32 %v861, 1.0
        %v878 = vadd.f32 %v862, 1.0
        %v879 = vadd.f32 %v863, 1.0
        %v880 = vadd.f32 %v864, 1.0
        %v881 = vadd.f32 %v865, 1.0
        %v882 = vadd.f32 %v866, 1.0
        %v883 = vadd.f32 %v867, 1.0
        %v884 = vadd.f32 %v868, 1.0
        %v885 = vmul.f32 %v757, %v869
        %v886 = vmul.f32 %v758, %v870
        %v887 = vmul.f32 %v759, %v871
        %v888 = vmul.f32 %v760, %v872
        %v889 = vmul.f32 %v761, %v873
        %v890 = vmul.f32 %v762, %v874
        %v891 = vmul.f32 %v763, %v875
        %v892 = vmul.f32 %v764, %v876
        %v893 = vmul.f32 %v765, %v877
        %v894 = vmul.f32 %v766, %v878
        %v895 = vmul.f32 %v767, %v879
        %v896 = vmul.f32 %v768, %v880
        %v897 = vmul.f32 %v769, %v881
        %v898 = vmul.f32 %v770, %v882
        %v899 = vmul.f32 %v771, %v883
        %v900 = vmul.f32 %v772, %v884
        %v901 = vld [vmem:[#allocation2] sm:$0xff]
        %v902 = vld [vmem:[#allocation2 + $0x8] sm:$0xff]
        %v905 = vcombine.high %v901, %v901
        %v907 = vunpack.c.l.s4 1966171168
        %v908 = vunpack.c.0.s8 %v907
        %v909 = vlaneseq
        %v910 = vshrl.u32 %v909, 7
        %v911 = vsub.s32 %v908, %v910
        %v912 = vrot.slane %v901, %v911
        %v914 = vunpack.c.l.s4 1966171168
        %v915 = vunpack.c.0.s8 %v914
        %v916 = vlaneseq
        %v917 = vshrl.u32 %v916, 7
        %v918 = vsub.s32 %v915, %v917
        %v919 = vrot.slane %v905, %v918
        %v920 = vcombine.high %v912, %v912
        %v921 = vcombine.high %v919, %v919
        %v923 = vunpack.c.l.s4 1966171168
        %v924 = vunpack.c.0.s8 %v923
        %v925 = vlaneseq
        %v926 = vshrl.u32 %v925, 7
        %v927 = vsub.s32 %v924, %v926
        %v928 = vrot.slane %v912, %v927
        %v930 = vunpack.c.l.s4 1966171168
        %v931 = vunpack.c.0.s8 %v930
        %v932 = vlaneseq
        %v933 = vshrl.u32 %v932, 7
        %v934 = vsub.s32 %v931, %v933
        %v935 = vrot.slane %v919, %v934
        %v937 = vunpack.c.l.s4 1966171168
        %v938 = vunpack.c.0.s8 %v937
        %v939 = vlaneseq
        %v940 = vshrl.u32 %v939, 7
        %v941 = vsub.s32 %v938, %v940
        %v942 = vrot.slane %v920, %v941
        %v944 = vunpack.c.l.s4 1966171168
        %v945 = vunpack.c.0.s8 %v944
        %v946 = vlaneseq
        %v947 = vshrl.u32 %v946, 7
        %v948 = vsub.s32 %v945, %v947
        %v949 = vrot.slane %v921, %v948
        %v950 = vcombine.high %v928, %v928
        %v951 = vcombine.high %v935, %v935
        %v952 = vcombine.high %v942, %v942
        %v953 = vcombine.high %v949, %v949
        %v954 = vcombine.high %v902, %v902
        %v956 = vunpack.c.l.s4 1966171168
        %v957 = vunpack.c.0.s8 %v956
        %v958 = vlaneseq
        %v959 = vshrl.u32 %v958, 7
        %v960 = vsub.s32 %v957, %v959
        %v961 = vrot.slane %v902, %v960
        %v963 = vunpack.c.l.s4 1966171168
        %v964 = vunpack.c.0.s8 %v963
        %v965 = vlaneseq
        %v966 = vshrl.u32 %v965, 7
        %v967 = vsub.s32 %v964, %v966
        %v968 = vrot.slane %v954, %v967
        %v969 = vcombine.high %v961, %v961
        %v970 = vcombine.high %v968, %v968
        %v972 = vunpack.c.l.s4 1966171168
        %v973 = vunpack.c.0.s8 %v972
        %v974 = vlaneseq
        %v975 = vshrl.u32 %v974, 7
        %v976 = vsub.s32 %v973, %v975
        %v977 = vrot.slane %v961, %v976
        %v979 = vunpack.c.l.s4 1966171168
        %v980 = vunpack.c.0.s8 %v979
        %v981 = vlaneseq
        %v982 = vshrl.u32 %v981, 7
        %v983 = vsub.s32 %v980, %v982
        %v984 = vrot.slane %v968, %v983
        %v986 = vunpack.c.l.s4 1966171168
        %v987 = vunpack.c.0.s8 %v986
        %v988 = vlaneseq
        %v989 = vshrl.u32 %v988, 7
        %v990 = vsub.s32 %v987, %v989
        %v991 = vrot.slane %v969, %v990
        %v993 = vunpack.c.l.s4 1966171168
        %v994 = vunpack.c.0.s8 %v993
        %v995 = vlaneseq
        %v996 = vshrl.u32 %v995, 7
        %v997 = vsub.s32 %v994, %v996
        %v998 = vrot.slane %v970, %v997
        %v999 = vcombine.high %v977, %v977
        %v1000 = vcombine.high %v984, %v984
        %v1001 = vcombine.high %v991, %v991
        %v1002 = vcombine.high %v998, %v998
        %v1003 = vlaneseq
        %v1004 = vshrl.u32 %v1003, 7
        %v1005 = vsub.s32 0, %v1004
        %v1006 = vrot.slane %v928, %v1005
        %v1007 = vlaneseq
        %v1008 = vshrl.u32 %v1007, 7
        %v1009 = vsub.s32 0, %v1008
        %v1010 = vrot.slane %v942, %v1009
        %v1011 = vlaneseq
        %v1012 = vshrl.u32 %v1011, 7
        %v1013 = vsub.s32 0, %v1012
        %v1014 = vrot.slane %v950, %v1013
        %v1015 = vlaneseq
        %v1016 = vshrl.u32 %v1015, 7
        %v1017 = vsub.s32 0, %v1016
        %v1018 = vrot.slane %v952, %v1017
        %v1019 = vlaneseq
        %v1020 = vshrl.u32 %v1019, 7
        %v1021 = vsub.s32 0, %v1020
        %v1022 = vrot.slane %v935, %v1021
        %v1023 = vlaneseq
        %v1024 = vshrl.u32 %v1023, 7
        %v1025 = vsub.s32 0, %v1024
        %v1026 = vrot.slane %v949, %v1025
        %v1027 = vlaneseq
        %v1028 = vshrl.u32 %v1027, 7
        %v1029 = vsub.s32 0, %v1028
        %v1030 = vrot.slane %v951, %v1029
        %v1031 = vlaneseq
        %v1032 = vshrl.u32 %v1031, 7
        %v1033 = vsub.s32 0, %v1032
        %v1034 = vrot.slane %v953, %v1033
        %v1035 = vlaneseq
        %v1036 = vshrl.u32 %v1035, 7
        %v1037 = vsub.s32 0, %v1036
        %v1038 = vrot.slane %v977, %v1037
        %v1039 = vlaneseq
        %v1040 = vshrl.u32 %v1039, 7
        %v1041 = vsub.s32 0, %v1040
        %v1042 = vrot.slane %v991, %v1041
        %v1043 = vlaneseq
        %v1044 = vshrl.u32 %v1043, 7
        %v1045 = vsub.s32 0, %v1044
        %v1046 = vrot.slane %v999, %v1045
        %v1047 = vlaneseq
        %v1048 = vshrl.u32 %v1047, 7
        %v1049 = vsub.s32 0, %v1048
        %v1050 = vrot.slane %v1001, %v1049
        %v1051 = vlaneseq
        %v1052 = vshrl.u32 %v1051, 7
        %v1053 = vsub.s32 0, %v1052
        %v1054 = vrot.slane %v984, %v1053
        %v1055 = vlaneseq
        %v1056 = vshrl.u32 %v1055, 7
        %v1057 = vsub.s32 0, %v1056
        %v1058 = vrot.slane %v998, %v1057
        %v1059 = vlaneseq
        %v1060 = vshrl.u32 %v1059, 7
        %v1061 = vsub.s32 0, %v1060
        %v1062 = vrot.slane %v1000, %v1061
        %v1063 = vlaneseq
        %v1064 = vshrl.u32 %v1063, 7
        %v1065 = vsub.s32 0, %v1064
        %v1066 = vrot.slane %v1002, %v1065
        %v1083 = vadd.f32 %v1006, %v885
        %v1084 = vadd.f32 %v1006, %v886
        %v1085 = vadd.f32 %v1006, %v887
        %v1086 = vadd.f32 %v1006, %v888
        %v1087 = vadd.f32 %v1006, %v889
        %v1088 = vadd.f32 %v1006, %v890
        %v1089 = vadd.f32 %v1006, %v891
        %v1090 = vadd.f32 %v1006, %v892
        %v1091 = vadd.f32 %v1006, %v893
        %v1092 = vadd.f32 %v1006, %v894
        %v1093 = vadd.f32 %v1006, %v895
        %v1094 = vadd.f32 %v1006, %v896
        %v1095 = vadd.f32 %v1006, %v897
        %v1096 = vadd.f32 %v1006, %v898
        %v1097 = vadd.f32 %v1006, %v899
        %v1098 = vadd.f32 %v1006, %v900
        %v1099 = vadd.f32 %v1010, %v885
        %v1100 = vadd.f32 %v1010, %v886
        %v1101 = vadd.f32 %v1010, %v887
        %v1102 = vadd.f32 %v1010, %v888
        %v1103 = vadd.f32 %v1010, %v889
        %v1104 = vadd.f32 %v1010, %v890
        %v1105 = vadd.f32 %v1010, %v891
        %v1106 = vadd.f32 %v1010, %v892
        %v1107 = vadd.f32 %v1010, %v893
        %v1108 = vadd.f32 %v1010, %v894
        %v1109 = vadd.f32 %v1010, %v895
        %v1110 = vadd.f32 %v1010, %v896
        %v1111 = vadd.f32 %v1010, %v897
        %v1112 = vadd.f32 %v1010, %v898
        %v1113 = vadd.f32 %v1010, %v899
        %v1114 = vadd.f32 %v1010, %v900
        %v1115 = vadd.f32 %v1014, %v885
        %v1116 = vadd.f32 %v1014, %v886
        %v1117 = vadd.f32 %v1014, %v887
        %v1118 = vadd.f32 %v1014, %v888
        %v1119 = vadd.f32 %v1014, %v889
        %v1120 = vadd.f32 %v1014, %v890
        %v1121 = vadd.f32 %v1014, %v891
        %v1122 = vadd.f32 %v1014, %v892
        %v1123 = vadd.f32 %v1014, %v893
        %v1124 = vadd.f32 %v1014, %v894
        %v1125 = vadd.f32 %v1014, %v895
        %v1126 = vadd.f32 %v1014, %v896
        %v1127 = vadd.f32 %v1014, %v897
        %v1128 = vadd.f32 %v1014, %v898
        %v1129 = vadd.f32 %v1014, %v899
        %v1130 = vadd.f32 %v1014, %v900
        %v1131 = vadd.f32 %v1018, %v885
        %v1132 = vadd.f32 %v1018, %v886
        %v1133 = vadd.f32 %v1018, %v887
        %v1134 = vadd.f32 %v1018, %v888
        %v1135 = vadd.f32 %v1018, %v889
        %v1136 = vadd.f32 %v1018, %v890
        %v1137 = vadd.f32 %v1018, %v891
        %v1138 = vadd.f32 %v1018, %v892
        %v1139 = vadd.f32 %v1018, %v893
        %v1140 = vadd.f32 %v1018, %v894
        %v1141 = vadd.f32 %v1018, %v895
        %v1142 = vadd.f32 %v1018, %v896
        %v1143 = vadd.f32 %v1018, %v897
        %v1144 = vadd.f32 %v1018, %v898
        %v1145 = vadd.f32 %v1018, %v899
        %v1146 = vadd.f32 %v1018, %v900
        %v1147 = vadd.f32 %v1022, %v885
        %v1148 = vadd.f32 %v1022, %v886
        %v1149 = vadd.f32 %v1022, %v887
        %v1150 = vadd.f32 %v1022, %v888
        %v1151 = vadd.f32 %v1022, %v889
        %v1152 = vadd.f32 %v1022, %v890
        %v1153 = vadd.f32 %v1022, %v891
        %v1154 = vadd.f32 %v1022, %v892
        %v1155 = vadd.f32 %v1022, %v893
        %v1156 = vadd.f32 %v1022, %v894
        %v1157 = vadd.f32 %v1022, %v895
        %v1158 = vadd.f32 %v1022, %v896
        %v1159 = vadd.f32 %v1022, %v897
        %v1160 = vadd.f32 %v1022, %v898
        %v1161 = vadd.f32 %v1022, %v899
        %v1162 = vadd.f32 %v1022, %v900
        %v1163 = vadd.f32 %v1026, %v885
        %v1164 = vadd.f32 %v1026, %v886
        %v1165 = vadd.f32 %v1026, %v887
        %v1166 = vadd.f32 %v1026, %v888
        %v1167 = vadd.f32 %v1026, %v889
        %v1168 = vadd.f32 %v1026, %v890
        %v1169 = vadd.f32 %v1026, %v891
        %v1170 = vadd.f32 %v1026, %v892
        %v1171 = vadd.f32 %v1026, %v893
        %v1172 = vadd.f32 %v1026, %v894
        %v1173 = vadd.f32 %v1026, %v895
        %v1174 = vadd.f32 %v1026, %v896
        %v1175 = vadd.f32 %v1026, %v897
        %v1176 = vadd.f32 %v1026, %v898
        %v1177 = vadd.f32 %v1026, %v899
        %v1178 = vadd.f32 %v1026, %v900
        %v1179 = vadd.f32 %v1030, %v885
        %v1180 = vadd.f32 %v1030, %v886
        %v1181 = vadd.f32 %v1030, %v887
        %v1182 = vadd.f32 %v1030, %v888
        %v1183 = vadd.f32 %v1030, %v889
        %v1184 = vadd.f32 %v1030, %v890
        %v1185 = vadd.f32 %v1030, %v891
        %v1186 = vadd.f32 %v1030, %v892
        %v1187 = vadd.f32 %v1030, %v893
        %v1188 = vadd.f32 %v1030, %v894
        %v1189 = vadd.f32 %v1030, %v895
        %v1190 = vadd.f32 %v1030, %v896
        %v1191 = vadd.f32 %v1030, %v897
        %v1192 = vadd.f32 %v1030, %v898
        %v1193 = vadd.f32 %v1030, %v899
        %v1194 = vadd.f32 %v1030, %v900
        %v1195 = vadd.f32 %v1034, %v885
        %v1196 = vadd.f32 %v1034, %v886
        %v1197 = vadd.f32 %v1034, %v887
        %v1198 = vadd.f32 %v1034, %v888
        %v1199 = vadd.f32 %v1034, %v889
        %v1200 = vadd.f32 %v1034, %v890
        %v1201 = vadd.f32 %v1034, %v891
        %v1202 = vadd.f32 %v1034, %v892
        %v1203 = vadd.f32 %v1034, %v893
        %v1204 = vadd.f32 %v1034, %v894
        %v1205 = vadd.f32 %v1034, %v895
        %v1206 = vadd.f32 %v1034, %v896
        %v1207 = vadd.f32 %v1034, %v897
        %v1208 = vadd.f32 %v1034, %v898
        %v1209 = vadd.f32 %v1034, %v899
        %v1210 = vadd.f32 %v1034, %v900
        %v1211 = vadd.f32 %v1038, %v885
        %v1212 = vadd.f32 %v1038, %v886
        %v1213 = vadd.f32 %v1038, %v887
        %v1214 = vadd.f32 %v1038, %v888
        %v1215 = vadd.f32 %v1038, %v889
        %v1216 = vadd.f32 %v1038, %v890
        %v1217 = vadd.f32 %v1038, %v891
        %v1218 = vadd.f32 %v1038, %v892
        %v1219 = vadd.f32 %v1038, %v893
        %v1220 = vadd.f32 %v1038, %v894
        %v1221 = vadd.f32 %v1038, %v895
        %v1222 = vadd.f32 %v1038, %v896
        %v1223 = vadd.f32 %v1038, %v897
        %v1224 = vadd.f32 %v1038, %v898
        %v1225 = vadd.f32 %v1038, %v899
        %v1226 = vadd.f32 %v1038, %v900
        %v1227 = vadd.f32 %v1042, %v885
        %v1228 = vadd.f32 %v1042, %v886
        %v1229 = vadd.f32 %v1042, %v887
        %v1230 = vadd.f32 %v1042, %v888
        %v1231 = vadd.f32 %v1042, %v889
        %v1232 = vadd.f32 %v1042, %v890
        %v1233 = vadd.f32 %v1042, %v891
        %v1234 = vadd.f32 %v1042, %v892
        %v1235 = vadd.f32 %v1042, %v893
        %v1236 = vadd.f32 %v1042, %v894
        %v1237 = vadd.f32 %v1042, %v895
        %v1238 = vadd.f32 %v1042, %v896
        %v1239 = vadd.f32 %v1042, %v897
        %v1240 = vadd.f32 %v1042, %v898
        %v1241 = vadd.f32 %v1042, %v899
        %v1242 = vadd.f32 %v1042, %v900
        %v1243 = vadd.f32 %v1046, %v885
        %v1244 = vadd.f32 %v1046, %v886
        %v1245 = vadd.f32 %v1046, %v887
        %v1246 = vadd.f32 %v1046, %v888
        %v1247 = vadd.f32 %v1046, %v889
        %v1248 = vadd.f32 %v1046, %v890
        %v1249 = vadd.f32 %v1046, %v891
        %v1250 = vadd.f32 %v1046, %v892
        %v1251 = vadd.f32 %v1046, %v893
        %v1252 = vadd.f32 %v1046, %v894
        %v1253 = vadd.f32 %v1046, %v895
        %v1254 = vadd.f32 %v1046, %v896
        %v1255 = vadd.f32 %v1046, %v897
        %v1256 = vadd.f32 %v1046, %v898
        %v1257 = vadd.f32 %v1046, %v899
        %v1258 = vadd.f32 %v1046, %v900
        %v1259 = vadd.f32 %v1050, %v885
        %v1260 = vadd.f32 %v1050, %v886
        %v1261 = vadd.f32 %v1050, %v887
        %v1262 = vadd.f32 %v1050, %v888
        %v1263 = vadd.f32 %v1050, %v889
        %v1264 = vadd.f32 %v1050, %v890
        %v1265 = vadd.f32 %v1050, %v891
        %v1266 = vadd.f32 %v1050, %v892
        %v1267 = vadd.f32 %v1050, %v893
        %v1268 = vadd.f32 %v1050, %v894
        %v1269 = vadd.f32 %v1050, %v895
        %v1270 = vadd.f32 %v1050, %v896
        %v1271 = vadd.f32 %v1050, %v897
        %v1272 = vadd.f32 %v1050, %v898
        %v1273 = vadd.f32 %v1050, %v899
        %v1274 = vadd.f32 %v1050, %v900
        %v1275 = vadd.f32 %v1054, %v885
        %v1276 = vadd.f32 %v1054, %v886
        %v1277 = vadd.f32 %v1054, %v887
        %v1278 = vadd.f32 %v1054, %v888
        %v1279 = vadd.f32 %v1054, %v889
        %v1280 = vadd.f32 %v1054, %v890
        %v1281 = vadd.f32 %v1054, %v891
        %v1282 = vadd.f32 %v1054, %v892
        %v1283 = vadd.f32 %v1054, %v893
        %v1284 = vadd.f32 %v1054, %v894
        %v1285 = vadd.f32 %v1054, %v895
        %v1286 = vadd.f32 %v1054, %v896
        %v1287 = vadd.f32 %v1054, %v897
        %v1288 = vadd.f32 %v1054, %v898
        %v1289 = vadd.f32 %v1054, %v899
        %v1290 = vadd.f32 %v1054, %v900
        %v1291 = vadd.f32 %v1058, %v885
        %v1292 = vadd.f32 %v1058, %v886
        %v1293 = vadd.f32 %v1058, %v887
        %v1294 = vadd.f32 %v1058, %v888
        %v1295 = vadd.f32 %v1058, %v889
        %v1296 = vadd.f32 %v1058, %v890
        %v1297 = vadd.f32 %v1058, %v891
        %v1298 = vadd.f32 %v1058, %v892
        %v1299 = vadd.f32 %v1058, %v893
        %v1300 = vadd.f32 %v1058, %v894
        %v1301 = vadd.f32 %v1058, %v895
        %v1302 = vadd.f32 %v1058, %v896
        %v1303 = vadd.f32 %v1058, %v897
        %v1304 = vadd.f32 %v1058, %v898
        %v1305 = vadd.f32 %v1058, %v899
        %v1306 = vadd.f32 %v1058, %v900
        %v1307 = vadd.f32 %v1062, %v885
        %v1308 = vadd.f32 %v1062, %v886
        %v1309 = vadd.f32 %v1062, %v887
        %v1310 = vadd.f32 %v1062, %v888
        %v1311 = vadd.f32 %v1062, %v889
        %v1312 = vadd.f32 %v1062, %v890
        %v1313 = vadd.f32 %v1062, %v891
        %v1314 = vadd.f32 %v1062, %v892
        %v1315 = vadd.f32 %v1062, %v893
        %v1316 = vadd.f32 %v1062, %v894
        %v1317 = vadd.f32 %v1062, %v895
        %v1318 = vadd.f32 %v1062, %v896
        %v1319 = vadd.f32 %v1062, %v897
        %v1320 = vadd.f32 %v1062, %v898
        %v1321 = vadd.f32 %v1062, %v899
        %v1322 = vadd.f32 %v1062, %v900
        %v1323 = vadd.f32 %v1066, %v885
        %v1324 = vadd.f32 %v1066, %v886
        %v1325 = vadd.f32 %v1066, %v887
        %v1326 = vadd.f32 %v1066, %v888
        %v1327 = vadd.f32 %v1066, %v889
        %v1328 = vadd.f32 %v1066, %v890
        %v1329 = vadd.f32 %v1066, %v891
        %v1330 = vadd.f32 %v1066, %v892
        %v1331 = vadd.f32 %v1066, %v893
        %v1332 = vadd.f32 %v1066, %v894
        %v1333 = vadd.f32 %v1066, %v895
        %v1334 = vadd.f32 %v1066, %v896
        %v1335 = vadd.f32 %v1066, %v897
        %v1336 = vadd.f32 %v1066, %v898
        %v1337 = vadd.f32 %v1066, %v899
        %v1338 = vadd.f32 %v1066, %v900
        %v1339 = vtanh.pop %v1083
        %v1340 = vtanh.pop %v1084
        %v1341 = vtanh.pop %v1085
        %v1342 = vtanh.pop %v1086
        %v1343 = vtanh.pop %v1087
        %v1344 = vtanh.pop %v1088
        %v1345 = vtanh.pop %v1089
        %v1346 = vtanh.pop %v1090
        %v1347 = vtanh.pop %v1091
        %v1348 = vtanh.pop %v1092
        %v1349 = vtanh.pop %v1093
        %v1350 = vtanh.pop %v1094
        %v1351 = vtanh.pop %v1095
        %v1352 = vtanh.pop %v1096
        %v1353 = vtanh.pop %v1097
        %v1354 = vtanh.pop %v1098
        %v1355 = vtanh.pop %v1099
        %v1356 = vtanh.pop %v1100
        %v1357 = vtanh.pop %v1101
        %v1358 = vtanh.pop %v1102
        %v1359 = vtanh.pop %v1103
        %v1360 = vtanh.pop %v1104
        %v1361 = vtanh.pop %v1105
        %v1362 = vtanh.pop %v1106
        %v1363 = vtanh.pop %v1107
        %v1364 = vtanh.pop %v1108
        %v1365 = vtanh.pop %v1109
        %v1366 = vtanh.pop %v1110
        %v1367 = vtanh.pop %v1111
        %v1368 = vtanh.pop %v1112
        %v1369 = vtanh.pop %v1113
        %v1370 = vtanh.pop %v1114
        %v1371 = vtanh.pop %v1115
        %v1372 = vtanh.pop %v1116
        %v1373 = vtanh.pop %v1117
        %v1374 = vtanh.pop %v1118
        %v1375 = vtanh.pop %v1119
        %v1376 = vtanh.pop %v1120
        %v1377 = vtanh.pop %v1121
        %v1378 = vtanh.pop %v1122
        %v1379 = vtanh.pop %v1123
        %v1380 = vtanh.pop %v1124
        %v1381 = vtanh.pop %v1125
        %v1382 = vtanh.pop %v1126
        %v1383 = vtanh.pop %v1127
        %v1384 = vtanh.pop %v1128
        %v1385 = vtanh.pop %v1129
        %v1386 = vtanh.pop %v1130
        %v1387 = vtanh.pop %v1131
        %v1388 = vtanh.pop %v1132
        %v1389 = vtanh.pop %v1133
        %v1390 = vtanh.pop %v1134
        %v1391 = vtanh.pop %v1135
        %v1392 = vtanh.pop %v1136
        %v1393 = vtanh.pop %v1137
        %v1394 = vtanh.pop %v1138
        %v1395 = vtanh.pop %v1139
        %v1396 = vtanh.pop %v1140
        %v1397 = vtanh.pop %v1141
        %v1398 = vtanh.pop %v1142
        %v1399 = vtanh.pop %v1143
        %v1400 = vtanh.pop %v1144
        %v1401 = vtanh.pop %v1145
        %v1402 = vtanh.pop %v1146
        %v1403 = vtanh.pop %v1147
        %v1404 = vtanh.pop %v1148
        %v1405 = vtanh.pop %v1149
        %v1406 = vtanh.pop %v1150
        %v1407 = vtanh.pop %v1151
        %v1408 = vtanh.pop %v1152
        %v1409 = vtanh.pop %v1153
        %v1410 = vtanh.pop %v1154
        %v1411 = vtanh.pop %v1155
        %v1412 = vtanh.pop %v1156
        %v1413 = vtanh.pop %v1157
        %v1414 = vtanh.pop %v1158
        %v1415 = vtanh.pop %v1159
        %v1416 = vtanh.pop %v1160
        %v1417 = vtanh.pop %v1161
        %v1418 = vtanh.pop %v1162
        %v1419 = vtanh.pop %v1163
        %v1420 = vtanh.pop %v1164
        %v1421 = vtanh.pop %v1165
        %v1422 = vtanh.pop %v1166
        %v1423 = vtanh.pop %v1167
        %v1424 = vtanh.pop %v1168
        %v1425 = vtanh.pop %v1169
        %v1426 = vtanh.pop %v1170
        %v1427 = vtanh.pop %v1171
        %v1428 = vtanh.pop %v1172
        %v1429 = vtanh.pop %v1173
        %v1430 = vtanh.pop %v1174
        %v1431 = vtanh.pop %v1175
        %v1432 = vtanh.pop %v1176
        %v1433 = vtanh.pop %v1177
        %v1434 = vtanh.pop %v1178
        %v1435 = vtanh.pop %v1179
        %v1436 = vtanh.pop %v1180
        %v1437 = vtanh.pop %v1181
        %v1438 = vtanh.pop %v1182
        %v1439 = vtanh.pop %v1183
        %v1440 = vtanh.pop %v1184
        %v1441 = vtanh.pop %v1185
        %v1442 = vtanh.pop %v1186
        %v1443 = vtanh.pop %v1187
        %v1444 = vtanh.pop %v1188
        %v1445 = vtanh.pop %v1189
        %v1446 = vtanh.pop %v1190
        %v1447 = vtanh.pop %v1191
        %v1448 = vtanh.pop %v1192
        %v1449 = vtanh.pop %v1193
        %v1450 = vtanh.pop %v1194
        %v1451 = vtanh.pop %v1195
        %v1452 = vtanh.pop %v1196
        %v1453 = vtanh.pop %v1197
        %v1454 = vtanh.pop %v1198
        %v1455 = vtanh.pop %v1199
        %v1456 = vtanh.pop %v1200
        %v1457 = vtanh.pop %v1201
        %v1458 = vtanh.pop %v1202
        %v1459 = vtanh.pop %v1203
        %v1460 = vtanh.pop %v1204
        %v1461 = vtanh.pop %v1205
        %v1462 = vtanh.pop %v1206
        %v1463 = vtanh.pop %v1207
        %v1464 = vtanh.pop %v1208
        %v1465 = vtanh.pop %v1209
        %v1466 = vtanh.pop %v1210
        %v1467 = vtanh.pop %v1211
        %v1468 = vtanh.pop %v1212
        %v1469 = vtanh.pop %v1213
        %v1470 = vtanh.pop %v1214
        %v1471 = vtanh.pop %v1215
        %v1472 = vtanh.pop %v1216
        %v1473 = vtanh.pop %v1217
        %v1474 = vtanh.pop %v1218
        %v1475 = vtanh.pop %v1219
        %v1476 = vtanh.pop %v1220
        %v1477 = vtanh.pop %v1221
        %v1478 = vtanh.pop %v1222
        %v1479 = vtanh.pop %v1223
        %v1480 = vtanh.pop %v1224
        %v1481 = vtanh.pop %v1225
        %v1482 = vtanh.pop %v1226
        %v1483 = vtanh.pop %v1227
        %v1484 = vtanh.pop %v1228
        %v1485 = vtanh.pop %v1229
        %v1486 = vtanh.pop %v1230
        %v1487 = vtanh.pop %v1231
        %v1488 = vtanh.pop %v1232
        %v1489 = vtanh.pop %v1233
        %v1490 = vtanh.pop %v1234
        %v1491 = vtanh.pop %v1235
        %v1492 = vtanh.pop %v1236
        %v1493 = vtanh.pop %v1237
        %v1494 = vtanh.pop %v1238
        %v1495 = vtanh.pop %v1239
        %v1496 = vtanh.pop %v1240
        %v1497 = vtanh.pop %v1241
        %v1498 = vtanh.pop %v1242
        %v1499 = vtanh.pop %v1243
        %v1500 = vtanh.pop %v1244
        %v1501 = vtanh.pop %v1245
        %v1502 = vtanh.pop %v1246
        %v1503 = vtanh.pop %v1247
        %v1504 = vtanh.pop %v1248
        %v1505 = vtanh.pop %v1249
        %v1506 = vtanh.pop %v1250
        %v1507 = vtanh.pop %v1251
        %v1508 = vtanh.pop %v1252
        %v1509 = vtanh.pop %v1253
        %v1510 = vtanh.pop %v1254
        %v1511 = vtanh.pop %v1255
        %v1512 = vtanh.pop %v1256
        %v1513 = vtanh.pop %v1257
        %v1514 = vtanh.pop %v1258
        %v1515 = vtanh.pop %v1259
        %v1516 = vtanh.pop %v1260
        %v1517 = vtanh.pop %v1261
        %v1518 = vtanh.pop %v1262
        %v1519 = vtanh.pop %v1263
        %v1520 = vtanh.pop %v1264
        %v1521 = vtanh.pop %v1265
        %v1522 = vtanh.pop %v1266
        %v1523 = vtanh.pop %v1267
        %v1524 = vtanh.pop %v1268
        %v1525 = vtanh.pop %v1269
        %v1526 = vtanh.pop %v1270
        %v1527 = vtanh.pop %v1271
        %v1528 = vtanh.pop %v1272
        %v1529 = vtanh.pop %v1273
        %v1530 = vtanh.pop %v1274
        %v1531 = vtanh.pop %v1275
        %v1532 = vtanh.pop %v1276
        %v1533 = vtanh.pop %v1277
        %v1534 = vtanh.pop %v1278
        %v1535 = vtanh.pop %v1279
        %v1536 = vtanh.pop %v1280
        %v1537 = vtanh.pop %v1281
        %v1538 = vtanh.pop %v1282
        %v1539 = vtanh.pop %v1283
        %v1540 = vtanh.pop %v1284
        %v1541 = vtanh.pop %v1285
        %v1542 = vtanh.pop %v1286
        %v1543 = vtanh.pop %v1287
        %v1544 = vtanh.pop %v1288
        %v1545 = vtanh.pop %v1289
        %v1546 = vtanh.pop %v1290
        %v1547 = vtanh.pop %v1291
        %v1548 = vtanh.pop %v1292
        %v1549 = vtanh.pop %v1293
        %v1550 = vtanh.pop %v1294
        %v1551 = vtanh.pop %v1295
        %v1552 = vtanh.pop %v1296
        %v1553 = vtanh.pop %v1297
        %v1554 = vtanh.pop %v1298
        %v1555 = vtanh.pop %v1299
        %v1556 = vtanh.pop %v1300
        %v1557 = vtanh.pop %v1301
        %v1558 = vtanh.pop %v1302
        %v1559 = vtanh.pop %v1303
        %v1560 = vtanh.pop %v1304
        %v1561 = vtanh.pop %v1305
        %v1562 = vtanh.pop %v1306
        %v1563 = vtanh.pop %v1307
        %v1564 = vtanh.pop %v1308
        %v1565 = vtanh.pop %v1309
        %v1566 = vtanh.pop %v1310
        %v1567 = vtanh.pop %v1311
        %v1568 = vtanh.pop %v1312
        %v1569 = vtanh.pop %v1313
        %v1570 = vtanh.pop %v1314
        %v1571 = vtanh.pop %v1315
        %v1572 = vtanh.pop %v1316
        %v1573 = vtanh.pop %v1317
        %v1574 = vtanh.pop %v1318
        %v1575 = vtanh.pop %v1319
        %v1576 = vtanh.pop %v1320
        %v1577 = vtanh.pop %v1321
        %v1578 = vtanh.pop %v1322
        %v1579 = vtanh.pop %v1323
        %v1580 = vtanh.pop %v1324
        %v1581 = vtanh.pop %v1325
        %v1582 = vtanh.pop %v1326
        %v1583 = vtanh.pop %v1327
        %v1584 = vtanh.pop %v1328
        %v1585 = vtanh.pop %v1329
        %v1586 = vtanh.pop %v1330
        %v1587 = vtanh.pop %v1331
        %v1588 = vtanh.pop %v1332
        %v1589 = vtanh.pop %v1333
        %v1590 = vtanh.pop %v1334
        %v1591 = vtanh.pop %v1335
        %v1592 = vtanh.pop %v1336
        %v1593 = vtanh.pop %v1337
        %v1594 = vtanh.pop %v1338
        %v1595 = vld [vmem:[%s7] sm:$0x1]
        %v1597 = vlaneseq
        %v1598 = vshrl.u32 %v1597, 7
        %v1599 = vsub.s32 0, %v1598
        %v1600 = vrot.slane %v1595, %v1599
        %v1602 = vmul.f32 %v1339, %v1600
        %v1603 = vmul.f32 %v1340, %v1600
        %v1604 = vmul.f32 %v1341, %v1600
        %v1605 = vmul.f32 %v1342, %v1600
        %v1606 = vmul.f32 %v1343, %v1600
        %v1607 = vmul.f32 %v1344, %v1600
        %v1608 = vmul.f32 %v1345, %v1600
        %v1609 = vmul.f32 %v1346, %v1600
        %v1610 = vmul.f32 %v1347, %v1600
        %v1611 = vmul.f32 %v1348, %v1600
        %v1612 = vmul.f32 %v1349, %v1600
        %v1613 = vmul.f32 %v1350, %v1600
        %v1614 = vmul.f32 %v1351, %v1600
        %v1615 = vmul.f32 %v1352, %v1600
        %v1616 = vmul.f32 %v1353, %v1600
        %v1617 = vmul.f32 %v1354, %v1600
        %v1618 = vmul.f32 %v1355, %v1600
        %v1619 = vmul.f32 %v1356, %v1600
        %v1620 = vmul.f32 %v1357, %v1600
        %v1621 = vmul.f32 %v1358, %v1600
        %v1622 = vmul.f32 %v1359, %v1600
        %v1623 = vmul.f32 %v1360, %v1600
        %v1624 = vmul.f32 %v1361, %v1600
        %v1625 = vmul.f32 %v1362, %v1600
        %v1626 = vmul.f32 %v1363, %v1600
        %v1627 = vmul.f32 %v1364, %v1600
        %v1628 = vmul.f32 %v1365, %v1600
        %v1629 = vmul.f32 %v1366, %v1600
        %v1630 = vmul.f32 %v1367, %v1600
        %v1631 = vmul.f32 %v1368, %v1600
        %v1632 = vmul.f32 %v1369, %v1600
        %v1633 = vmul.f32 %v1370, %v1600
        %v1634 = vmul.f32 %v1371, %v1600
        %v1635 = vmul.f32 %v1372, %v1600
        %v1636 = vmul.f32 %v1373, %v1600
        %v1637 = vmul.f32 %v1374, %v1600
        %v1638 = vmul.f32 %v1375, %v1600
        %v1639 = vmul.f32 %v1376, %v1600
        %v1640 = vmul.f32 %v1377, %v1600
        %v1641 = vmul.f32 %v1378, %v1600
        %v1642 = vmul.f32 %v1379, %v1600
        %v1643 = vmul.f32 %v1380, %v1600
        %v1644 = vmul.f32 %v1381, %v1600
        %v1645 = vmul.f32 %v1382, %v1600
        %v1646 = vmul.f32 %v1383, %v1600
        %v1647 = vmul.f32 %v1384, %v1600
        %v1648 = vmul.f32 %v1385, %v1600
        %v1649 = vmul.f32 %v1386, %v1600
        %v1650 = vmul.f32 %v1387, %v1600
        %v1651 = vmul.f32 %v1388, %v1600
        %v1652 = vmul.f32 %v1389, %v1600
        %v1653 = vmul.f32 %v1390, %v1600
        %v1654 = vmul.f32 %v1391, %v1600
        %v1655 = vmul.f32 %v1392, %v1600
        %v1656 = vmul.f32 %v1393, %v1600
        %v1657 = vmul.f32 %v1394, %v1600
        %v1658 = vmul.f32 %v1395, %v1600
        %v1659 = vmul.f32 %v1396, %v1600
        %v1660 = vmul.f32 %v1397, %v1600
        %v1661 = vmul.f32 %v1398, %v1600
        %v1662 = vmul.f32 %v1399, %v1600
        %v1663 = vmul.f32 %v1400, %v1600
        %v1664 = vmul.f32 %v1401, %v1600
        %v1665 = vmul.f32 %v1402, %v1600
        %v1666 = vmul.f32 %v1403, %v1600
        %v1667 = vmul.f32 %v1404, %v1600
        %v1668 = vmul.f32 %v1405, %v1600
        %v1669 = vmul.f32 %v1406, %v1600
        %v1670 = vmul.f32 %v1407, %v1600
        %v1671 = vmul.f32 %v1408, %v1600
        %v1672 = vmul.f32 %v1409, %v1600
        %v1673 = vmul.f32 %v1410, %v1600
        %v1674 = vmul.f32 %v1411, %v1600
        %v1675 = vmul.f32 %v1412, %v1600
        %v1676 = vmul.f32 %v1413, %v1600
        %v1677 = vmul.f32 %v1414, %v1600
        %v1678 = vmul.f32 %v1415, %v1600
        %v1679 = vmul.f32 %v1416, %v1600
        %v1680 = vmul.f32 %v1417, %v1600
        %v1681 = vmul.f32 %v1418, %v1600
        %v1682 = vmul.f32 %v1419, %v1600
        %v1683 = vmul.f32 %v1420, %v1600
        %v1684 = vmul.f32 %v1421, %v1600
        %v1685 = vmul.f32 %v1422, %v1600
        %v1686 = vmul.f32 %v1423, %v1600
        %v1687 = vmul.f32 %v1424, %v1600
        %v1688 = vmul.f32 %v1425, %v1600
        %v1689 = vmul.f32 %v1426, %v1600
        %v1690 = vmul.f32 %v1427, %v1600
        %v1691 = vmul.f32 %v1428, %v1600
        %v1692 = vmul.f32 %v1429, %v1600
        %v1693 = vmul.f32 %v1430, %v1600
        %v1694 = vmul.f32 %v1431, %v1600
        %v1695 = vmul.f32 %v1432, %v1600
        %v1696 = vmul.f32 %v1433, %v1600
        %v1697 = vmul.f32 %v1434, %v1600
        %v1698 = vmul.f32 %v1435, %v1600
        %v1699 = vmul.f32 %v1436, %v1600
        %v1700 = vmul.f32 %v1437, %v1600
        %v1701 = vmul.f32 %v1438, %v1600
        %v1702 = vmul.f32 %v1439, %v1600
        %v1703 = vmul.f32 %v1440, %v1600
        %v1704 = vmul.f32 %v1441, %v1600
        %v1705 = vmul.f32 %v1442, %v1600
        %v1706 = vmul.f32 %v1443, %v1600
        %v1707 = vmul.f32 %v1444, %v1600
        %v1708 = vmul.f32 %v1445, %v1600
        %v1709 = vmul.f32 %v1446, %v1600
        %v1710 = vmul.f32 %v1447, %v1600
        %v1711 = vmul.f32 %v1448, %v1600
        %v1712 = vmul.f32 %v1449, %v1600
        %v1713 = vmul.f32 %v1450, %v1600
        %v1714 = vmul.f32 %v1451, %v1600
        %v1715 = vmul.f32 %v1452, %v1600
        %v1716 = vmul.f32 %v1453, %v1600
        %v1717 = vmul.f32 %v1454, %v1600
        %v1718 = vmul.f32 %v1455, %v1600
        %v1719 = vmul.f32 %v1456, %v1600
        %v1720 = vmul.f32 %v1457, %v1600
        %v1721 = vmul.f32 %v1458, %v1600
        %v1722 = vmul.f32 %v1459, %v1600
        %v1723 = vmul.f32 %v1460, %v1600
        %v1724 = vmul.f32 %v1461, %v1600
        %v1725 = vmul.f32 %v1462, %v1600
        %v1726 = vmul.f32 %v1463, %v1600
        %v1727 = vmul.f32 %v1464, %v1600
        %v1728 = vmul.f32 %v1465, %v1600
        %v1729 = vmul.f32 %v1466, %v1600
        %v1730 = vmul.f32 %v1467, %v1600
        %v1731 = vmul.f32 %v1468, %v1600
        %v1732 = vmul.f32 %v1469, %v1600
        %v1733 = vmul.f32 %v1470, %v1600
        %v1734 = vmul.f32 %v1471, %v1600
        %v1735 = vmul.f32 %v1472, %v1600
        %v1736 = vmul.f32 %v1473, %v1600
        %v1737 = vmul.f32 %v1474, %v1600
        %v1738 = vmul.f32 %v1475, %v1600
        %v1739 = vmul.f32 %v1476, %v1600
        %v1740 = vmul.f32 %v1477, %v1600
        %v1741 = vmul.f32 %v1478, %v1600
        %v1742 = vmul.f32 %v1479, %v1600
        %v1743 = vmul.f32 %v1480, %v1600
        %v1744 = vmul.f32 %v1481, %v1600
        %v1745 = vmul.f32 %v1482, %v1600
        %v1746 = vmul.f32 %v1483, %v1600
        %v1747 = vmul.f32 %v1484, %v1600
        %v1748 = vmul.f32 %v1485, %v1600
        %v1749 = vmul.f32 %v1486, %v1600
        %v1750 = vmul.f32 %v1487, %v1600
        %v1751 = vmul.f32 %v1488, %v1600
        %v1752 = vmul.f32 %v1489, %v1600
        %v1753 = vmul.f32 %v1490, %v1600
        %v1754 = vmul.f32 %v1491, %v1600
        %v1755 = vmul.f32 %v1492, %v1600
        %v1756 = vmul.f32 %v1493, %v1600
        %v1757 = vmul.f32 %v1494, %v1600
        %v1758 = vmul.f32 %v1495, %v1600
        %v1759 = vmul.f32 %v1496, %v1600
        %v1760 = vmul.f32 %v1497, %v1600
        %v1761 = vmul.f32 %v1498, %v1600
        %v1762 = vmul.f32 %v1499, %v1600
        %v1763 = vmul.f32 %v1500, %v1600
        %v1764 = vmul.f32 %v1501, %v1600
        %v1765 = vmul.f32 %v1502, %v1600
        %v1766 = vmul.f32 %v1503, %v1600
        %v1767 = vmul.f32 %v1504, %v1600
        %v1768 = vmul.f32 %v1505, %v1600
        %v1769 = vmul.f32 %v1506, %v1600
        %v1770 = vmul.f32 %v1507, %v1600
        %v1771 = vmul.f32 %v1508, %v1600
        %v1772 = vmul.f32 %v1509, %v1600
        %v1773 = vmul.f32 %v1510, %v1600
        %v1774 = vmul.f32 %v1511, %v1600
        %v1775 = vmul.f32 %v1512, %v1600
        %v1776 = vmul.f32 %v1513, %v1600
        %v1777 = vmul.f32 %v1514, %v1600
        %v1778 = vmul.f32 %v1515, %v1600
        %v1779 = vmul.f32 %v1516, %v1600
        %v1780 = vmul.f32 %v1517, %v1600
        %v1781 = vmul.f32 %v1518, %v1600
        %v1782 = vmul.f32 %v1519, %v1600
        %v1783 = vmul.f32 %v1520, %v1600
        %v1784 = vmul.f32 %v1521, %v1600
        %v1785 = vmul.f32 %v1522, %v1600
        %v1786 = vmul.f32 %v1523, %v1600
        %v1787 = vmul.f32 %v1524, %v1600
        %v1788 = vmul.f32 %v1525, %v1600
        %v1789 = vmul.f32 %v1526, %v1600
        %v1790 = vmul.f32 %v1527, %v1600
        %v1791 = vmul.f32 %v1528, %v1600
        %v1792 = vmul.f32 %v1529, %v1600
        %v1793 = vmul.f32 %v1530, %v1600
        %v1794 = vmul.f32 %v1531, %v1600
        %v1795 = vmul.f32 %v1532, %v1600
        %v1796 = vmul.f32 %v1533, %v1600
        %v1797 = vmul.f32 %v1534, %v1600
        %v1798 = vmul.f32 %v1535, %v1600
        %v1799 = vmul.f32 %v1536, %v1600
        %v1800 = vmul.f32 %v1537, %v1600
        %v1801 = vmul.f32 %v1538, %v1600
        %v1802 = vmul.f32 %v1539, %v1600
        %v1803 = vmul.f32 %v1540, %v1600
        %v1804 = vmul.f32 %v1541, %v1600
        %v1805 = vmul.f32 %v1542, %v1600
        %v1806 = vmul.f32 %v1543, %v1600
        %v1807 = vmul.f32 %v1544, %v1600
        %v1808 = vmul.f32 %v1545, %v1600
        %v1809 = vmul.f32 %v1546, %v1600
        %v1810 = vmul.f32 %v1547, %v1600
        %v1811 = vmul.f32 %v1548, %v1600
        %v1812 = vmul.f32 %v1549, %v1600
        %v1813 = vmul.f32 %v1550, %v1600
        %v1814 = vmul.f32 %v1551, %v1600
        %v1815 = vmul.f32 %v1552, %v1600
        %v1816 = vmul.f32 %v1553, %v1600
        %v1817 = vmul.f32 %v1554, %v1600
        %v1818 = vmul.f32 %v1555, %v1600
        %v1819 = vmul.f32 %v1556, %v1600
        %v1820 = vmul.f32 %v1557, %v1600
        %v1821 = vmul.f32 %v1558, %v1600
        %v1822 = vmul.f32 %v1559, %v1600
        %v1823 = vmul.f32 %v1560, %v1600
        %v1824 = vmul.f32 %v1561, %v1600
        %v1825 = vmul.f32 %v1562, %v1600
        %v1826 = vmul.f32 %v1563, %v1600
        %v1827 = vmul.f32 %v1564, %v1600
        %v1828 = vmul.f32 %v1565, %v1600
        %v1829 = vmul.f32 %v1566, %v1600
        %v1830 = vmul.f32 %v1567, %v1600
        %v1831 = vmul.f32 %v1568, %v1600
        %v1832 = vmul.f32 %v1569, %v1600
        %v1833 = vmul.f32 %v1570, %v1600
        %v1834 = vmul.f32 %v1571, %v1600
        %v1835 = vmul.f32 %v1572, %v1600
        %v1836 = vmul.f32 %v1573, %v1600
        %v1837 = vmul.f32 %v1574, %v1600
        %v1838 = vmul.f32 %v1575, %v1600
        %v1839 = vmul.f32 %v1576, %v1600
        %v1840 = vmul.f32 %v1577, %v1600
        %v1841 = vmul.f32 %v1578, %v1600
        %v1842 = vmul.f32 %v1579, %v1600
        %v1843 = vmul.f32 %v1580, %v1600
        %v1844 = vmul.f32 %v1581, %v1600
        %v1845 = vmul.f32 %v1582, %v1600
        %v1846 = vmul.f32 %v1583, %v1600
        %v1847 = vmul.f32 %v1584, %v1600
        %v1848 = vmul.f32 %v1585, %v1600
        %v1849 = vmul.f32 %v1586, %v1600
        %v1850 = vmul.f32 %v1587, %v1600
        %v1851 = vmul.f32 %v1588, %v1600
        %v1852 = vmul.f32 %v1589, %v1600
        %v1853 = vmul.f32 %v1590, %v1600
        %v1854 = vmul.f32 %v1591, %v1600
        %v1855 = vmul.f32 %v1592, %v1600
        %v1856 = vmul.f32 %v1593, %v1600
        %v1857 = vmul.f32 %v1594, %v1600
        %vm1858 = vcmask 130048
        %v1859 = vsel %vm1858, %v1602, 0.0
        %1860 = vadd.xlane.f32.xlu0 %v1859
        %v1861 = vpop.xlane.xlu0 %1860
        %v1862 = vsel %vm1858, %v1603, 0.0
        %1863 = vadd.xlane.f32.xlu0 %v1862
        %v1864 = vpop.xlane.xlu0 %1863
        %v1865 = vsel %vm1858, %v1604, 0.0
        %1866 = vadd.xlane.f32.xlu0 %v1865
        %v1867 = vpop.xlane.xlu0 %1866
        %v1868 = vsel %vm1858, %v1605, 0.0
        %1869 = vadd.xlane.f32.xlu0 %v1868
        %v1870 = vpop.xlane.xlu0 %1869
        %v1871 = vsel %vm1858, %v1606, 0.0
        %1872 = vadd.xlane.f32.xlu0 %v1871
        %v1873 = vpop.xlane.xlu0 %1872
        %v1874 = vsel %vm1858, %v1607, 0.0
        %1875 = vadd.xlane.f32.xlu0 %v1874
        %v1876 = vpop.xlane.xlu0 %1875
        %v1877 = vsel %vm1858, %v1608, 0.0
        %1878 = vadd.xlane.f32.xlu0 %v1877
        %v1879 = vpop.xlane.xlu0 %1878
        %v1880 = vsel %vm1858, %v1609, 0.0
        %1881 = vadd.xlane.f32.xlu0 %v1880
        %v1882 = vpop.xlane.xlu0 %1881
        %v1883 = vsel %vm1858, %v1610, 0.0
        %1884 = vadd.xlane.f32.xlu0 %v1883
        %v1885 = vpop.xlane.xlu0 %1884
        %v1886 = vsel %vm1858, %v1611, 0.0
        %1887 = vadd.xlane.f32.xlu0 %v1886
        %v1888 = vpop.xlane.xlu0 %1887
        %v1889 = vsel %vm1858, %v1612, 0.0
        %1890 = vadd.xlane.f32.xlu0 %v1889
        %v1891 = vpop.xlane.xlu0 %1890
        %v1892 = vsel %vm1858, %v1613, 0.0
        %1893 = vadd.xlane.f32.xlu0 %v1892
        %v1894 = vpop.xlane.xlu0 %1893
        %v1895 = vsel %vm1858, %v1614, 0.0
        %1896 = vadd.xlane.f32.xlu0 %v1895
        %v1897 = vpop.xlane.xlu0 %1896
        %v1898 = vsel %vm1858, %v1615, 0.0
        %1899 = vadd.xlane.f32.xlu0 %v1898
        %v1900 = vpop.xlane.xlu0 %1899
        %v1901 = vsel %vm1858, %v1616, 0.0
        %1902 = vadd.xlane.f32.xlu0 %v1901
        %v1903 = vpop.xlane.xlu0 %1902
        %v1904 = vsel %vm1858, %v1617, 0.0
        %1905 = vadd.xlane.f32.xlu0 %v1904
        %v1906 = vpop.xlane.xlu0 %1905
        %v1907 = vsel %vm1858, %v1618, 0.0
        %1908 = vadd.xlane.f32.xlu0 %v1907
        %v1909 = vpop.xlane.xlu0 %1908
        %v1910 = vsel %vm1858, %v1619, 0.0
        %1911 = vadd.xlane.f32.xlu0 %v1910
        %v1912 = vpop.xlane.xlu0 %1911
        %v1913 = vsel %vm1858, %v1620, 0.0
        %1914 = vadd.xlane.f32.xlu0 %v1913
        %v1915 = vpop.xlane.xlu0 %1914
        %v1916 = vsel %vm1858, %v1621, 0.0
        %1917 = vadd.xlane.f32.xlu0 %v1916
        %v1918 = vpop.xlane.xlu0 %1917
        %v1919 = vsel %vm1858, %v1622, 0.0
        %1920 = vadd.xlane.f32.xlu0 %v1919
        %v1921 = vpop.xlane.xlu0 %1920
        %v1922 = vsel %vm1858, %v1623, 0.0
        %1923 = vadd.xlane.f32.xlu0 %v1922
        %v1924 = vpop.xlane.xlu0 %1923
        %v1925 = vsel %vm1858, %v1624, 0.0
        %1926 = vadd.xlane.f32.xlu0 %v1925
        %v1927 = vpop.xlane.xlu0 %1926
        %v1928 = vsel %vm1858, %v1625, 0.0
        %1929 = vadd.xlane.f32.xlu0 %v1928
        %v1930 = vpop.xlane.xlu0 %1929
        %v1931 = vsel %vm1858, %v1626, 0.0
        %1932 = vadd.xlane.f32.xlu0 %v1931
        %v1933 = vpop.xlane.xlu0 %1932
        %v1934 = vsel %vm1858, %v1627, 0.0
        %1935 = vadd.xlane.f32.xlu0 %v1934
        %v1936 = vpop.xlane.xlu0 %1935
        %v1937 = vsel %vm1858, %v1628, 0.0
        %1938 = vadd.xlane.f32.xlu0 %v1937
        %v1939 = vpop.xlane.xlu0 %1938
        %v1940 = vsel %vm1858, %v1629, 0.0
        %1941 = vadd.xlane.f32.xlu0 %v1940
        %v1942 = vpop.xlane.xlu0 %1941
        %v1943 = vsel %vm1858, %v1630, 0.0
        %1944 = vadd.xlane.f32.xlu0 %v1943
        %v1945 = vpop.xlane.xlu0 %1944
        %v1946 = vsel %vm1858, %v1631, 0.0
        %1947 = vadd.xlane.f32.xlu0 %v1946
        %v1948 = vpop.xlane.xlu0 %1947
        %v1949 = vsel %vm1858, %v1632, 0.0
        %1950 = vadd.xlane.f32.xlu0 %v1949
        %v1951 = vpop.xlane.xlu0 %1950
        %v1952 = vsel %vm1858, %v1633, 0.0
        %1953 = vadd.xlane.f32.xlu0 %v1952
        %v1954 = vpop.xlane.xlu0 %1953
        %v1955 = vsel %vm1858, %v1634, 0.0
        %1956 = vadd.xlane.f32.xlu0 %v1955
        %v1957 = vpop.xlane.xlu0 %1956
        %v1958 = vsel %vm1858, %v1635, 0.0
        %1959 = vadd.xlane.f32.xlu0 %v1958
        %v1960 = vpop.xlane.xlu0 %1959
        %v1961 = vsel %vm1858, %v1636, 0.0
        %1962 = vadd.xlane.f32.xlu0 %v1961
        %v1963 = vpop.xlane.xlu0 %1962
        %v1964 = vsel %vm1858, %v1637, 0.0
        %1965 = vadd.xlane.f32.xlu0 %v1964
        %v1966 = vpop.xlane.xlu0 %1965
        %v1967 = vsel %vm1858, %v1638, 0.0
        %1968 = vadd.xlane.f32.xlu0 %v1967
        %v1969 = vpop.xlane.xlu0 %1968
        %v1970 = vsel %vm1858, %v1639, 0.0
        %1971 = vadd.xlane.f32.xlu0 %v1970
        %v1972 = vpop.xlane.xlu0 %1971
        %v1973 = vsel %vm1858, %v1640, 0.0
        %1974 = vadd.xlane.f32.xlu0 %v1973
        %v1975 = vpop.xlane.xlu0 %1974
        %v1976 = vsel %vm1858, %v1641, 0.0
        %1977 = vadd.xlane.f32.xlu0 %v1976
        %v1978 = vpop.xlane.xlu0 %1977
        %v1979 = vsel %vm1858, %v1642, 0.0
        %1980 = vadd.xlane.f32.xlu0 %v1979
        %v1981 = vpop.xlane.xlu0 %1980
        %v1982 = vsel %vm1858, %v1643, 0.0
        %1983 = vadd.xlane.f32.xlu0 %v1982
        %v1984 = vpop.xlane.xlu0 %1983
        %v1985 = vsel %vm1858, %v1644, 0.0
        %1986 = vadd.xlane.f32.xlu0 %v1985
        %v1987 = vpop.xlane.xlu0 %1986
        %v1988 = vsel %vm1858, %v1645, 0.0
        %1989 = vadd.xlane.f32.xlu0 %v1988
        %v1990 = vpop.xlane.xlu0 %1989
        %v1991 = vsel %vm1858, %v1646, 0.0
        %1992 = vadd.xlane.f32.xlu0 %v1991
        %v1993 = vpop.xlane.xlu0 %1992
        %v1994 = vsel %vm1858, %v1647, 0.0
        %1995 = vadd.xlane.f32.xlu0 %v1994
        %v1996 = vpop.xlane.xlu0 %1995
        %v1997 = vsel %vm1858, %v1648, 0.0
        %1998 = vadd.xlane.f32.xlu0 %v1997
        %v1999 = vpop.xlane.xlu0 %1998
        %v2000 = vsel %vm1858, %v1649, 0.0
        %2001 = vadd.xlane.f32.xlu0 %v2000
        %v2002 = vpop.xlane.xlu0 %2001
        %v2003 = vsel %vm1858, %v1650, 0.0
        %2004 = vadd.xlane.f32.xlu0 %v2003
        %v2005 = vpop.xlane.xlu0 %2004
        %v2006 = vsel %vm1858, %v1651, 0.0
        %2007 = vadd.xlane.f32.xlu0 %v2006
        %v2008 = vpop.xlane.xlu0 %2007
        %v2009 = vsel %vm1858, %v1652, 0.0
        %2010 = vadd.xlane.f32.xlu0 %v2009
        %v2011 = vpop.xlane.xlu0 %2010
        %v2012 = vsel %vm1858, %v1653, 0.0
        %2013 = vadd.xlane.f32.xlu0 %v2012
        %v2014 = vpop.xlane.xlu0 %2013
        %v2015 = vsel %vm1858, %v1654, 0.0
        %2016 = vadd.xlane.f32.xlu0 %v2015
        %v2017 = vpop.xlane.xlu0 %2016
        %v2018 = vsel %vm1858, %v1655, 0.0
        %2019 = vadd.xlane.f32.xlu0 %v2018
        %v2020 = vpop.xlane.xlu0 %2019
        %v2021 = vsel %vm1858, %v1656, 0.0
        %2022 = vadd.xlane.f32.xlu0 %v2021
        %v2023 = vpop.xlane.xlu0 %2022
        %v2024 = vsel %vm1858, %v1657, 0.0
        %2025 = vadd.xlane.f32.xlu0 %v2024
        %v2026 = vpop.xlane.xlu0 %2025
        %v2027 = vsel %vm1858, %v1658, 0.0
        %2028 = vadd.xlane.f32.xlu0 %v2027
        %v2029 = vpop.xlane.xlu0 %2028
        %v2030 = vsel %vm1858, %v1659, 0.0
        %2031 = vadd.xlane.f32.xlu0 %v2030
        %v2032 = vpop.xlane.xlu0 %2031
        %v2033 = vsel %vm1858, %v1660, 0.0
        %2034 = vadd.xlane.f32.xlu0 %v2033
        %v2035 = vpop.xlane.xlu0 %2034
        %v2036 = vsel %vm1858, %v1661, 0.0
        %2037 = vadd.xlane.f32.xlu0 %v2036
        %v2038 = vpop.xlane.xlu0 %2037
        %v2039 = vsel %vm1858, %v1662, 0.0
        %2040 = vadd.xlane.f32.xlu0 %v2039
        %v2041 = vpop.xlane.xlu0 %2040
        %v2042 = vsel %vm1858, %v1663, 0.0
        %2043 = vadd.xlane.f32.xlu0 %v2042
        %v2044 = vpop.xlane.xlu0 %2043
        %v2045 = vsel %vm1858, %v1664, 0.0
        %2046 = vadd.xlane.f32.xlu0 %v2045
        %v2047 = vpop.xlane.xlu0 %2046
        %v2048 = vsel %vm1858, %v1665, 0.0
        %2049 = vadd.xlane.f32.xlu0 %v2048
        %v2050 = vpop.xlane.xlu0 %2049
        %v2051 = vsel %vm1858, %v1666, 0.0
        %2052 = vadd.xlane.f32.xlu0 %v2051
        %v2053 = vpop.xlane.xlu0 %2052
        %v2054 = vsel %vm1858, %v1667, 0.0
        %2055 = vadd.xlane.f32.xlu0 %v2054
        %v2056 = vpop.xlane.xlu0 %2055
        %v2057 = vsel %vm1858, %v1668, 0.0
        %2058 = vadd.xlane.f32.xlu0 %v2057
        %v2059 = vpop.xlane.xlu0 %2058
        %v2060 = vsel %vm1858, %v1669, 0.0
        %2061 = vadd.xlane.f32.xlu0 %v2060
        %v2062 = vpop.xlane.xlu0 %2061
        %v2063 = vsel %vm1858, %v1670, 0.0
        %2064 = vadd.xlane.f32.xlu0 %v2063
        %v2065 = vpop.xlane.xlu0 %2064
        %v2066 = vsel %vm1858, %v1671, 0.0
        %2067 = vadd.xlane.f32.xlu0 %v2066
        %v2068 = vpop.xlane.xlu0 %2067
        %v2069 = vsel %vm1858, %v1672, 0.0
        %2070 = vadd.xlane.f32.xlu0 %v2069
        %v2071 = vpop.xlane.xlu0 %2070
        %v2072 = vsel %vm1858, %v1673, 0.0
        %2073 = vadd.xlane.f32.xlu0 %v2072
        %v2074 = vpop.xlane.xlu0 %2073
        %v2075 = vsel %vm1858, %v1674, 0.0
        %2076 = vadd.xlane.f32.xlu0 %v2075
        %v2077 = vpop.xlane.xlu0 %2076
        %v2078 = vsel %vm1858, %v1675, 0.0
        %2079 = vadd.xlane.f32.xlu0 %v2078
        %v2080 = vpop.xlane.xlu0 %2079
        %v2081 = vsel %vm1858, %v1676, 0.0
        %2082 = vadd.xlane.f32.xlu0 %v2081
        %v2083 = vpop.xlane.xlu0 %2082
        %v2084 = vsel %vm1858, %v1677, 0.0
        %2085 = vadd.xlane.f32.xlu0 %v2084
        %v2086 = vpop.xlane.xlu0 %2085
        %v2087 = vsel %vm1858, %v1678, 0.0
        %2088 = vadd.xlane.f32.xlu0 %v2087
        %v2089 = vpop.xlane.xlu0 %2088
        %v2090 = vsel %vm1858, %v1679, 0.0
        %2091 = vadd.xlane.f32.xlu0 %v2090
        %v2092 = vpop.xlane.xlu0 %2091
        %v2093 = vsel %vm1858, %v1680, 0.0
        %2094 = vadd.xlane.f32.xlu0 %v2093
        %v2095 = vpop.xlane.xlu0 %2094
        %v2096 = vsel %vm1858, %v1681, 0.0
        %2097 = vadd.xlane.f32.xlu0 %v2096
        %v2098 = vpop.xlane.xlu0 %2097
        %v2099 = vsel %vm1858, %v1682, 0.0
        %2100 = vadd.xlane.f32.xlu0 %v2099
        %v2101 = vpop.xlane.xlu0 %2100
        %v2102 = vsel %vm1858, %v1683, 0.0
        %2103 = vadd.xlane.f32.xlu0 %v2102
        %v2104 = vpop.xlane.xlu0 %2103
        %v2105 = vsel %vm1858, %v1684, 0.0
        %2106 = vadd.xlane.f32.xlu0 %v2105
        %v2107 = vpop.xlane.xlu0 %2106
        %v2108 = vsel %vm1858, %v1685, 0.0
        %2109 = vadd.xlane.f32.xlu0 %v2108
        %v2110 = vpop.xlane.xlu0 %2109
        %v2111 = vsel %vm1858, %v1686, 0.0
        %2112 = vadd.xlane.f32.xlu0 %v2111
        %v2113 = vpop.xlane.xlu0 %2112
        %v2114 = vsel %vm1858, %v1687, 0.0
        %2115 = vadd.xlane.f32.xlu0 %v2114
        %v2116 = vpop.xlane.xlu0 %2115
        %v2117 = vsel %vm1858, %v1688, 0.0
        %2118 = vadd.xlane.f32.xlu0 %v2117
        %v2119 = vpop.xlane.xlu0 %2118
        %v2120 = vsel %vm1858, %v1689, 0.0
        %2121 = vadd.xlane.f32.xlu0 %v2120
        %v2122 = vpop.xlane.xlu0 %2121
        %v2123 = vsel %vm1858, %v1690, 0.0
        %2124 = vadd.xlane.f32.xlu0 %v2123
        %v2125 = vpop.xlane.xlu0 %2124
        %v2126 = vsel %vm1858, %v1691, 0.0
        %2127 = vadd.xlane.f32.xlu0 %v2126
        %v2128 = vpop.xlane.xlu0 %2127
        %v2129 = vsel %vm1858, %v1692, 0.0
        %2130 = vadd.xlane.f32.xlu0 %v2129
        %v2131 = vpop.xlane.xlu0 %2130
        %v2132 = vsel %vm1858, %v1693, 0.0
        %2133 = vadd.xlane.f32.xlu0 %v2132
        %v2134 = vpop.xlane.xlu0 %2133
        %v2135 = vsel %vm1858, %v1694, 0.0
        %2136 = vadd.xlane.f32.xlu0 %v2135
        %v2137 = vpop.xlane.xlu0 %2136
        %v2138 = vsel %vm1858, %v1695, 0.0
        %2139 = vadd.xlane.f32.xlu0 %v2138
        %v2140 = vpop.xlane.xlu0 %2139
        %v2141 = vsel %vm1858, %v1696, 0.0
        %2142 = vadd.xlane.f32.xlu0 %v2141
        %v2143 = vpop.xlane.xlu0 %2142
        %v2144 = vsel %vm1858, %v1697, 0.0
        %2145 = vadd.xlane.f32.xlu0 %v2144
        %v2146 = vpop.xlane.xlu0 %2145
        %v2147 = vsel %vm1858, %v1698, 0.0
        %2148 = vadd.xlane.f32.xlu0 %v2147
        %v2149 = vpop.xlane.xlu0 %2148
        %v2150 = vsel %vm1858, %v1699, 0.0
        %2151 = vadd.xlane.f32.xlu0 %v2150
        %v2152 = vpop.xlane.xlu0 %2151
        %v2153 = vsel %vm1858, %v1700, 0.0
        %2154 = vadd.xlane.f32.xlu0 %v2153
        %v2155 = vpop.xlane.xlu0 %2154
        %v2156 = vsel %vm1858, %v1701, 0.0
        %2157 = vadd.xlane.f32.xlu0 %v2156
        %v2158 = vpop.xlane.xlu0 %2157
        %v2159 = vsel %vm1858, %v1702, 0.0
        %2160 = vadd.xlane.f32.xlu0 %v2159
        %v2161 = vpop.xlane.xlu0 %2160
        %v2162 = vsel %vm1858, %v1703, 0.0
        %2163 = vadd.xlane.f32.xlu0 %v2162
        %v2164 = vpop.xlane.xlu0 %2163
        %v2165 = vsel %vm1858, %v1704, 0.0
        %2166 = vadd.xlane.f32.xlu0 %v2165
        %v2167 = vpop.xlane.xlu0 %2166
        %v2168 = vsel %vm1858, %v1705, 0.0
        %2169 = vadd.xlane.f32.xlu0 %v2168
        %v2170 = vpop.xlane.xlu0 %2169
        %v2171 = vsel %vm1858, %v1706, 0.0
        %2172 = vadd.xlane.f32.xlu0 %v2171
        %v2173 = vpop.xlane.xlu0 %2172
        %v2174 = vsel %vm1858, %v1707, 0.0
        %2175 = vadd.xlane.f32.xlu0 %v2174
        %v2176 = vpop.xlane.xlu0 %2175
        %v2177 = vsel %vm1858, %v1708, 0.0
        %2178 = vadd.xlane.f32.xlu0 %v2177
        %v2179 = vpop.xlane.xlu0 %2178
        %v2180 = vsel %vm1858, %v1709, 0.0
        %2181 = vadd.xlane.f32.xlu0 %v2180
        %v2182 = vpop.xlane.xlu0 %2181
        %v2183 = vsel %vm1858, %v1710, 0.0
        %2184 = vadd.xlane.f32.xlu0 %v2183
        %v2185 = vpop.xlane.xlu0 %2184
        %v2186 = vsel %vm1858, %v1711, 0.0
        %2187 = vadd.xlane.f32.xlu0 %v2186
        %v2188 = vpop.xlane.xlu0 %2187
        %v2189 = vsel %vm1858, %v1712, 0.0
        %2190 = vadd.xlane.f32.xlu0 %v2189
        %v2191 = vpop.xlane.xlu0 %2190
        %v2192 = vsel %vm1858, %v1713, 0.0
        %2193 = vadd.xlane.f32.xlu0 %v2192
        %v2194 = vpop.xlane.xlu0 %2193
        %v2195 = vsel %vm1858, %v1714, 0.0
        %2196 = vadd.xlane.f32.xlu0 %v2195
        %v2197 = vpop.xlane.xlu0 %2196
        %v2198 = vsel %vm1858, %v1715, 0.0
        %2199 = vadd.xlane.f32.xlu0 %v2198
        %v2200 = vpop.xlane.xlu0 %2199
        %v2201 = vsel %vm1858, %v1716, 0.0
        %2202 = vadd.xlane.f32.xlu0 %v2201
        %v2203 = vpop.xlane.xlu0 %2202
        %v2204 = vsel %vm1858, %v1717, 0.0
        %2205 = vadd.xlane.f32.xlu0 %v2204
        %v2206 = vpop.xlane.xlu0 %2205
        %v2207 = vsel %vm1858, %v1718, 0.0
        %2208 = vadd.xlane.f32.xlu0 %v2207
        %v2209 = vpop.xlane.xlu0 %2208
        %v2210 = vsel %vm1858, %v1719, 0.0
        %2211 = vadd.xlane.f32.xlu0 %v2210
        %v2212 = vpop.xlane.xlu0 %2211
        %v2213 = vsel %vm1858, %v1720, 0.0
        %2214 = vadd.xlane.f32.xlu0 %v2213
        %v2215 = vpop.xlane.xlu0 %2214
        %v2216 = vsel %vm1858, %v1721, 0.0
        %2217 = vadd.xlane.f32.xlu0 %v2216
        %v2218 = vpop.xlane.xlu0 %2217
        %v2219 = vsel %vm1858, %v1722, 0.0
        %2220 = vadd.xlane.f32.xlu0 %v2219
        %v2221 = vpop.xlane.xlu0 %2220
        %v2222 = vsel %vm1858, %v1723, 0.0
        %2223 = vadd.xlane.f32.xlu0 %v2222
        %v2224 = vpop.xlane.xlu0 %2223
        %v2225 = vsel %vm1858, %v1724, 0.0
        %2226 = vadd.xlane.f32.xlu0 %v2225
        %v2227 = vpop.xlane.xlu0 %2226
        %v2228 = vsel %vm1858, %v1725, 0.0
        %2229 = vadd.xlane.f32.xlu0 %v2228
        %v2230 = vpop.xlane.xlu0 %2229
        %v2231 = vsel %vm1858, %v1726, 0.0
        %2232 = vadd.xlane.f32.xlu0 %v2231
        %v2233 = vpop.xlane.xlu0 %2232
        %v2234 = vsel %vm1858, %v1727, 0.0
        %2235 = vadd.xlane.f32.xlu0 %v2234
        %v2236 = vpop.xlane.xlu0 %2235
        %v2237 = vsel %vm1858, %v1728, 0.0
        %2238 = vadd.xlane.f32.xlu0 %v2237
        %v2239 = vpop.xlane.xlu0 %2238
        %v2240 = vsel %vm1858, %v1729, 0.0
        %2241 = vadd.xlane.f32.xlu0 %v2240
        %v2242 = vpop.xlane.xlu0 %2241
        %v2243 = vsel %vm1858, %v1730, 0.0
        %2244 = vadd.xlane.f32.xlu0 %v2243
        %v2245 = vpop.xlane.xlu0 %2244
        %v2246 = vsel %vm1858, %v1731, 0.0
        %2247 = vadd.xlane.f32.xlu0 %v2246
        %v2248 = vpop.xlane.xlu0 %2247
        %v2249 = vsel %vm1858, %v1732, 0.0
        %2250 = vadd.xlane.f32.xlu0 %v2249
        %v2251 = vpop.xlane.xlu0 %2250
        %v2252 = vsel %vm1858, %v1733, 0.0
        %2253 = vadd.xlane.f32.xlu0 %v2252
        %v2254 = vpop.xlane.xlu0 %2253
        %v2255 = vsel %vm1858, %v1734, 0.0
        %2256 = vadd.xlane.f32.xlu0 %v2255
        %v2257 = vpop.xlane.xlu0 %2256
        %v2258 = vsel %vm1858, %v1735, 0.0
        %2259 = vadd.xlane.f32.xlu0 %v2258
        %v2260 = vpop.xlane.xlu0 %2259
        %v2261 = vsel %vm1858, %v1736, 0.0
        %2262 = vadd.xlane.f32.xlu0 %v2261
        %v2263 = vpop.xlane.xlu0 %2262
        %v2264 = vsel %vm1858, %v1737, 0.0
        %2265 = vadd.xlane.f32.xlu0 %v2264
        %v2266 = vpop.xlane.xlu0 %2265
        %v2267 = vsel %vm1858, %v1738, 0.0
        %2268 = vadd.xlane.f32.xlu0 %v2267
        %v2269 = vpop.xlane.xlu0 %2268
        %v2270 = vsel %vm1858, %v1739, 0.0
        %2271 = vadd.xlane.f32.xlu0 %v2270
        %v2272 = vpop.xlane.xlu0 %2271
        %v2273 = vsel %vm1858, %v1740, 0.0
        %2274 = vadd.xlane.f32.xlu0 %v2273
        %v2275 = vpop.xlane.xlu0 %2274
        %v2276 = vsel %vm1858, %v1741, 0.0
        %2277 = vadd.xlane.f32.xlu0 %v2276
        %v2278 = vpop.xlane.xlu0 %2277
        %v2279 = vsel %vm1858, %v1742, 0.0
        %2280 = vadd.xlane.f32.xlu0 %v2279
        %v2281 = vpop.xlane.xlu0 %2280
        %v2282 = vsel %vm1858, %v1743, 0.0
        %2283 = vadd.xlane.f32.xlu0 %v2282
        %v2284 = vpop.xlane.xlu0 %2283
        %v2285 = vsel %vm1858, %v1744, 0.0
        %2286 = vadd.xlane.f32.xlu0 %v2285
        %v2287 = vpop.xlane.xlu0 %2286
        %v2288 = vsel %vm1858, %v1745, 0.0
        %2289 = vadd.xlane.f32.xlu0 %v2288
        %v2290 = vpop.xlane.xlu0 %2289
        %v2291 = vsel %vm1858, %v1746, 0.0
        %2292 = vadd.xlane.f32.xlu0 %v2291
        %v2293 = vpop.xlane.xlu0 %2292
        %v2294 = vsel %vm1858, %v1747, 0.0
        %2295 = vadd.xlane.f32.xlu0 %v2294
        %v2296 = vpop.xlane.xlu0 %2295
        %v2297 = vsel %vm1858, %v1748, 0.0
        %2298 = vadd.xlane.f32.xlu0 %v2297
        %v2299 = vpop.xlane.xlu0 %2298
        %v2300 = vsel %vm1858, %v1749, 0.0
        %2301 = vadd.xlane.f32.xlu0 %v2300
        %v2302 = vpop.xlane.xlu0 %2301
        %v2303 = vsel %vm1858, %v1750, 0.0
        %2304 = vadd.xlane.f32.xlu0 %v2303
        %v2305 = vpop.xlane.xlu0 %2304
        %v2306 = vsel %vm1858, %v1751, 0.0
        %2307 = vadd.xlane.f32.xlu0 %v2306
        %v2308 = vpop.xlane.xlu0 %2307
        %v2309 = vsel %vm1858, %v1752, 0.0
        %2310 = vadd.xlane.f32.xlu0 %v2309
        %v2311 = vpop.xlane.xlu0 %2310
        %v2312 = vsel %vm1858, %v1753, 0.0
        %2313 = vadd.xlane.f32.xlu0 %v2312
        %v2314 = vpop.xlane.xlu0 %2313
        %v2315 = vsel %vm1858, %v1754, 0.0
        %2316 = vadd.xlane.f32.xlu0 %v2315
        %v2317 = vpop.xlane.xlu0 %2316
        %v2318 = vsel %vm1858, %v1755, 0.0
        %2319 = vadd.xlane.f32.xlu0 %v2318
        %v2320 = vpop.xlane.xlu0 %2319
        %v2321 = vsel %vm1858, %v1756, 0.0
        %2322 = vadd.xlane.f32.xlu0 %v2321
        %v2323 = vpop.xlane.xlu0 %2322
        %v2324 = vsel %vm1858, %v1757, 0.0
        %2325 = vadd.xlane.f32.xlu0 %v2324
        %v2326 = vpop.xlane.xlu0 %2325
        %v2327 = vsel %vm1858, %v1758, 0.0
        %2328 = vadd.xlane.f32.xlu0 %v2327
        %v2329 = vpop.xlane.xlu0 %2328
        %v2330 = vsel %vm1858, %v1759, 0.0
        %2331 = vadd.xlane.f32.xlu0 %v2330
        %v2332 = vpop.xlane.xlu0 %2331
        %v2333 = vsel %vm1858, %v1760, 0.0
        %2334 = vadd.xlane.f32.xlu0 %v2333
        %v2335 = vpop.xlane.xlu0 %2334
        %v2336 = vsel %vm1858, %v1761, 0.0
        %2337 = vadd.xlane.f32.xlu0 %v2336
        %v2338 = vpop.xlane.xlu0 %2337
        %v2339 = vsel %vm1858, %v1762, 0.0
        %2340 = vadd.xlane.f32.xlu0 %v2339
        %v2341 = vpop.xlane.xlu0 %2340
        %v2342 = vsel %vm1858, %v1763, 0.0
        %2343 = vadd.xlane.f32.xlu0 %v2342
        %v2344 = vpop.xlane.xlu0 %2343
        %v2345 = vsel %vm1858, %v1764, 0.0
        %2346 = vadd.xlane.f32.xlu0 %v2345
        %v2347 = vpop.xlane.xlu0 %2346
        %v2348 = vsel %vm1858, %v1765, 0.0
        %2349 = vadd.xlane.f32.xlu0 %v2348
        %v2350 = vpop.xlane.xlu0 %2349
        %v2351 = vsel %vm1858, %v1766, 0.0
        %2352 = vadd.xlane.f32.xlu0 %v2351
        %v2353 = vpop.xlane.xlu0 %2352
        %v2354 = vsel %vm1858, %v1767, 0.0
        %2355 = vadd.xlane.f32.xlu0 %v2354
        %v2356 = vpop.xlane.xlu0 %2355
        %v2357 = vsel %vm1858, %v1768, 0.0
        %2358 = vadd.xlane.f32.xlu0 %v2357
        %v2359 = vpop.xlane.xlu0 %2358
        %v2360 = vsel %vm1858, %v1769, 0.0
        %2361 = vadd.xlane.f32.xlu0 %v2360
        %v2362 = vpop.xlane.xlu0 %2361
        %v2363 = vsel %vm1858, %v1770, 0.0
        %2364 = vadd.xlane.f32.xlu0 %v2363
        %v2365 = vpop.xlane.xlu0 %2364
        %v2366 = vsel %vm1858, %v1771, 0.0
        %2367 = vadd.xlane.f32.xlu0 %v2366
        %v2368 = vpop.xlane.xlu0 %2367
        %v2369 = vsel %vm1858, %v1772, 0.0
        %2370 = vadd.xlane.f32.xlu0 %v2369
        %v2371 = vpop.xlane.xlu0 %2370
        %v2372 = vsel %vm1858, %v1773, 0.0
        %2373 = vadd.xlane.f32.xlu0 %v2372
        %v2374 = vpop.xlane.xlu0 %2373
        %v2375 = vsel %vm1858, %v1774, 0.0
        %2376 = vadd.xlane.f32.xlu0 %v2375
        %v2377 = vpop.xlane.xlu0 %2376
        %v2378 = vsel %vm1858, %v1775, 0.0
        %2379 = vadd.xlane.f32.xlu0 %v2378
        %v2380 = vpop.xlane.xlu0 %2379
        %v2381 = vsel %vm1858, %v1776, 0.0
        %2382 = vadd.xlane.f32.xlu0 %v2381
        %v2383 = vpop.xlane.xlu0 %2382
        %v2384 = vsel %vm1858, %v1777, 0.0
        %2385 = vadd.xlane.f32.xlu0 %v2384
        %v2386 = vpop.xlane.xlu0 %2385
        %v2387 = vsel %vm1858, %v1778, 0.0
        %2388 = vadd.xlane.f32.xlu0 %v2387
        %v2389 = vpop.xlane.xlu0 %2388
        %v2390 = vsel %vm1858, %v1779, 0.0
        %2391 = vadd.xlane.f32.xlu0 %v2390
        %v2392 = vpop.xlane.xlu0 %2391
        %v2393 = vsel %vm1858, %v1780, 0.0
        %2394 = vadd.xlane.f32.xlu0 %v2393
        %v2395 = vpop.xlane.xlu0 %2394
        %v2396 = vsel %vm1858, %v1781, 0.0
        %2397 = vadd.xlane.f32.xlu0 %v2396
        %v2398 = vpop.xlane.xlu0 %2397
        %v2399 = vsel %vm1858, %v1782, 0.0
        %2400 = vadd.xlane.f32.xlu0 %v2399
        %v2401 = vpop.xlane.xlu0 %2400
        %v2402 = vsel %vm1858, %v1783, 0.0
        %2403 = vadd.xlane.f32.xlu0 %v2402
        %v2404 = vpop.xlane.xlu0 %2403
        %v2405 = vsel %vm1858, %v1784, 0.0
        %2406 = vadd.xlane.f32.xlu0 %v2405
        %v2407 = vpop.xlane.xlu0 %2406
        %v2408 = vsel %vm1858, %v1785, 0.0
        %2409 = vadd.xlane.f32.xlu0 %v2408
        %v2410 = vpop.xlane.xlu0 %2409
        %v2411 = vsel %vm1858, %v1786, 0.0
        %2412 = vadd.xlane.f32.xlu0 %v2411
        %v2413 = vpop.xlane.xlu0 %2412
        %v2414 = vsel %vm1858, %v1787, 0.0
        %2415 = vadd.xlane.f32.xlu0 %v2414
        %v2416 = vpop.xlane.xlu0 %2415
        %v2417 = vsel %vm1858, %v1788, 0.0
        %2418 = vadd.xlane.f32.xlu0 %v2417
        %v2419 = vpop.xlane.xlu0 %2418
        %v2420 = vsel %vm1858, %v1789, 0.0
        %2421 = vadd.xlane.f32.xlu0 %v2420
        %v2422 = vpop.xlane.xlu0 %2421
        %v2423 = vsel %vm1858, %v1790, 0.0
        %2424 = vadd.xlane.f32.xlu0 %v2423
        %v2425 = vpop.xlane.xlu0 %2424
        %v2426 = vsel %vm1858, %v1791, 0.0
        %2427 = vadd.xlane.f32.xlu0 %v2426
        %v2428 = vpop.xlane.xlu0 %2427
        %v2429 = vsel %vm1858, %v1792, 0.0
        %2430 = vadd.xlane.f32.xlu0 %v2429
        %v2431 = vpop.xlane.xlu0 %2430
        %v2432 = vsel %vm1858, %v1793, 0.0
        %2433 = vadd.xlane.f32.xlu0 %v2432
        %v2434 = vpop.xlane.xlu0 %2433
        %v2435 = vsel %vm1858, %v1794, 0.0
        %2436 = vadd.xlane.f32.xlu0 %v2435
        %v2437 = vpop.xlane.xlu0 %2436
        %v2438 = vsel %vm1858, %v1795, 0.0
        %2439 = vadd.xlane.f32.xlu0 %v2438
        %v2440 = vpop.xlane.xlu0 %2439
        %v2441 = vsel %vm1858, %v1796, 0.0
        %2442 = vadd.xlane.f32.xlu0 %v2441
        %v2443 = vpop.xlane.xlu0 %2442
        %v2444 = vsel %vm1858, %v1797, 0.0
        %2445 = vadd.xlane.f32.xlu0 %v2444
        %v2446 = vpop.xlane.xlu0 %2445
        %v2447 = vsel %vm1858, %v1798, 0.0
        %2448 = vadd.xlane.f32.xlu0 %v2447
        %v2449 = vpop.xlane.xlu0 %2448
        %v2450 = vsel %vm1858, %v1799, 0.0
        %2451 = vadd.xlane.f32.xlu0 %v2450
        %v2452 = vpop.xlane.xlu0 %2451
        %v2453 = vsel %vm1858, %v1800, 0.0
        %2454 = vadd.xlane.f32.xlu0 %v2453
        %v2455 = vpop.xlane.xlu0 %2454
        %v2456 = vsel %vm1858, %v1801, 0.0
        %2457 = vadd.xlane.f32.xlu0 %v2456
        %v2458 = vpop.xlane.xlu0 %2457
        %v2459 = vsel %vm1858, %v1802, 0.0
        %2460 = vadd.xlane.f32.xlu0 %v2459
        %v2461 = vpop.xlane.xlu0 %2460
        %v2462 = vsel %vm1858, %v1803, 0.0
        %2463 = vadd.xlane.f32.xlu0 %v2462
        %v2464 = vpop.xlane.xlu0 %2463
        %v2465 = vsel %vm1858, %v1804, 0.0
        %2466 = vadd.xlane.f32.xlu0 %v2465
        %v2467 = vpop.xlane.xlu0 %2466
        %v2468 = vsel %vm1858, %v1805, 0.0
        %2469 = vadd.xlane.f32.xlu0 %v2468
        %v2470 = vpop.xlane.xlu0 %2469
        %v2471 = vsel %vm1858, %v1806, 0.0
        %2472 = vadd.xlane.f32.xlu0 %v2471
        %v2473 = vpop.xlane.xlu0 %2472
        %v2474 = vsel %vm1858, %v1807, 0.0
        %2475 = vadd.xlane.f32.xlu0 %v2474
        %v2476 = vpop.xlane.xlu0 %2475
        %v2477 = vsel %vm1858, %v1808, 0.0
        %2478 = vadd.xlane.f32.xlu0 %v2477
        %v2479 = vpop.xlane.xlu0 %2478
        %v2480 = vsel %vm1858, %v1809, 0.0
        %2481 = vadd.xlane.f32.xlu0 %v2480
        %v2482 = vpop.xlane.xlu0 %2481
        %v2483 = vsel %vm1858, %v1810, 0.0
        %2484 = vadd.xlane.f32.xlu0 %v2483
        %v2485 = vpop.xlane.xlu0 %2484
        %v2486 = vsel %vm1858, %v1811, 0.0
        %2487 = vadd.xlane.f32.xlu0 %v2486
        %v2488 = vpop.xlane.xlu0 %2487
        %v2489 = vsel %vm1858, %v1812, 0.0
        %2490 = vadd.xlane.f32.xlu0 %v2489
        %v2491 = vpop.xlane.xlu0 %2490
        %v2492 = vsel %vm1858, %v1813, 0.0
        %2493 = vadd.xlane.f32.xlu0 %v2492
        %v2494 = vpop.xlane.xlu0 %2493
        %v2495 = vsel %vm1858, %v1814, 0.0
        %2496 = vadd.xlane.f32.xlu0 %v2495
        %v2497 = vpop.xlane.xlu0 %2496
        %v2498 = vsel %vm1858, %v1815, 0.0
        %2499 = vadd.xlane.f32.xlu0 %v2498
        %v2500 = vpop.xlane.xlu0 %2499
        %v2501 = vsel %vm1858, %v1816, 0.0
        %2502 = vadd.xlane.f32.xlu0 %v2501
        %v2503 = vpop.xlane.xlu0 %2502
        %v2504 = vsel %vm1858, %v1817, 0.0
        %2505 = vadd.xlane.f32.xlu0 %v2504
        %v2506 = vpop.xlane.xlu0 %2505
        %v2507 = vsel %vm1858, %v1818, 0.0
        %2508 = vadd.xlane.f32.xlu0 %v2507
        %v2509 = vpop.xlane.xlu0 %2508
        %v2510 = vsel %vm1858, %v1819, 0.0
        %2511 = vadd.xlane.f32.xlu0 %v2510
        %v2512 = vpop.xlane.xlu0 %2511
        %v2513 = vsel %vm1858, %v1820, 0.0
        %2514 = vadd.xlane.f32.xlu0 %v2513
        %v2515 = vpop.xlane.xlu0 %2514
        %v2516 = vsel %vm1858, %v1821, 0.0
        %2517 = vadd.xlane.f32.xlu0 %v2516
        %v2518 = vpop.xlane.xlu0 %2517
        %v2519 = vsel %vm1858, %v1822, 0.0
        %2520 = vadd.xlane.f32.xlu0 %v2519
        %v2521 = vpop.xlane.xlu0 %2520
        %v2522 = vsel %vm1858, %v1823, 0.0
        %2523 = vadd.xlane.f32.xlu0 %v2522
        %v2524 = vpop.xlane.xlu0 %2523
        %v2525 = vsel %vm1858, %v1824, 0.0
        %2526 = vadd.xlane.f32.xlu0 %v2525
        %v2527 = vpop.xlane.xlu0 %2526
        %v2528 = vsel %vm1858, %v1825, 0.0
        %2529 = vadd.xlane.f32.xlu0 %v2528
        %v2530 = vpop.xlane.xlu0 %2529
        %v2531 = vsel %vm1858, %v1826, 0.0
        %2532 = vadd.xlane.f32.xlu0 %v2531
        %v2533 = vpop.xlane.xlu0 %2532
        %v2534 = vsel %vm1858, %v1827, 0.0
        %2535 = vadd.xlane.f32.xlu0 %v2534
        %v2536 = vpop.xlane.xlu0 %2535
        %v2537 = vsel %vm1858, %v1828, 0.0
        %2538 = vadd.xlane.f32.xlu0 %v2537
        %v2539 = vpop.xlane.xlu0 %2538
        %v2540 = vsel %vm1858, %v1829, 0.0
        %2541 = vadd.xlane.f32.xlu0 %v2540
        %v2542 = vpop.xlane.xlu0 %2541
        %v2543 = vsel %vm1858, %v1830, 0.0
        %2544 = vadd.xlane.f32.xlu0 %v2543
        %v2545 = vpop.xlane.xlu0 %2544
        %v2546 = vsel %vm1858, %v1831, 0.0
        %2547 = vadd.xlane.f32.xlu0 %v2546
        %v2548 = vpop.xlane.xlu0 %2547
        %v2549 = vsel %vm1858, %v1832, 0.0
        %2550 = vadd.xlane.f32.xlu0 %v2549
        %v2551 = vpop.xlane.xlu0 %2550
        %v2552 = vsel %vm1858, %v1833, 0.0
        %2553 = vadd.xlane.f32.xlu0 %v2552
        %v2554 = vpop.xlane.xlu0 %2553
        %v2555 = vsel %vm1858, %v1834, 0.0
        %2556 = vadd.xlane.f32.xlu0 %v2555
        %v2557 = vpop.xlane.xlu0 %2556
        %v2558 = vsel %vm1858, %v1835, 0.0
        %2559 = vadd.xlane.f32.xlu0 %v2558
        %v2560 = vpop.xlane.xlu0 %2559
        %v2561 = vsel %vm1858, %v1836, 0.0
        %2562 = vadd.xlane.f32.xlu0 %v2561
        %v2563 = vpop.xlane.xlu0 %2562
        %v2564 = vsel %vm1858, %v1837, 0.0
        %2565 = vadd.xlane.f32.xlu0 %v2564
        %v2566 = vpop.xlane.xlu0 %2565
        %v2567 = vsel %vm1858, %v1838, 0.0
        %2568 = vadd.xlane.f32.xlu0 %v2567
        %v2569 = vpop.xlane.xlu0 %2568
        %v2570 = vsel %vm1858, %v1839, 0.0
        %2571 = vadd.xlane.f32.xlu0 %v2570
        %v2572 = vpop.xlane.xlu0 %2571
        %v2573 = vsel %vm1858, %v1840, 0.0
        %2574 = vadd.xlane.f32.xlu0 %v2573
        %v2575 = vpop.xlane.xlu0 %2574
        %v2576 = vsel %vm1858, %v1841, 0.0
        %2577 = vadd.xlane.f32.xlu0 %v2576
        %v2578 = vpop.xlane.xlu0 %2577
        %v2579 = vsel %vm1858, %v1842, 0.0
        %2580 = vadd.xlane.f32.xlu0 %v2579
        %v2581 = vpop.xlane.xlu0 %2580
        %v2582 = vsel %vm1858, %v1843, 0.0
        %2583 = vadd.xlane.f32.xlu0 %v2582
        %v2584 = vpop.xlane.xlu0 %2583
        %v2585 = vsel %vm1858, %v1844, 0.0
        %2586 = vadd.xlane.f32.xlu0 %v2585
        %v2587 = vpop.xlane.xlu0 %2586
        %v2588 = vsel %vm1858, %v1845, 0.0
        %2589 = vadd.xlane.f32.xlu0 %v2588
        %v2590 = vpop.xlane.xlu0 %2589
        %v2591 = vsel %vm1858, %v1846, 0.0
        %2592 = vadd.xlane.f32.xlu0 %v2591
        %v2593 = vpop.xlane.xlu0 %2592
        %v2594 = vsel %vm1858, %v1847, 0.0
        %2595 = vadd.xlane.f32.xlu0 %v2594
        %v2596 = vpop.xlane.xlu0 %2595
        %v2597 = vsel %vm1858, %v1848, 0.0
        %2598 = vadd.xlane.f32.xlu0 %v2597
        %v2599 = vpop.xlane.xlu0 %2598
        %v2600 = vsel %vm1858, %v1849, 0.0
        %2601 = vadd.xlane.f32.xlu0 %v2600
        %v2602 = vpop.xlane.xlu0 %2601
        %v2603 = vsel %vm1858, %v1850, 0.0
        %2604 = vadd.xlane.f32.xlu0 %v2603
        %v2605 = vpop.xlane.xlu0 %2604
        %v2606 = vsel %vm1858, %v1851, 0.0
        %2607 = vadd.xlane.f32.xlu0 %v2606
        %v2608 = vpop.xlane.xlu0 %2607
        %v2609 = vsel %vm1858, %v1852, 0.0
        %2610 = vadd.xlane.f32.xlu0 %v2609
        %v2611 = vpop.xlane.xlu0 %2610
        %v2612 = vsel %vm1858, %v1853, 0.0
        %2613 = vadd.xlane.f32.xlu0 %v2612
        %v2614 = vpop.xlane.xlu0 %2613
        %v2615 = vsel %vm1858, %v1854, 0.0
        %2616 = vadd.xlane.f32.xlu0 %v2615
        %v2617 = vpop.xlane.xlu0 %2616
        %v2618 = vsel %vm1858, %v1855, 0.0
        %2619 = vadd.xlane.f32.xlu0 %v2618
        %v2620 = vpop.xlane.xlu0 %2619
        %v2621 = vsel %vm1858, %v1856, 0.0
        %2622 = vadd.xlane.f32.xlu0 %v2621
        %v2623 = vpop.xlane.xlu0 %2622
        %v2624 = vsel %vm1858, %v1857, 0.0
        %2625 = vadd.xlane.f32.xlu0 %v2624
        %v2626 = vpop.xlane.xlu0 %2625
        %s2627 = sld [smem:[#allocation3]]
        %v2628 = vstv %s2627
        %v2629 = vadd.f32 %v1861, %v2628
        %v2630 = vadd.f32 %v1864, %v2628
        %v2631 = vadd.f32 %v1867, %v2628
        %v2632 = vadd.f32 %v1870, %v2628
        %v2633 = vadd.f32 %v1873, %v2628
        %v2634 = vadd.f32 %v1876, %v2628
        %v2635 = vadd.f32 %v1879, %v2628
        %v2636 = vadd.f32 %v1882, %v2628
        %v2637 = vadd.f32 %v1885, %v2628
        %v2638 = vadd.f32 %v1888, %v2628
        %v2639 = vadd.f32 %v1891, %v2628
        %v2640 = vadd.f32 %v1894, %v2628
        %v2641 = vadd.f32 %v1897, %v2628
        %v2642 = vadd.f32 %v1900, %v2628
        %v2643 = vadd.f32 %v1903, %v2628
        %v2644 = vadd.f32 %v1906, %v2628
        %v2645 = vadd.f32 %v1909, %v2628
        %v2646 = vadd.f32 %v1912, %v2628
        %v2647 = vadd.f32 %v1915, %v2628
        %v2648 = vadd.f32 %v1918, %v2628
        %v2649 = vadd.f32 %v1921, %v2628
        %v2650 = vadd.f32 %v1924, %v2628
        %v2651 = vadd.f32 %v1927, %v2628
        %v2652 = vadd.f32 %v1930, %v2628
        %v2653 = vadd.f32 %v1933, %v2628
        %v2654 = vadd.f32 %v1936, %v2628
        %v2655 = vadd.f32 %v1939, %v2628
        %v2656 = vadd.f32 %v1942, %v2628
        %v2657 = vadd.f32 %v1945, %v2628
        %v2658 = vadd.f32 %v1948, %v2628
        %v2659 = vadd.f32 %v1951, %v2628
        %v2660 = vadd.f32 %v1954, %v2628
        %v2661 = vadd.f32 %v1957, %v2628
        %v2662 = vadd.f32 %v1960, %v2628
        %v2663 = vadd.f32 %v1963, %v2628
        %v2664 = vadd.f32 %v1966, %v2628
        %v2665 = vadd.f32 %v1969, %v2628
        %v2666 = vadd.f32 %v1972, %v2628
        %v2667 = vadd.f32 %v1975, %v2628
        %v2668 = vadd.f32 %v1978, %v2628
        %v2669 = vadd.f32 %v1981, %v2628
        %v2670 = vadd.f32 %v1984, %v2628
        %v2671 = vadd.f32 %v1987, %v2628
        %v2672 = vadd.f32 %v1990, %v2628
        %v2673 = vadd.f32 %v1993, %v2628
        %v2674 = vadd.f32 %v1996, %v2628
        %v2675 = vadd.f32 %v1999, %v2628
        %v2676 = vadd.f32 %v2002, %v2628
        %v2677 = vadd.f32 %v2005, %v2628
        %v2678 = vadd.f32 %v2008, %v2628
        %v2679 = vadd.f32 %v2011, %v2628
        %v2680 = vadd.f32 %v2014, %v2628
        %v2681 = vadd.f32 %v2017, %v2628
        %v2682 = vadd.f32 %v2020, %v2628
        %v2683 = vadd.f32 %v2023, %v2628
        %v2684 = vadd.f32 %v2026, %v2628
        %v2685 = vadd.f32 %v2029, %v2628
        %v2686 = vadd.f32 %v2032, %v2628
        %v2687 = vadd.f32 %v2035, %v2628
        %v2688 = vadd.f32 %v2038, %v2628
        %v2689 = vadd.f32 %v2041, %v2628
        %v2690 = vadd.f32 %v2044, %v2628
        %v2691 = vadd.f32 %v2047, %v2628
        %v2692 = vadd.f32 %v2050, %v2628
        %v2693 = vadd.f32 %v2053, %v2628
        %v2694 = vadd.f32 %v2056, %v2628
        %v2695 = vadd.f32 %v2059, %v2628
        %v2696 = vadd.f32 %v2062, %v2628
        %v2697 = vadd.f32 %v2065, %v2628
        %v2698 = vadd.f32 %v2068, %v2628
        %v2699 = vadd.f32 %v2071, %v2628
        %v2700 = vadd.f32 %v2074, %v2628
        %v2701 = vadd.f32 %v2077, %v2628
        %v2702 = vadd.f32 %v2080, %v2628
        %v2703 = vadd.f32 %v2083, %v2628
        %v2704 = vadd.f32 %v2086, %v2628
        %v2705 = vadd.f32 %v2089, %v2628
        %v2706 = vadd.f32 %v2092, %v2628
        %v2707 = vadd.f32 %v2095, %v2628
        %v2708 = vadd.f32 %v2098, %v2628
        %v2709 = vadd.f32 %v2101, %v2628
        %v2710 = vadd.f32 %v2104, %v2628
        %v2711 = vadd.f32 %v2107, %v2628
        %v2712 = vadd.f32 %v2110, %v2628
        %v2713 = vadd.f32 %v2113, %v2628
        %v2714 = vadd.f32 %v2116, %v2628
        %v2715 = vadd.f32 %v2119, %v2628
        %v2716 = vadd.f32 %v2122, %v2628
        %v2717 = vadd.f32 %v2125, %v2628
        %v2718 = vadd.f32 %v2128, %v2628
        %v2719 = vadd.f32 %v2131, %v2628
        %v2720 = vadd.f32 %v2134, %v2628
        %v2721 = vadd.f32 %v2137, %v2628
        %v2722 = vadd.f32 %v2140, %v2628
        %v2723 = vadd.f32 %v2143, %v2628
        %v2724 = vadd.f32 %v2146, %v2628
        %v2725 = vadd.f32 %v2149, %v2628
        %v2726 = vadd.f32 %v2152, %v2628
        %v2727 = vadd.f32 %v2155, %v2628
        %v2728 = vadd.f32 %v2158, %v2628
        %v2729 = vadd.f32 %v2161, %v2628
        %v2730 = vadd.f32 %v2164, %v2628
        %v2731 = vadd.f32 %v2167, %v2628
        %v2732 = vadd.f32 %v2170, %v2628
        %v2733 = vadd.f32 %v2173, %v2628
        %v2734 = vadd.f32 %v2176, %v2628
        %v2735 = vadd.f32 %v2179, %v2628
        %v2736 = vadd.f32 %v2182, %v2628
        %v2737 = vadd.f32 %v2185, %v2628
        %v2738 = vadd.f32 %v2188, %v2628
        %v2739 = vadd.f32 %v2191, %v2628
        %v2740 = vadd.f32 %v2194, %v2628
        %v2741 = vadd.f32 %v2197, %v2628
        %v2742 = vadd.f32 %v2200, %v2628
        %v2743 = vadd.f32 %v2203, %v2628
        %v2744 = vadd.f32 %v2206, %v2628
        %v2745 = vadd.f32 %v2209, %v2628
        %v2746 = vadd.f32 %v2212, %v2628
        %v2747 = vadd.f32 %v2215, %v2628
        %v2748 = vadd.f32 %v2218, %v2628
        %v2749 = vadd.f32 %v2221, %v2628
        %v2750 = vadd.f32 %v2224, %v2628
        %v2751 = vadd.f32 %v2227, %v2628
        %v2752 = vadd.f32 %v2230, %v2628
        %v2753 = vadd.f32 %v2233, %v2628
        %v2754 = vadd.f32 %v2236, %v2628
        %v2755 = vadd.f32 %v2239, %v2628
        %v2756 = vadd.f32 %v2242, %v2628
        %v2757 = vadd.f32 %v2245, %v2628
        %v2758 = vadd.f32 %v2248, %v2628
        %v2759 = vadd.f32 %v2251, %v2628
        %v2760 = vadd.f32 %v2254, %v2628
        %v2761 = vadd.f32 %v2257, %v2628
        %v2762 = vadd.f32 %v2260, %v2628
        %v2763 = vadd.f32 %v2263, %v2628
        %v2764 = vadd.f32 %v2266, %v2628
        %v2765 = vadd.f32 %v2269, %v2628
        %v2766 = vadd.f32 %v2272, %v2628
        %v2767 = vadd.f32 %v2275, %v2628
        %v2768 = vadd.f32 %v2278, %v2628
        %v2769 = vadd.f32 %v2281, %v2628
        %v2770 = vadd.f32 %v2284, %v2628
        %v2771 = vadd.f32 %v2287, %v2628
        %v2772 = vadd.f32 %v2290, %v2628
        %v2773 = vadd.f32 %v2293, %v2628
        %v2774 = vadd.f32 %v2296, %v2628
        %v2775 = vadd.f32 %v2299, %v2628
        %v2776 = vadd.f32 %v2302, %v2628
        %v2777 = vadd.f32 %v2305, %v2628
        %v2778 = vadd.f32 %v2308, %v2628
        %v2779 = vadd.f32 %v2311, %v2628
        %v2780 = vadd.f32 %v2314, %v2628
        %v2781 = vadd.f32 %v2317, %v2628
        %v2782 = vadd.f32 %v2320, %v2628
        %v2783 = vadd.f32 %v2323, %v2628
        %v2784 = vadd.f32 %v2326, %v2628
        %v2785 = vadd.f32 %v2329, %v2628
        %v2786 = vadd.f32 %v2332, %v2628
        %v2787 = vadd.f32 %v2335, %v2628
        %v2788 = vadd.f32 %v2338, %v2628
        %v2789 = vadd.f32 %v2341, %v2628
        %v2790 = vadd.f32 %v2344, %v2628
        %v2791 = vadd.f32 %v2347, %v2628
        %v2792 = vadd.f32 %v2350, %v2628
        %v2793 = vadd.f32 %v2353, %v2628
        %v2794 = vadd.f32 %v2356, %v2628
        %v2795 = vadd.f32 %v2359, %v2628
        %v2796 = vadd.f32 %v2362, %v2628
        %v2797 = vadd.f32 %v2365, %v2628
        %v2798 = vadd.f32 %v2368, %v2628
        %v2799 = vadd.f32 %v2371, %v2628
        %v2800 = vadd.f32 %v2374, %v2628
        %v2801 = vadd.f32 %v2377, %v2628
        %v2802 = vadd.f32 %v2380, %v2628
        %v2803 = vadd.f32 %v2383, %v2628
        %v2804 = vadd.f32 %v2386, %v2628
        %v2805 = vadd.f32 %v2389, %v2628
        %v2806 = vadd.f32 %v2392, %v2628
        %v2807 = vadd.f32 %v2395, %v2628
        %v2808 = vadd.f32 %v2398, %v2628
        %v2809 = vadd.f32 %v2401, %v2628
        %v2810 = vadd.f32 %v2404, %v2628
        %v2811 = vadd.f32 %v2407, %v2628
        %v2812 = vadd.f32 %v2410, %v2628
        %v2813 = vadd.f32 %v2413, %v2628
        %v2814 = vadd.f32 %v2416, %v2628
        %v2815 = vadd.f32 %v2419, %v2628
        %v2816 = vadd.f32 %v2422, %v2628
        %v2817 = vadd.f32 %v2425, %v2628
        %v2818 = vadd.f32 %v2428, %v2628
        %v2819 = vadd.f32 %v2431, %v2628
        %v2820 = vadd.f32 %v2434, %v2628
        %v2821 = vadd.f32 %v2437, %v2628
        %v2822 = vadd.f32 %v2440, %v2628
        %v2823 = vadd.f32 %v2443, %v2628
        %v2824 = vadd.f32 %v2446, %v2628
        %v2825 = vadd.f32 %v2449, %v2628
        %v2826 = vadd.f32 %v2452, %v2628
        %v2827 = vadd.f32 %v2455, %v2628
        %v2828 = vadd.f32 %v2458, %v2628
        %v2829 = vadd.f32 %v2461, %v2628
        %v2830 = vadd.f32 %v2464, %v2628
        %v2831 = vadd.f32 %v2467, %v2628
        %v2832 = vadd.f32 %v2470, %v2628
        %v2833 = vadd.f32 %v2473, %v2628
        %v2834 = vadd.f32 %v2476, %v2628
        %v2835 = vadd.f32 %v2479, %v2628
        %v2836 = vadd.f32 %v2482, %v2628
        %v2837 = vadd.f32 %v2485, %v2628
        %v2838 = vadd.f32 %v2488, %v2628
        %v2839 = vadd.f32 %v2491, %v2628
        %v2840 = vadd.f32 %v2494, %v2628
        %v2841 = vadd.f32 %v2497, %v2628
        %v2842 = vadd.f32 %v2500, %v2628
        %v2843 = vadd.f32 %v2503, %v2628
        %v2844 = vadd.f32 %v2506, %v2628
        %v2845 = vadd.f32 %v2509, %v2628
        %v2846 = vadd.f32 %v2512, %v2628
        %v2847 = vadd.f32 %v2515, %v2628
        %v2848 = vadd.f32 %v2518, %v2628
        %v2849 = vadd.f32 %v2521, %v2628
        %v2850 = vadd.f32 %v2524, %v2628
        %v2851 = vadd.f32 %v2527, %v2628
        %v2852 = vadd.f32 %v2530, %v2628
        %v2853 = vadd.f32 %v2533, %v2628
        %v2854 = vadd.f32 %v2536, %v2628
        %v2855 = vadd.f32 %v2539, %v2628
        %v2856 = vadd.f32 %v2542, %v2628
        %v2857 = vadd.f32 %v2545, %v2628
        %v2858 = vadd.f32 %v2548, %v2628
        %v2859 = vadd.f32 %v2551, %v2628
        %v2860 = vadd.f32 %v2554, %v2628
        %v2861 = vadd.f32 %v2557, %v2628
        %v2862 = vadd.f32 %v2560, %v2628
        %v2863 = vadd.f32 %v2563, %v2628
        %v2864 = vadd.f32 %v2566, %v2628
        %v2865 = vadd.f32 %v2569, %v2628
        %v2866 = vadd.f32 %v2572, %v2628
        %v2867 = vadd.f32 %v2575, %v2628
        %v2868 = vadd.f32 %v2578, %v2628
        %v2869 = vadd.f32 %v2581, %v2628
        %v2870 = vadd.f32 %v2584, %v2628
        %v2871 = vadd.f32 %v2587, %v2628
        %v2872 = vadd.f32 %v2590, %v2628
        %v2873 = vadd.f32 %v2593, %v2628
        %v2874 = vadd.f32 %v2596, %v2628
        %v2875 = vadd.f32 %v2599, %v2628
        %v2876 = vadd.f32 %v2602, %v2628
        %v2877 = vadd.f32 %v2605, %v2628
        %v2878 = vadd.f32 %v2608, %v2628
        %v2879 = vadd.f32 %v2611, %v2628
        %v2880 = vadd.f32 %v2614, %v2628
        %v2881 = vadd.f32 %v2617, %v2628
        %v2882 = vadd.f32 %v2620, %v2628
        %v2883 = vadd.f32 %v2623, %v2628
        %v2884 = vadd.f32 %v2626, %v2628
        %v2885 = vld [vmem:[%s452] sm:$0xff]
        %v2886 = vld [vmem:[%s452 + $0x8] sm:$0xff]
        %v2889 = vlaneseq
        %v2890 = vshrl.u32 %v2889, 7
        %v2891 = vsub.s32 0, %v2890
        %v2892 = vrot.slane %v2885, %v2891
        %2894 = vbcast.lane.b32.xlu0 %v2892, 256
        %v2895 = vpop.permute.xlu0 %2894
        %s2897 = sor.u32 256, 8
        %2898 = vbcast.lane.b32.xlu0 %v2892, %s2897
        %v2899 = vpop.permute.xlu0 %2898
        %s2901 = sor.u32 256, 16
        %2902 = vbcast.lane.b32.xlu0 %v2892, %s2901
        %v2903 = vpop.permute.xlu0 %2902
        %s2905 = sor.u32 256, 24
        %2906 = vbcast.lane.b32.xlu0 %v2892, %s2905
        %v2907 = vpop.permute.xlu0 %2906
        %s2909 = sor.u32 256, 32
        %2910 = vbcast.lane.b32.xlu0 %v2892, %s2909
        %v2911 = vpop.permute.xlu0 %2910
        %s2913 = sor.u32 256, 40
        %2914 = vbcast.lane.b32.xlu0 %v2892, %s2913
        %v2915 = vpop.permute.xlu0 %2914
        %s2917 = sor.u32 256, 48
        %2918 = vbcast.lane.b32.xlu0 %v2892, %s2917
        %v2919 = vpop.permute.xlu0 %2918
        %s2921 = sor.u32 256, 56
        %2922 = vbcast.lane.b32.xlu0 %v2892, %s2921
        %v2923 = vpop.permute.xlu0 %2922
        %s2925 = sor.u32 256, 64
        %2926 = vbcast.lane.b32.xlu0 %v2892, %s2925
        %v2927 = vpop.permute.xlu0 %2926
        %s2929 = sor.u32 256, 72
        %2930 = vbcast.lane.b32.xlu0 %v2892, %s2929
        %v2931 = vpop.permute.xlu0 %2930
        %s2933 = sor.u32 256, 80
        %2934 = vbcast.lane.b32.xlu0 %v2892, %s2933
        %v2935 = vpop.permute.xlu0 %2934
        %s2937 = sor.u32 256, 88
        %2938 = vbcast.lane.b32.xlu0 %v2892, %s2937
        %v2939 = vpop.permute.xlu0 %2938
        %s2941 = sor.u32 256, 96
        %2942 = vbcast.lane.b32.xlu0 %v2892, %s2941
        %v2943 = vpop.permute.xlu0 %2942
        %s2945 = sor.u32 256, 104
        %2946 = vbcast.lane.b32.xlu0 %v2892, %s2945
        %v2947 = vpop.permute.xlu0 %2946
        %s2949 = sor.u32 256, 112
        %2950 = vbcast.lane.b32.xlu0 %v2892, %s2949
        %v2951 = vpop.permute.xlu0 %2950
        %s2953 = sor.u32 256, 120
        %2954 = vbcast.lane.b32.xlu0 %v2892, %s2953
        %v2955 = vpop.permute.xlu0 %2954
        %v2956 = vlaneseq
        %v2957 = vshrl.u32 %v2956, 7
        %v2958 = vsub.s32 1, %v2957
        %v2959 = vrot.slane %v2885, %v2958
        %2961 = vbcast.lane.b32.xlu0 %v2959, 256
        %v2962 = vpop.permute.xlu0 %2961
        %s2964 = sor.u32 256, 8
        %2965 = vbcast.lane.b32.xlu0 %v2959, %s2964
        %v2966 = vpop.permute.xlu0 %2965
        %s2968 = sor.u32 256, 16
        %2969 = vbcast.lane.b32.xlu0 %v2959, %s2968
        %v2970 = vpop.permute.xlu0 %2969
        %s2972 = sor.u32 256, 24
        %2973 = vbcast.lane.b32.xlu0 %v2959, %s2972
        %v2974 = vpop.permute.xlu0 %2973
        %s2976 = sor.u32 256, 32
        %2977 = vbcast.lane.b32.xlu0 %v2959, %s2976
        %v2978 = vpop.permute.xlu0 %2977
        %s2980 = sor.u32 256, 40
        %2981 = vbcast.lane.b32.xlu0 %v2959, %s2980
        %v2982 = vpop.permute.xlu0 %2981
        %s2984 = sor.u32 256, 48
        %2985 = vbcast.lane.b32.xlu0 %v2959, %s2984
        %v2986 = vpop.permute.xlu0 %2985
        %s2988 = sor.u32 256, 56
        %2989 = vbcast.lane.b32.xlu0 %v2959, %s2988
        %v2990 = vpop.permute.xlu0 %2989
        %s2992 = sor.u32 256, 64
        %2993 = vbcast.lane.b32.xlu0 %v2959, %s2992
        %v2994 = vpop.permute.xlu0 %2993
        %s2996 = sor.u32 256, 72
        %2997 = vbcast.lane.b32.xlu0 %v2959, %s2996
        %v2998 = vpop.permute.xlu0 %2997
        %s3000 = sor.u32 256, 80
        %3001 = vbcast.lane.b32.xlu0 %v2959, %s3000
        %v3002 = vpop.permute.xlu0 %3001
        %s3004 = sor.u32 256, 88
        %3005 = vbcast.lane.b32.xlu0 %v2959, %s3004
        %v3006 = vpop.permute.xlu0 %3005
        %s3008 = sor.u32 256, 96
        %3009 = vbcast.lane.b32.xlu0 %v2959, %s3008
        %v3010 = vpop.permute.xlu0 %3009
        %s3012 = sor.u32 256, 104
        %3013 = vbcast.lane.b32.xlu0 %v2959, %s3012
        %v3014 = vpop.permute.xlu0 %3013
        %s3016 = sor.u32 256, 112
        %3017 = vbcast.lane.b32.xlu0 %v2959, %s3016
        %v3018 = vpop.permute.xlu0 %3017
        %s3020 = sor.u32 256, 120
        %3021 = vbcast.lane.b32.xlu0 %v2959, %s3020
        %v3022 = vpop.permute.xlu0 %3021
        %v3023 = vlaneseq
        %v3024 = vshrl.u32 %v3023, 7
        %v3025 = vsub.s32 2, %v3024
        %v3026 = vrot.slane %v2885, %v3025
        %3028 = vbcast.lane.b32.xlu0 %v3026, 256
        %v3029 = vpop.permute.xlu0 %3028
        %s3031 = sor.u32 256, 8
        %3032 = vbcast.lane.b32.xlu0 %v3026, %s3031
        %v3033 = vpop.permute.xlu0 %3032
        %s3035 = sor.u32 256, 16
        %3036 = vbcast.lane.b32.xlu0 %v3026, %s3035
        %v3037 = vpop.permute.xlu0 %3036
        %s3039 = sor.u32 256, 24
        %3040 = vbcast.lane.b32.xlu0 %v3026, %s3039
        %v3041 = vpop.permute.xlu0 %3040
        %s3043 = sor.u32 256, 32
        %3044 = vbcast.lane.b32.xlu0 %v3026, %s3043
        %v3045 = vpop.permute.xlu0 %3044
        %s3047 = sor.u32 256, 40
        %3048 = vbcast.lane.b32.xlu0 %v3026, %s3047
        %v3049 = vpop.permute.xlu0 %3048
        %s3051 = sor.u32 256, 48
        %3052 = vbcast.lane.b32.xlu0 %v3026, %s3051
        %v3053 = vpop.permute.xlu0 %3052
        %s3055 = sor.u32 256, 56
        %3056 = vbcast.lane.b32.xlu0 %v3026, %s3055
        %v3057 = vpop.permute.xlu0 %3056
        %s3059 = sor.u32 256, 64
        %3060 = vbcast.lane.b32.xlu0 %v3026, %s3059
        %v3061 = vpop.permute.xlu0 %3060
        %s3063 = sor.u32 256, 72
        %3064 = vbcast.lane.b32.xlu0 %v3026, %s3063
        %v3065 = vpop.permute.xlu0 %3064
        %s3067 = sor.u32 256, 80
        %3068 = vbcast.lane.b32.xlu0 %v3026, %s3067
        %v3069 = vpop.permute.xlu0 %3068
        %s3071 = sor.u32 256, 88
        %3072 = vbcast.lane.b32.xlu0 %v3026, %s3071
        %v3073 = vpop.permute.xlu0 %3072
        %s3075 = sor.u32 256, 96
        %3076 = vbcast.lane.b32.xlu0 %v3026, %s3075
        %v3077 = vpop.permute.xlu0 %3076
        %s3079 = sor.u32 256, 104
        %3080 = vbcast.lane.b32.xlu0 %v3026, %s3079
        %v3081 = vpop.permute.xlu0 %3080
        %s3083 = sor.u32 256, 112
        %3084 = vbcast.lane.b32.xlu0 %v3026, %s3083
        %v3085 = vpop.permute.xlu0 %3084
        %s3087 = sor.u32 256, 120
        %3088 = vbcast.lane.b32.xlu0 %v3026, %s3087
        %v3089 = vpop.permute.xlu0 %3088
        %v3090 = vlaneseq
        %v3091 = vshrl.u32 %v3090, 7
        %v3092 = vsub.s32 3, %v3091
        %v3093 = vrot.slane %v2885, %v3092
        %3095 = vbcast.lane.b32.xlu0 %v3093, 256
        %v3096 = vpop.permute.xlu0 %3095
        %s3098 = sor.u32 256, 8
        %3099 = vbcast.lane.b32.xlu0 %v3093, %s3098
        %v3100 = vpop.permute.xlu0 %3099
        %s3102 = sor.u32 256, 16
        %3103 = vbcast.lane.b32.xlu0 %v3093, %s3102
        %v3104 = vpop.permute.xlu0 %3103
        %s3106 = sor.u32 256, 24
        %3107 = vbcast.lane.b32.xlu0 %v3093, %s3106
        %v3108 = vpop.permute.xlu0 %3107
        %s3110 = sor.u32 256, 32
        %3111 = vbcast.lane.b32.xlu0 %v3093, %s3110
        %v3112 = vpop.permute.xlu0 %3111
        %s3114 = sor.u32 256, 40
        %3115 = vbcast.lane.b32.xlu0 %v3093, %s3114
        %v3116 = vpop.permute.xlu0 %3115
        %s3118 = sor.u32 256, 48
        %3119 = vbcast.lane.b32.xlu0 %v3093, %s3118
        %v3120 = vpop.permute.xlu0 %3119
        %s3122 = sor.u32 256, 56
        %3123 = vbcast.lane.b32.xlu0 %v3093, %s3122
        %v3124 = vpop.permute.xlu0 %3123
        %s3126 = sor.u32 256, 64
        %3127 = vbcast.lane.b32.xlu0 %v3093, %s3126
        %v3128 = vpop.permute.xlu0 %3127
        %s3130 = sor.u32 256, 72
        %3131 = vbcast.lane.b32.xlu0 %v3093, %s3130
        %v3132 = vpop.permute.xlu0 %3131
        %s3134 = sor.u32 256, 80
        %3135 = vbcast.lane.b32.xlu0 %v3093, %s3134
        %v3136 = vpop.permute.xlu0 %3135
        %s3138 = sor.u32 256, 88
        %3139 = vbcast.lane.b32.xlu0 %v3093, %s3138
        %v3140 = vpop.permute.xlu0 %3139
        %s3142 = sor.u32 256, 96
        %3143 = vbcast.lane.b32.xlu0 %v3093, %s3142
        %v3144 = vpop.permute.xlu0 %3143
        %s3146 = sor.u32 256, 104
        %3147 = vbcast.lane.b32.xlu0 %v3093, %s3146
        %v3148 = vpop.permute.xlu0 %3147
        %s3150 = sor.u32 256, 112
        %3151 = vbcast.lane.b32.xlu0 %v3093, %s3150
        %v3152 = vpop.permute.xlu0 %3151
        %s3154 = sor.u32 256, 120
        %3155 = vbcast.lane.b32.xlu0 %v3093, %s3154
        %v3156 = vpop.permute.xlu0 %3155
        %v3157 = vlaneseq
        %v3158 = vshrl.u32 %v3157, 7
        %v3159 = vsub.s32 4, %v3158
        %v3160 = vrot.slane %v2885, %v3159
        %3162 = vbcast.lane.b32.xlu0 %v3160, 256
        %v3163 = vpop.permute.xlu0 %3162
        %s3165 = sor.u32 256, 8
        %3166 = vbcast.lane.b32.xlu0 %v3160, %s3165
        %v3167 = vpop.permute.xlu0 %3166
        %s3169 = sor.u32 256, 16
        %3170 = vbcast.lane.b32.xlu0 %v3160, %s3169
        %v3171 = vpop.permute.xlu0 %3170
        %s3173 = sor.u32 256, 24
        %3174 = vbcast.lane.b32.xlu0 %v3160, %s3173
        %v3175 = vpop.permute.xlu0 %3174
        %s3177 = sor.u32 256, 32
        %3178 = vbcast.lane.b32.xlu0 %v3160, %s3177
        %v3179 = vpop.permute.xlu0 %3178
        %s3181 = sor.u32 256, 40
        %3182 = vbcast.lane.b32.xlu0 %v3160, %s3181
        %v3183 = vpop.permute.xlu0 %3182
        %s3185 = sor.u32 256, 48
        %3186 = vbcast.lane.b32.xlu0 %v3160, %s3185
        %v3187 = vpop.permute.xlu0 %3186
        %s3189 = sor.u32 256, 56
        %3190 = vbcast.lane.b32.xlu0 %v3160, %s3189
        %v3191 = vpop.permute.xlu0 %3190
        %s3193 = sor.u32 256, 64
        %3194 = vbcast.lane.b32.xlu0 %v3160, %s3193
        %v3195 = vpop.permute.xlu0 %3194
        %s3197 = sor.u32 256, 72
        %3198 = vbcast.lane.b32.xlu0 %v3160, %s3197
        %v3199 = vpop.permute.xlu0 %3198
        %s3201 = sor.u32 256, 80
        %3202 = vbcast.lane.b32.xlu0 %v3160, %s3201
        %v3203 = vpop.permute.xlu0 %3202
        %s3205 = sor.u32 256, 88
        %3206 = vbcast.lane.b32.xlu0 %v3160, %s3205
        %v3207 = vpop.permute.xlu0 %3206
        %s3209 = sor.u32 256, 96
        %3210 = vbcast.lane.b32.xlu0 %v3160, %s3209
        %v3211 = vpop.permute.xlu0 %3210
        %s3213 = sor.u32 256, 104
        %3214 = vbcast.lane.b32.xlu0 %v3160, %s3213
        %v3215 = vpop.permute.xlu0 %3214
        %s3217 = sor.u32 256, 112
        %3218 = vbcast.lane.b32.xlu0 %v3160, %s3217
        %v3219 = vpop.permute.xlu0 %3218
        %s3221 = sor.u32 256, 120
        %3222 = vbcast.lane.b32.xlu0 %v3160, %s3221
        %v3223 = vpop.permute.xlu0 %3222
        %v3224 = vlaneseq
        %v3225 = vshrl.u32 %v3224, 7
        %v3226 = vsub.s32 5, %v3225
        %v3227 = vrot.slane %v2885, %v3226
        %3229 = vbcast.lane.b32.xlu0 %v3227, 256
        %v3230 = vpop.permute.xlu0 %3229
        %s3232 = sor.u32 256, 8
        %3233 = vbcast.lane.b32.xlu0 %v3227, %s3232
        %v3234 = vpop.permute.xlu0 %3233
        %s3236 = sor.u32 256, 16
        %3237 = vbcast.lane.b32.xlu0 %v3227, %s3236
        %v3238 = vpop.permute.xlu0 %3237
        %s3240 = sor.u32 256, 24
        %3241 = vbcast.lane.b32.xlu0 %v3227, %s3240
        %v3242 = vpop.permute.xlu0 %3241
        %s3244 = sor.u32 256, 32
        %3245 = vbcast.lane.b32.xlu0 %v3227, %s3244
        %v3246 = vpop.permute.xlu0 %3245
        %s3248 = sor.u32 256, 40
        %3249 = vbcast.lane.b32.xlu0 %v3227, %s3248
        %v3250 = vpop.permute.xlu0 %3249
        %s3252 = sor.u32 256, 48
        %3253 = vbcast.lane.b32.xlu0 %v3227, %s3252
        %v3254 = vpop.permute.xlu0 %3253
        %s3256 = sor.u32 256, 56
        %3257 = vbcast.lane.b32.xlu0 %v3227, %s3256
        %v3258 = vpop.permute.xlu0 %3257
        %s3260 = sor.u32 256, 64
        %3261 = vbcast.lane.b32.xlu0 %v3227, %s3260
        %v3262 = vpop.permute.xlu0 %3261
        %s3264 = sor.u32 256, 72
        %3265 = vbcast.lane.b32.xlu0 %v3227, %s3264
        %v3266 = vpop.permute.xlu0 %3265
        %s3268 = sor.u32 256, 80
        %3269 = vbcast.lane.b32.xlu0 %v3227, %s3268
        %v3270 = vpop.permute.xlu0 %3269
        %s3272 = sor.u32 256, 88
        %3273 = vbcast.lane.b32.xlu0 %v3227, %s3272
        %v3274 = vpop.permute.xlu0 %3273
        %s3276 = sor.u32 256, 96
        %3277 = vbcast.lane.b32.xlu0 %v3227, %s3276
        %v3278 = vpop.permute.xlu0 %3277
        %s3280 = sor.u32 256, 104
        %3281 = vbcast.lane.b32.xlu0 %v3227, %s3280
        %v3282 = vpop.permute.xlu0 %3281
        %s3284 = sor.u32 256, 112
        %3285 = vbcast.lane.b32.xlu0 %v3227, %s3284
        %v3286 = vpop.permute.xlu0 %3285
        %s3288 = sor.u32 256, 120
        %3289 = vbcast.lane.b32.xlu0 %v3227, %s3288
        %v3290 = vpop.permute.xlu0 %3289
        %v3291 = vlaneseq
        %v3292 = vshrl.u32 %v3291, 7
        %v3293 = vsub.s32 6, %v3292
        %v3294 = vrot.slane %v2885, %v3293
        %3296 = vbcast.lane.b32.xlu0 %v3294, 256
        %v3297 = vpop.permute.xlu0 %3296
        %s3299 = sor.u32 256, 8
        %3300 = vbcast.lane.b32.xlu0 %v3294, %s3299
        %v3301 = vpop.permute.xlu0 %3300
        %s3303 = sor.u32 256, 16
        %3304 = vbcast.lane.b32.xlu0 %v3294, %s3303
        %v3305 = vpop.permute.xlu0 %3304
        %s3307 = sor.u32 256, 24
        %3308 = vbcast.lane.b32.xlu0 %v3294, %s3307
        %v3309 = vpop.permute.xlu0 %3308
        %s3311 = sor.u32 256, 32
        %3312 = vbcast.lane.b32.xlu0 %v3294, %s3311
        %v3313 = vpop.permute.xlu0 %3312
        %s3315 = sor.u32 256, 40
        %3316 = vbcast.lane.b32.xlu0 %v3294, %s3315
        %v3317 = vpop.permute.xlu0 %3316
        %s3319 = sor.u32 256, 48
        %3320 = vbcast.lane.b32.xlu0 %v3294, %s3319
        %v3321 = vpop.permute.xlu0 %3320
        %s3323 = sor.u32 256, 56
        %3324 = vbcast.lane.b32.xlu0 %v3294, %s3323
        %v3325 = vpop.permute.xlu0 %3324
        %s3327 = sor.u32 256, 64
        %3328 = vbcast.lane.b32.xlu0 %v3294, %s3327
        %v3329 = vpop.permute.xlu0 %3328
        %s3331 = sor.u32 256, 72
        %3332 = vbcast.lane.b32.xlu0 %v3294, %s3331
        %v3333 = vpop.permute.xlu0 %3332
        %s3335 = sor.u32 256, 80
        %3336 = vbcast.lane.b32.xlu0 %v3294, %s3335
        %v3337 = vpop.permute.xlu0 %3336
        %s3339 = sor.u32 256, 88
        %3340 = vbcast.lane.b32.xlu0 %v3294, %s3339
        %v3341 = vpop.permute.xlu0 %3340
        %s3343 = sor.u32 256, 96
        %3344 = vbcast.lane.b32.xlu0 %v3294, %s3343
        %v3345 = vpop.permute.xlu0 %3344
        %s3347 = sor.u32 256, 104
        %3348 = vbcast.lane.b32.xlu0 %v3294, %s3347
        %v3349 = vpop.permute.xlu0 %3348
        %s3351 = sor.u32 256, 112
        %3352 = vbcast.lane.b32.xlu0 %v3294, %s3351
        %v3353 = vpop.permute.xlu0 %3352
        %s3355 = sor.u32 256, 120
        %3356 = vbcast.lane.b32.xlu0 %v3294, %s3355
        %v3357 = vpop.permute.xlu0 %3356
        %v3358 = vlaneseq
        %v3359 = vshrl.u32 %v3358, 7
        %v3360 = vsub.s32 7, %v3359
        %v3361 = vrot.slane %v2885, %v3360
        %3363 = vbcast.lane.b32.xlu0 %v3361, 256
        %v3364 = vpop.permute.xlu0 %3363
        %s3366 = sor.u32 256, 8
        %3367 = vbcast.lane.b32.xlu0 %v3361, %s3366
        %v3368 = vpop.permute.xlu0 %3367
        %s3370 = sor.u32 256, 16
        %3371 = vbcast.lane.b32.xlu0 %v3361, %s3370
        %v3372 = vpop.permute.xlu0 %3371
        %s3374 = sor.u32 256, 24
        %3375 = vbcast.lane.b32.xlu0 %v3361, %s3374
        %v3376 = vpop.permute.xlu0 %3375
        %s3378 = sor.u32 256, 32
        %3379 = vbcast.lane.b32.xlu0 %v3361, %s3378
        %v3380 = vpop.permute.xlu0 %3379
        %s3382 = sor.u32 256, 40
        %3383 = vbcast.lane.b32.xlu0 %v3361, %s3382
        %v3384 = vpop.permute.xlu0 %3383
        %s3386 = sor.u32 256, 48
        %3387 = vbcast.lane.b32.xlu0 %v3361, %s3386
        %v3388 = vpop.permute.xlu0 %3387
        %s3390 = sor.u32 256, 56
        %3391 = vbcast.lane.b32.xlu0 %v3361, %s3390
        %v3392 = vpop.permute.xlu0 %3391
        %s3394 = sor.u32 256, 64
        %3395 = vbcast.lane.b32.xlu0 %v3361, %s3394
        %v3396 = vpop.permute.xlu0 %3395
        %s3398 = sor.u32 256, 72
        %3399 = vbcast.lane.b32.xlu0 %v3361, %s3398
        %v3400 = vpop.permute.xlu0 %3399
        %s3402 = sor.u32 256, 80
        %3403 = vbcast.lane.b32.xlu0 %v3361, %s3402
        %v3404 = vpop.permute.xlu0 %3403
        %s3406 = sor.u32 256, 88
        %3407 = vbcast.lane.b32.xlu0 %v3361, %s3406
        %v3408 = vpop.permute.xlu0 %3407
        %s3410 = sor.u32 256, 96
        %3411 = vbcast.lane.b32.xlu0 %v3361, %s3410
        %v3412 = vpop.permute.xlu0 %3411
        %s3414 = sor.u32 256, 104
        %3415 = vbcast.lane.b32.xlu0 %v3361, %s3414
        %v3416 = vpop.permute.xlu0 %3415
        %s3418 = sor.u32 256, 112
        %3419 = vbcast.lane.b32.xlu0 %v3361, %s3418
        %v3420 = vpop.permute.xlu0 %3419
        %s3422 = sor.u32 256, 120
        %3423 = vbcast.lane.b32.xlu0 %v3361, %s3422
        %v3424 = vpop.permute.xlu0 %3423
        %v3425 = vlaneseq
        %v3426 = vshrl.u32 %v3425, 7
        %v3427 = vsub.s32 0, %v3426
        %v3428 = vrot.slane %v2886, %v3427
        %3430 = vbcast.lane.b32.xlu0 %v3428, 256
        %v3431 = vpop.permute.xlu0 %3430
        %s3433 = sor.u32 256, 8
        %3434 = vbcast.lane.b32.xlu0 %v3428, %s3433
        %v3435 = vpop.permute.xlu0 %3434
        %s3437 = sor.u32 256, 16
        %3438 = vbcast.lane.b32.xlu0 %v3428, %s3437
        %v3439 = vpop.permute.xlu0 %3438
        %s3441 = sor.u32 256, 24
        %3442 = vbcast.lane.b32.xlu0 %v3428, %s3441
        %v3443 = vpop.permute.xlu0 %3442
        %s3445 = sor.u32 256, 32
        %3446 = vbcast.lane.b32.xlu0 %v3428, %s3445
        %v3447 = vpop.permute.xlu0 %3446
        %s3449 = sor.u32 256, 40
        %3450 = vbcast.lane.b32.xlu0 %v3428, %s3449
        %v3451 = vpop.permute.xlu0 %3450
        %s3453 = sor.u32 256, 48
        %3454 = vbcast.lane.b32.xlu0 %v3428, %s3453
        %v3455 = vpop.permute.xlu0 %3454
        %s3457 = sor.u32 256, 56
        %3458 = vbcast.lane.b32.xlu0 %v3428, %s3457
        %v3459 = vpop.permute.xlu0 %3458
        %s3461 = sor.u32 256, 64
        %3462 = vbcast.lane.b32.xlu0 %v3428, %s3461
        %v3463 = vpop.permute.xlu0 %3462
        %s3465 = sor.u32 256, 72
        %3466 = vbcast.lane.b32.xlu0 %v3428, %s3465
        %v3467 = vpop.permute.xlu0 %3466
        %s3469 = sor.u32 256, 80
        %3470 = vbcast.lane.b32.xlu0 %v3428, %s3469
        %v3471 = vpop.permute.xlu0 %3470
        %s3473 = sor.u32 256, 88
        %3474 = vbcast.lane.b32.xlu0 %v3428, %s3473
        %v3475 = vpop.permute.xlu0 %3474
        %s3477 = sor.u32 256, 96
        %3478 = vbcast.lane.b32.xlu0 %v3428, %s3477
        %v3479 = vpop.permute.xlu0 %3478
        %s3481 = sor.u32 256, 104
        %3482 = vbcast.lane.b32.xlu0 %v3428, %s3481
        %v3483 = vpop.permute.xlu0 %3482
        %s3485 = sor.u32 256, 112
        %3486 = vbcast.lane.b32.xlu0 %v3428, %s3485
        %v3487 = vpop.permute.xlu0 %3486
        %s3489 = sor.u32 256, 120
        %3490 = vbcast.lane.b32.xlu0 %v3428, %s3489
        %v3491 = vpop.permute.xlu0 %3490
        %v3492 = vlaneseq
        %v3493 = vshrl.u32 %v3492, 7
        %v3494 = vsub.s32 1, %v3493
        %v3495 = vrot.slane %v2886, %v3494
        %3497 = vbcast.lane.b32.xlu0 %v3495, 256
        %v3498 = vpop.permute.xlu0 %3497
        %s3500 = sor.u32 256, 8
        %3501 = vbcast.lane.b32.xlu0 %v3495, %s3500
        %v3502 = vpop.permute.xlu0 %3501
        %s3504 = sor.u32 256, 16
        %3505 = vbcast.lane.b32.xlu0 %v3495, %s3504
        %v3506 = vpop.permute.xlu0 %3505
        %s3508 = sor.u32 256, 24
        %3509 = vbcast.lane.b32.xlu0 %v3495, %s3508
        %v3510 = vpop.permute.xlu0 %3509
        %s3512 = sor.u32 256, 32
        %3513 = vbcast.lane.b32.xlu0 %v3495, %s3512
        %v3514 = vpop.permute.xlu0 %3513
        %s3516 = sor.u32 256, 40
        %3517 = vbcast.lane.b32.xlu0 %v3495, %s3516
        %v3518 = vpop.permute.xlu0 %3517
        %s3520 = sor.u32 256, 48
        %3521 = vbcast.lane.b32.xlu0 %v3495, %s3520
        %v3522 = vpop.permute.xlu0 %3521
        %s3524 = sor.u32 256, 56
        %3525 = vbcast.lane.b32.xlu0 %v3495, %s3524
        %v3526 = vpop.permute.xlu0 %3525
        %s3528 = sor.u32 256, 64
        %3529 = vbcast.lane.b32.xlu0 %v3495, %s3528
        %v3530 = vpop.permute.xlu0 %3529
        %s3532 = sor.u32 256, 72
        %3533 = vbcast.lane.b32.xlu0 %v3495, %s3532
        %v3534 = vpop.permute.xlu0 %3533
        %s3536 = sor.u32 256, 80
        %3537 = vbcast.lane.b32.xlu0 %v3495, %s3536
        %v3538 = vpop.permute.xlu0 %3537
        %s3540 = sor.u32 256, 88
        %3541 = vbcast.lane.b32.xlu0 %v3495, %s3540
        %v3542 = vpop.permute.xlu0 %3541
        %s3544 = sor.u32 256, 96
        %3545 = vbcast.lane.b32.xlu0 %v3495, %s3544
        %v3546 = vpop.permute.xlu0 %3545
        %s3548 = sor.u32 256, 104
        %3549 = vbcast.lane.b32.xlu0 %v3495, %s3548
        %v3550 = vpop.permute.xlu0 %3549
        %s3552 = sor.u32 256, 112
        %3553 = vbcast.lane.b32.xlu0 %v3495, %s3552
        %v3554 = vpop.permute.xlu0 %3553
        %s3556 = sor.u32 256, 120
        %3557 = vbcast.lane.b32.xlu0 %v3495, %s3556
        %v3558 = vpop.permute.xlu0 %3557
        %v3559 = vlaneseq
        %v3560 = vshrl.u32 %v3559, 7
        %v3561 = vsub.s32 2, %v3560
        %v3562 = vrot.slane %v2886, %v3561
        %3564 = vbcast.lane.b32.xlu0 %v3562, 256
        %v3565 = vpop.permute.xlu0 %3564
        %s3567 = sor.u32 256, 8
        %3568 = vbcast.lane.b32.xlu0 %v3562, %s3567
        %v3569 = vpop.permute.xlu0 %3568
        %s3571 = sor.u32 256, 16
        %3572 = vbcast.lane.b32.xlu0 %v3562, %s3571
        %v3573 = vpop.permute.xlu0 %3572
        %s3575 = sor.u32 256, 24
        %3576 = vbcast.lane.b32.xlu0 %v3562, %s3575
        %v3577 = vpop.permute.xlu0 %3576
        %s3579 = sor.u32 256, 32
        %3580 = vbcast.lane.b32.xlu0 %v3562, %s3579
        %v3581 = vpop.permute.xlu0 %3580
        %s3583 = sor.u32 256, 40
        %3584 = vbcast.lane.b32.xlu0 %v3562, %s3583
        %v3585 = vpop.permute.xlu0 %3584
        %s3587 = sor.u32 256, 48
        %3588 = vbcast.lane.b32.xlu0 %v3562, %s3587
        %v3589 = vpop.permute.xlu0 %3588
        %s3591 = sor.u32 256, 56
        %3592 = vbcast.lane.b32.xlu0 %v3562, %s3591
        %v3593 = vpop.permute.xlu0 %3592
        %s3595 = sor.u32 256, 64
        %3596 = vbcast.lane.b32.xlu0 %v3562, %s3595
        %v3597 = vpop.permute.xlu0 %3596
        %s3599 = sor.u32 256, 72
        %3600 = vbcast.lane.b32.xlu0 %v3562, %s3599
        %v3601 = vpop.permute.xlu0 %3600
        %s3603 = sor.u32 256, 80
        %3604 = vbcast.lane.b32.xlu0 %v3562, %s3603
        %v3605 = vpop.permute.xlu0 %3604
        %s3607 = sor.u32 256, 88
        %3608 = vbcast.lane.b32.xlu0 %v3562, %s3607
        %v3609 = vpop.permute.xlu0 %3608
        %s3611 = sor.u32 256, 96
        %3612 = vbcast.lane.b32.xlu0 %v3562, %s3611
        %v3613 = vpop.permute.xlu0 %3612
        %s3615 = sor.u32 256, 104
        %3616 = vbcast.lane.b32.xlu0 %v3562, %s3615
        %v3617 = vpop.permute.xlu0 %3616
        %s3619 = sor.u32 256, 112
        %3620 = vbcast.lane.b32.xlu0 %v3562, %s3619
        %v3621 = vpop.permute.xlu0 %3620
        %s3623 = sor.u32 256, 120
        %3624 = vbcast.lane.b32.xlu0 %v3562, %s3623
        %v3625 = vpop.permute.xlu0 %3624
        %v3626 = vlaneseq
        %v3627 = vshrl.u32 %v3626, 7
        %v3628 = vsub.s32 3, %v3627
        %v3629 = vrot.slane %v2886, %v3628
        %3631 = vbcast.lane.b32.xlu0 %v3629, 256
        %v3632 = vpop.permute.xlu0 %3631
        %s3634 = sor.u32 256, 8
        %3635 = vbcast.lane.b32.xlu0 %v3629, %s3634
        %v3636 = vpop.permute.xlu0 %3635
        %s3638 = sor.u32 256, 16
        %3639 = vbcast.lane.b32.xlu0 %v3629, %s3638
        %v3640 = vpop.permute.xlu0 %3639
        %s3642 = sor.u32 256, 24
        %3643 = vbcast.lane.b32.xlu0 %v3629, %s3642
        %v3644 = vpop.permute.xlu0 %3643
        %s3646 = sor.u32 256, 32
        %3647 = vbcast.lane.b32.xlu0 %v3629, %s3646
        %v3648 = vpop.permute.xlu0 %3647
        %s3650 = sor.u32 256, 40
        %3651 = vbcast.lane.b32.xlu0 %v3629, %s3650
        %v3652 = vpop.permute.xlu0 %3651
        %s3654 = sor.u32 256, 48
        %3655 = vbcast.lane.b32.xlu0 %v3629, %s3654
        %v3656 = vpop.permute.xlu0 %3655
        %s3658 = sor.u32 256, 56
        %3659 = vbcast.lane.b32.xlu0 %v3629, %s3658
        %v3660 = vpop.permute.xlu0 %3659
        %s3662 = sor.u32 256, 64
        %3663 = vbcast.lane.b32.xlu0 %v3629, %s3662
        %v3664 = vpop.permute.xlu0 %3663
        %s3666 = sor.u32 256, 72
        %3667 = vbcast.lane.b32.xlu0 %v3629, %s3666
        %v3668 = vpop.permute.xlu0 %3667
        %s3670 = sor.u32 256, 80
        %3671 = vbcast.lane.b32.xlu0 %v3629, %s3670
        %v3672 = vpop.permute.xlu0 %3671
        %s3674 = sor.u32 256, 88
        %3675 = vbcast.lane.b32.xlu0 %v3629, %s3674
        %v3676 = vpop.permute.xlu0 %3675
        %s3678 = sor.u32 256, 96
        %3679 = vbcast.lane.b32.xlu0 %v3629, %s3678
        %v3680 = vpop.permute.xlu0 %3679
        %s3682 = sor.u32 256, 104
        %3683 = vbcast.lane.b32.xlu0 %v3629, %s3682
        %v3684 = vpop.permute.xlu0 %3683
        %s3686 = sor.u32 256, 112
        %3687 = vbcast.lane.b32.xlu0 %v3629, %s3686
        %v3688 = vpop.permute.xlu0 %3687
        %s3690 = sor.u32 256, 120
        %3691 = vbcast.lane.b32.xlu0 %v3629, %s3690
        %v3692 = vpop.permute.xlu0 %3691
        %v3693 = vlaneseq
        %v3694 = vshrl.u32 %v3693, 7
        %v3695 = vsub.s32 4, %v3694
        %v3696 = vrot.slane %v2886, %v3695
        %3698 = vbcast.lane.b32.xlu0 %v3696, 256
        %v3699 = vpop.permute.xlu0 %3698
        %s3701 = sor.u32 256, 8
        %3702 = vbcast.lane.b32.xlu0 %v3696, %s3701
        %v3703 = vpop.permute.xlu0 %3702
        %s3705 = sor.u32 256, 16
        %3706 = vbcast.lane.b32.xlu0 %v3696, %s3705
        %v3707 = vpop.permute.xlu0 %3706
        %s3709 = sor.u32 256, 24
        %3710 = vbcast.lane.b32.xlu0 %v3696, %s3709
        %v3711 = vpop.permute.xlu0 %3710
        %s3713 = sor.u32 256, 32
        %3714 = vbcast.lane.b32.xlu0 %v3696, %s3713
        %v3715 = vpop.permute.xlu0 %3714
        %s3717 = sor.u32 256, 40
        %3718 = vbcast.lane.b32.xlu0 %v3696, %s3717
        %v3719 = vpop.permute.xlu0 %3718
        %s3721 = sor.u32 256, 48
        %3722 = vbcast.lane.b32.xlu0 %v3696, %s3721
        %v3723 = vpop.permute.xlu0 %3722
        %s3725 = sor.u32 256, 56
        %3726 = vbcast.lane.b32.xlu0 %v3696, %s3725
        %v3727 = vpop.permute.xlu0 %3726
        %s3729 = sor.u32 256, 64
        %3730 = vbcast.lane.b32.xlu0 %v3696, %s3729
        %v3731 = vpop.permute.xlu0 %3730
        %s3733 = sor.u32 256, 72
        %3734 = vbcast.lane.b32.xlu0 %v3696, %s3733
        %v3735 = vpop.permute.xlu0 %3734
        %s3737 = sor.u32 256, 80
        %3738 = vbcast.lane.b32.xlu0 %v3696, %s3737
        %v3739 = vpop.permute.xlu0 %3738
        %s3741 = sor.u32 256, 88
        %3742 = vbcast.lane.b32.xlu0 %v3696, %s3741
        %v3743 = vpop.permute.xlu0 %3742
        %s3745 = sor.u32 256, 96
        %3746 = vbcast.lane.b32.xlu0 %v3696, %s3745
        %v3747 = vpop.permute.xlu0 %3746
        %s3749 = sor.u32 256, 104
        %3750 = vbcast.lane.b32.xlu0 %v3696, %s3749
        %v3751 = vpop.permute.xlu0 %3750
        %s3753 = sor.u32 256, 112
        %3754 = vbcast.lane.b32.xlu0 %v3696, %s3753
        %v3755 = vpop.permute.xlu0 %3754
        %s3757 = sor.u32 256, 120
        %3758 = vbcast.lane.b32.xlu0 %v3696, %s3757
        %v3759 = vpop.permute.xlu0 %3758
        %v3760 = vlaneseq
        %v3761 = vshrl.u32 %v3760, 7
        %v3762 = vsub.s32 5, %v3761
        %v3763 = vrot.slane %v2886, %v3762
        %3765 = vbcast.lane.b32.xlu0 %v3763, 256
        %v3766 = vpop.permute.xlu0 %3765
        %s3768 = sor.u32 256, 8
        %3769 = vbcast.lane.b32.xlu0 %v3763, %s3768
        %v3770 = vpop.permute.xlu0 %3769
        %s3772 = sor.u32 256, 16
        %3773 = vbcast.lane.b32.xlu0 %v3763, %s3772
        %v3774 = vpop.permute.xlu0 %3773
        %s3776 = sor.u32 256, 24
        %3777 = vbcast.lane.b32.xlu0 %v3763, %s3776
        %v3778 = vpop.permute.xlu0 %3777
        %s3780 = sor.u32 256, 32
        %3781 = vbcast.lane.b32.xlu0 %v3763, %s3780
        %v3782 = vpop.permute.xlu0 %3781
        %s3784 = sor.u32 256, 40
        %3785 = vbcast.lane.b32.xlu0 %v3763, %s3784
        %v3786 = vpop.permute.xlu0 %3785
        %s3788 = sor.u32 256, 48
        %3789 = vbcast.lane.b32.xlu0 %v3763, %s3788
        %v3790 = vpop.permute.xlu0 %3789
        %s3792 = sor.u32 256, 56
        %3793 = vbcast.lane.b32.xlu0 %v3763, %s3792
        %v3794 = vpop.permute.xlu0 %3793
        %s3796 = sor.u32 256, 64
        %3797 = vbcast.lane.b32.xlu0 %v3763, %s3796
        %v3798 = vpop.permute.xlu0 %3797
        %s3800 = sor.u32 256, 72
        %3801 = vbcast.lane.b32.xlu0 %v3763, %s3800
        %v3802 = vpop.permute.xlu0 %3801
        %s3804 = sor.u32 256, 80
        %3805 = vbcast.lane.b32.xlu0 %v3763, %s3804
        %v3806 = vpop.permute.xlu0 %3805
        %s3808 = sor.u32 256, 88
        %3809 = vbcast.lane.b32.xlu0 %v3763, %s3808
        %v3810 = vpop.permute.xlu0 %3809
        %s3812 = sor.u32 256, 96
        %3813 = vbcast.lane.b32.xlu0 %v3763, %s3812
        %v3814 = vpop.permute.xlu0 %3813
        %s3816 = sor.u32 256, 104
        %3817 = vbcast.lane.b32.xlu0 %v3763, %s3816
        %v3818 = vpop.permute.xlu0 %3817
        %s3820 = sor.u32 256, 112
        %3821 = vbcast.lane.b32.xlu0 %v3763, %s3820
        %v3822 = vpop.permute.xlu0 %3821
        %s3824 = sor.u32 256, 120
        %3825 = vbcast.lane.b32.xlu0 %v3763, %s3824
        %v3826 = vpop.permute.xlu0 %3825
        %v3827 = vlaneseq
        %v3828 = vshrl.u32 %v3827, 7
        %v3829 = vsub.s32 6, %v3828
        %v3830 = vrot.slane %v2886, %v3829
        %3832 = vbcast.lane.b32.xlu0 %v3830, 256
        %v3833 = vpop.permute.xlu0 %3832
        %s3835 = sor.u32 256, 8
        %3836 = vbcast.lane.b32.xlu0 %v3830, %s3835
        %v3837 = vpop.permute.xlu0 %3836
        %s3839 = sor.u32 256, 16
        %3840 = vbcast.lane.b32.xlu0 %v3830, %s3839
        %v3841 = vpop.permute.xlu0 %3840
        %s3843 = sor.u32 256, 24
        %3844 = vbcast.lane.b32.xlu0 %v3830, %s3843
        %v3845 = vpop.permute.xlu0 %3844
        %s3847 = sor.u32 256, 32
        %3848 = vbcast.lane.b32.xlu0 %v3830, %s3847
        %v3849 = vpop.permute.xlu0 %3848
        %s3851 = sor.u32 256, 40
        %3852 = vbcast.lane.b32.xlu0 %v3830, %s3851
        %v3853 = vpop.permute.xlu0 %3852
        %s3855 = sor.u32 256, 48
        %3856 = vbcast.lane.b32.xlu0 %v3830, %s3855
        %v3857 = vpop.permute.xlu0 %3856
        %s3859 = sor.u32 256, 56
        %3860 = vbcast.lane.b32.xlu0 %v3830, %s3859
        %v3861 = vpop.permute.xlu0 %3860
        %s3863 = sor.u32 256, 64
        %3864 = vbcast.lane.b32.xlu0 %v3830, %s3863
        %v3865 = vpop.permute.xlu0 %3864
        %s3867 = sor.u32 256, 72
        %3868 = vbcast.lane.b32.xlu0 %v3830, %s3867
        %v3869 = vpop.permute.xlu0 %3868
        %s3871 = sor.u32 256, 80
        %3872 = vbcast.lane.b32.xlu0 %v3830, %s3871
        %v3873 = vpop.permute.xlu0 %3872
        %s3875 = sor.u32 256, 88
        %3876 = vbcast.lane.b32.xlu0 %v3830, %s3875
        %v3877 = vpop.permute.xlu0 %3876
        %s3879 = sor.u32 256, 96
        %3880 = vbcast.lane.b32.xlu0 %v3830, %s3879
        %v3881 = vpop.permute.xlu0 %3880
        %s3883 = sor.u32 256, 104
        %3884 = vbcast.lane.b32.xlu0 %v3830, %s3883
        %v3885 = vpop.permute.xlu0 %3884
        %s3887 = sor.u32 256, 112
        %3888 = vbcast.lane.b32.xlu0 %v3830, %s3887
        %v3889 = vpop.permute.xlu0 %3888
        %s3891 = sor.u32 256, 120
        %3892 = vbcast.lane.b32.xlu0 %v3830, %s3891
        %v3893 = vpop.permute.xlu0 %3892
        %v3894 = vlaneseq
        %v3895 = vshrl.u32 %v3894, 7
        %v3896 = vsub.s32 7, %v3895
        %v3897 = vrot.slane %v2886, %v3896
        %3899 = vbcast.lane.b32.xlu0 %v3897, 256
        %v3900 = vpop.permute.xlu0 %3899
        %s3902 = sor.u32 256, 8
        %3903 = vbcast.lane.b32.xlu0 %v3897, %s3902
        %v3904 = vpop.permute.xlu0 %3903
        %s3906 = sor.u32 256, 16
        %3907 = vbcast.lane.b32.xlu0 %v3897, %s3906
        %v3908 = vpop.permute.xlu0 %3907
        %s3910 = sor.u32 256, 24
        %3911 = vbcast.lane.b32.xlu0 %v3897, %s3910
        %v3912 = vpop.permute.xlu0 %3911
        %s3914 = sor.u32 256, 32
        %3915 = vbcast.lane.b32.xlu0 %v3897, %s3914
        %v3916 = vpop.permute.xlu0 %3915
        %s3918 = sor.u32 256, 40
        %3919 = vbcast.lane.b32.xlu0 %v3897, %s3918
        %v3920 = vpop.permute.xlu0 %3919
        %s3922 = sor.u32 256, 48
        %3923 = vbcast.lane.b32.xlu0 %v3897, %s3922
        %v3924 = vpop.permute.xlu0 %3923
        %s3926 = sor.u32 256, 56
        %3927 = vbcast.lane.b32.xlu0 %v3897, %s3926
        %v3928 = vpop.permute.xlu0 %3927
        %s3930 = sor.u32 256, 64
        %3931 = vbcast.lane.b32.xlu0 %v3897, %s3930
        %v3932 = vpop.permute.xlu0 %3931
        %s3934 = sor.u32 256, 72
        %3935 = vbcast.lane.b32.xlu0 %v3897, %s3934
        %v3936 = vpop.permute.xlu0 %3935
        %s3938 = sor.u32 256, 80
        %3939 = vbcast.lane.b32.xlu0 %v3897, %s3938
        %v3940 = vpop.permute.xlu0 %3939
        %s3942 = sor.u32 256, 88
        %3943 = vbcast.lane.b32.xlu0 %v3897, %s3942
        %v3944 = vpop.permute.xlu0 %3943
        %s3946 = sor.u32 256, 96
        %3947 = vbcast.lane.b32.xlu0 %v3897, %s3946
        %v3948 = vpop.permute.xlu0 %3947
        %s3950 = sor.u32 256, 104
        %3951 = vbcast.lane.b32.xlu0 %v3897, %s3950
        %v3952 = vpop.permute.xlu0 %3951
        %s3954 = sor.u32 256, 112
        %3955 = vbcast.lane.b32.xlu0 %v3897, %s3954
        %v3956 = vpop.permute.xlu0 %3955
        %s3958 = sor.u32 256, 120
        %3959 = vbcast.lane.b32.xlu0 %v3897, %s3958
        %v3960 = vpop.permute.xlu0 %3959
        %v4217 = vadd.f32 %v2629, %v2895
        %v4218 = vadd.f32 %v2630, %v2899
        %v4219 = vadd.f32 %v2631, %v2903
        %v4220 = vadd.f32 %v2632, %v2907
        %v4221 = vadd.f32 %v2633, %v2911
        %v4222 = vadd.f32 %v2634, %v2915
        %v4223 = vadd.f32 %v2635, %v2919
        %v4224 = vadd.f32 %v2636, %v2923
        %v4225 = vadd.f32 %v2637, %v2927
        %v4226 = vadd.f32 %v2638, %v2931
        %v4227 = vadd.f32 %v2639, %v2935
        %v4228 = vadd.f32 %v2640, %v2939
        %v4229 = vadd.f32 %v2641, %v2943
        %v4230 = vadd.f32 %v2642, %v2947
        %v4231 = vadd.f32 %v2643, %v2951
        %v4232 = vadd.f32 %v2644, %v2955
        %v4233 = vadd.f32 %v2645, %v2962
        %v4234 = vadd.f32 %v2646, %v2966
        %v4235 = vadd.f32 %v2647, %v2970
        %v4236 = vadd.f32 %v2648, %v2974
        %v4237 = vadd.f32 %v2649, %v2978
        %v4238 = vadd.f32 %v2650, %v2982
        %v4239 = vadd.f32 %v2651, %v2986
        %v4240 = vadd.f32 %v2652, %v2990
        %v4241 = vadd.f32 %v2653, %v2994
        %v4242 = vadd.f32 %v2654, %v2998
        %v4243 = vadd.f32 %v2655, %v3002
        %v4244 = vadd.f32 %v2656, %v3006
        %v4245 = vadd.f32 %v2657, %v3010
        %v4246 = vadd.f32 %v2658, %v3014
        %v4247 = vadd.f32 %v2659, %v3018
        %v4248 = vadd.f32 %v2660, %v3022
        %v4249 = vadd.f32 %v2661, %v3029
        %v4250 = vadd.f32 %v2662, %v3033
        %v4251 = vadd.f32 %v2663, %v3037
        %v4252 = vadd.f32 %v2664, %v3041
        %v4253 = vadd.f32 %v2665, %v3045
        %v4254 = vadd.f32 %v2666, %v3049
        %v4255 = vadd.f32 %v2667, %v3053
        %v4256 = vadd.f32 %v2668, %v3057
        %v4257 = vadd.f32 %v2669, %v3061
        %v4258 = vadd.f32 %v2670, %v3065
        %v4259 = vadd.f32 %v2671, %v3069
        %v4260 = vadd.f32 %v2672, %v3073
        %v4261 = vadd.f32 %v2673, %v3077
        %v4262 = vadd.f32 %v2674, %v3081
        %v4263 = vadd.f32 %v2675, %v3085
        %v4264 = vadd.f32 %v2676, %v3089
        %v4265 = vadd.f32 %v2677, %v3096
        %v4266 = vadd.f32 %v2678, %v3100
        %v4267 = vadd.f32 %v2679, %v3104
        %v4268 = vadd.f32 %v2680, %v3108
        %v4269 = vadd.f32 %v2681, %v3112
        %v4270 = vadd.f32 %v2682, %v3116
        %v4271 = vadd.f32 %v2683, %v3120
        %v4272 = vadd.f32 %v2684, %v3124
        %v4273 = vadd.f32 %v2685, %v3128
        %v4274 = vadd.f32 %v2686, %v3132
        %v4275 = vadd.f32 %v2687, %v3136
        %v4276 = vadd.f32 %v2688, %v3140
        %v4277 = vadd.f32 %v2689, %v3144
        %v4278 = vadd.f32 %v2690, %v3148
        %v4279 = vadd.f32 %v2691, %v3152
        %v4280 = vadd.f32 %v2692, %v3156
        %v4281 = vadd.f32 %v2693, %v3163
        %v4282 = vadd.f32 %v2694, %v3167
        %v4283 = vadd.f32 %v2695, %v3171
        %v4284 = vadd.f32 %v2696, %v3175
        %v4285 = vadd.f32 %v2697, %v3179
        %v4286 = vadd.f32 %v2698, %v3183
        %v4287 = vadd.f32 %v2699, %v3187
        %v4288 = vadd.f32 %v2700, %v3191
        %v4289 = vadd.f32 %v2701, %v3195
        %v4290 = vadd.f32 %v2702, %v3199
        %v4291 = vadd.f32 %v2703, %v3203
        %v4292 = vadd.f32 %v2704, %v3207
        %v4293 = vadd.f32 %v2705, %v3211
        %v4294 = vadd.f32 %v2706, %v3215
        %v4295 = vadd.f32 %v2707, %v3219
        %v4296 = vadd.f32 %v2708, %v3223
        %v4297 = vadd.f32 %v2709, %v3230
        %v4298 = vadd.f32 %v2710, %v3234
        %v4299 = vadd.f32 %v2711, %v3238
        %v4300 = vadd.f32 %v2712, %v3242
        %v4301 = vadd.f32 %v2713, %v3246
        %v4302 = vadd.f32 %v2714, %v3250
        %v4303 = vadd.f32 %v2715, %v3254
        %v4304 = vadd.f32 %v2716, %v3258
        %v4305 = vadd.f32 %v2717, %v3262
        %v4306 = vadd.f32 %v2718, %v3266
        %v4307 = vadd.f32 %v2719, %v3270
        %v4308 = vadd.f32 %v2720, %v3274
        %v4309 = vadd.f32 %v2721, %v3278
        %v4310 = vadd.f32 %v2722, %v3282
        %v4311 = vadd.f32 %v2723, %v3286
        %v4312 = vadd.f32 %v2724, %v3290
        %v4313 = vadd.f32 %v2725, %v3297
        %v4314 = vadd.f32 %v2726, %v3301
        %v4315 = vadd.f32 %v2727, %v3305
        %v4316 = vadd.f32 %v2728, %v3309
        %v4317 = vadd.f32 %v2729, %v3313
        %v4318 = vadd.f32 %v2730, %v3317
        %v4319 = vadd.f32 %v2731, %v3321
        %v4320 = vadd.f32 %v2732, %v3325
        %v4321 = vadd.f32 %v2733, %v3329
        %v4322 = vadd.f32 %v2734, %v3333
        %v4323 = vadd.f32 %v2735, %v3337
        %v4324 = vadd.f32 %v2736, %v3341
        %v4325 = vadd.f32 %v2737, %v3345
        %v4326 = vadd.f32 %v2738, %v3349
        %v4327 = vadd.f32 %v2739, %v3353
        %v4328 = vadd.f32 %v2740, %v3357
        %v4329 = vadd.f32 %v2741, %v3364
        %v4330 = vadd.f32 %v2742, %v3368
        %v4331 = vadd.f32 %v2743, %v3372
        %v4332 = vadd.f32 %v2744, %v3376
        %v4333 = vadd.f32 %v2745, %v3380
        %v4334 = vadd.f32 %v2746, %v3384
        %v4335 = vadd.f32 %v2747, %v3388
        %v4336 = vadd.f32 %v2748, %v3392
        %v4337 = vadd.f32 %v2749, %v3396
        %v4338 = vadd.f32 %v2750, %v3400
        %v4339 = vadd.f32 %v2751, %v3404
        %v4340 = vadd.f32 %v2752, %v3408
        %v4341 = vadd.f32 %v2753, %v3412
        %v4342 = vadd.f32 %v2754, %v3416
        %v4343 = vadd.f32 %v2755, %v3420
        %v4344 = vadd.f32 %v2756, %v3424
        %v4345 = vadd.f32 %v2757, %v3431
        %v4346 = vadd.f32 %v2758, %v3435
        %v4347 = vadd.f32 %v2759, %v3439
        %v4348 = vadd.f32 %v2760, %v3443
        %v4349 = vadd.f32 %v2761, %v3447
        %v4350 = vadd.f32 %v2762, %v3451
        %v4351 = vadd.f32 %v2763, %v3455
        %v4352 = vadd.f32 %v2764, %v3459
        %v4353 = vadd.f32 %v2765, %v3463
        %v4354 = vadd.f32 %v2766, %v3467
        %v4355 = vadd.f32 %v2767, %v3471
        %v4356 = vadd.f32 %v2768, %v3475
        %v4357 = vadd.f32 %v2769, %v3479
        %v4358 = vadd.f32 %v2770, %v3483
        %v4359 = vadd.f32 %v2771, %v3487
        %v4360 = vadd.f32 %v2772, %v3491
        %v4361 = vadd.f32 %v2773, %v3498
        %v4362 = vadd.f32 %v2774, %v3502
        %v4363 = vadd.f32 %v2775, %v3506
        %v4364 = vadd.f32 %v2776, %v3510
        %v4365 = vadd.f32 %v2777, %v3514
        %v4366 = vadd.f32 %v2778, %v3518
        %v4367 = vadd.f32 %v2779, %v3522
        %v4368 = vadd.f32 %v2780, %v3526
        %v4369 = vadd.f32 %v2781, %v3530
        %v4370 = vadd.f32 %v2782, %v3534
        %v4371 = vadd.f32 %v2783, %v3538
        %v4372 = vadd.f32 %v2784, %v3542
        %v4373 = vadd.f32 %v2785, %v3546
        %v4374 = vadd.f32 %v2786, %v3550
        %v4375 = vadd.f32 %v2787, %v3554
        %v4376 = vadd.f32 %v2788, %v3558
        %v4377 = vadd.f32 %v2789, %v3565
        %v4378 = vadd.f32 %v2790, %v3569
        %v4379 = vadd.f32 %v2791, %v3573
        %v4380 = vadd.f32 %v2792, %v3577
        %v4381 = vadd.f32 %v2793, %v3581
        %v4382 = vadd.f32 %v2794, %v3585
        %v4383 = vadd.f32 %v2795, %v3589
        %v4384 = vadd.f32 %v2796, %v3593
        %v4385 = vadd.f32 %v2797, %v3597
        %v4386 = vadd.f32 %v2798, %v3601
        %v4387 = vadd.f32 %v2799, %v3605
        %v4388 = vadd.f32 %v2800, %v3609
        %v4389 = vadd.f32 %v2801, %v3613
        %v4390 = vadd.f32 %v2802, %v3617
        %v4391 = vadd.f32 %v2803, %v3621
        %v4392 = vadd.f32 %v2804, %v3625
        %v4393 = vadd.f32 %v2805, %v3632
        %v4394 = vadd.f32 %v2806, %v3636
        %v4395 = vadd.f32 %v2807, %v3640
        %v4396 = vadd.f32 %v2808, %v3644
        %v4397 = vadd.f32 %v2809, %v3648
        %v4398 = vadd.f32 %v2810, %v3652
        %v4399 = vadd.f32 %v2811, %v3656
        %v4400 = vadd.f32 %v2812, %v3660
        %v4401 = vadd.f32 %v2813, %v3664
        %v4402 = vadd.f32 %v2814, %v3668
        %v4403 = vadd.f32 %v2815, %v3672
        %v4404 = vadd.f32 %v2816, %v3676
        %v4405 = vadd.f32 %v2817, %v3680
        %v4406 = vadd.f32 %v2818, %v3684
        %v4407 = vadd.f32 %v2819, %v3688
        %v4408 = vadd.f32 %v2820, %v3692
        %v4409 = vadd.f32 %v2821, %v3699
        %v4410 = vadd.f32 %v2822, %v3703
        %v4411 = vadd.f32 %v2823, %v3707
        %v4412 = vadd.f32 %v2824, %v3711
        %v4413 = vadd.f32 %v2825, %v3715
        %v4414 = vadd.f32 %v2826, %v3719
        %v4415 = vadd.f32 %v2827, %v3723
        %v4416 = vadd.f32 %v2828, %v3727
        %v4417 = vadd.f32 %v2829, %v3731
        %v4418 = vadd.f32 %v2830, %v3735
        %v4419 = vadd.f32 %v2831, %v3739
        %v4420 = vadd.f32 %v2832, %v3743
        %v4421 = vadd.f32 %v2833, %v3747
        %v4422 = vadd.f32 %v2834, %v3751
        %v4423 = vadd.f32 %v2835, %v3755
        %v4424 = vadd.f32 %v2836, %v3759
        %v4425 = vadd.f32 %v2837, %v3766
        %v4426 = vadd.f32 %v2838, %v3770
        %v4427 = vadd.f32 %v2839, %v3774
        %v4428 = vadd.f32 %v2840, %v3778
        %v4429 = vadd.f32 %v2841, %v3782
        %v4430 = vadd.f32 %v2842, %v3786
        %v4431 = vadd.f32 %v2843, %v3790
        %v4432 = vadd.f32 %v2844, %v3794
        %v4433 = vadd.f32 %v2845, %v3798
        %v4434 = vadd.f32 %v2846, %v3802
        %v4435 = vadd.f32 %v2847, %v3806
        %v4436 = vadd.f32 %v2848, %v3810
        %v4437 = vadd.f32 %v2849, %v3814
        %v4438 = vadd.f32 %v2850, %v3818
        %v4439 = vadd.f32 %v2851, %v3822
        %v4440 = vadd.f32 %v2852, %v3826
        %v4441 = vadd.f32 %v2853, %v3833
        %v4442 = vadd.f32 %v2854, %v3837
        %v4443 = vadd.f32 %v2855, %v3841
        %v4444 = vadd.f32 %v2856, %v3845
        %v4445 = vadd.f32 %v2857, %v3849
        %v4446 = vadd.f32 %v2858, %v3853
        %v4447 = vadd.f32 %v2859, %v3857
        %v4448 = vadd.f32 %v2860, %v3861
        %v4449 = vadd.f32 %v2861, %v3865
        %v4450 = vadd.f32 %v2862, %v3869
        %v4451 = vadd.f32 %v2863, %v3873
        %v4452 = vadd.f32 %v2864, %v3877
        %v4453 = vadd.f32 %v2865, %v3881
        %v4454 = vadd.f32 %v2866, %v3885
        %v4455 = vadd.f32 %v2867, %v3889
        %v4456 = vadd.f32 %v2868, %v3893
        %v4457 = vadd.f32 %v2869, %v3900
        %v4458 = vadd.f32 %v2870, %v3904
        %v4459 = vadd.f32 %v2871, %v3908
        %v4460 = vadd.f32 %v2872, %v3912
        %v4461 = vadd.f32 %v2873, %v3916
        %v4462 = vadd.f32 %v2874, %v3920
        %v4463 = vadd.f32 %v2875, %v3924
        %v4464 = vadd.f32 %v2876, %v3928
        %v4465 = vadd.f32 %v2877, %v3932
        %v4466 = vadd.f32 %v2878, %v3936
        %v4467 = vadd.f32 %v2879, %v3940
        %v4468 = vadd.f32 %v2880, %v3944
        %v4469 = vadd.f32 %v2881, %v3948
        %v4470 = vadd.f32 %v2882, %v3952
        %v4471 = vadd.f32 %v2883, %v3956
        %v4472 = vadd.f32 %v2884, %v3960
        %4729 = vset.pattern.permute.xlu0 0
        %4730 = vperm.xlu0 %4729, %v4217
        %v4731 = vpop.permute.xlu0 %4730
        %4732 = vset.pattern.permute.xlu0 0
        %4733 = vperm.xlu0 %4732, %v4218
        %v4734 = vpop.permute.xlu0 %4733
        %4735 = vset.pattern.permute.xlu0 0
        %4736 = vperm.xlu0 %4735, %v4219
        %v4737 = vpop.permute.xlu0 %4736
        %4738 = vset.pattern.permute.xlu0 0
        %4739 = vperm.xlu0 %4738, %v4220
        %v4740 = vpop.permute.xlu0 %4739
        %4741 = vset.pattern.permute.xlu0 0
        %4742 = vperm.xlu0 %4741, %v4221
        %v4743 = vpop.permute.xlu0 %4742
        %4744 = vset.pattern.permute.xlu0 0
        %4745 = vperm.xlu0 %4744, %v4222
        %v4746 = vpop.permute.xlu0 %4745
        %4747 = vset.pattern.permute.xlu0 0
        %4748 = vperm.xlu0 %4747, %v4223
        %v4749 = vpop.permute.xlu0 %4748
        %4750 = vset.pattern.permute.xlu0 0
        %4751 = vperm.xlu0 %4750, %v4224
        %v4752 = vpop.permute.xlu0 %4751
        %4753 = vset.pattern.permute.xlu0 0
        %4754 = vperm.xlu0 %4753, %v4225
        %v4755 = vpop.permute.xlu0 %4754
        %4756 = vset.pattern.permute.xlu0 0
        %4757 = vperm.xlu0 %4756, %v4226
        %v4758 = vpop.permute.xlu0 %4757
        %4759 = vset.pattern.permute.xlu0 0
        %4760 = vperm.xlu0 %4759, %v4227
        %v4761 = vpop.permute.xlu0 %4760
        %4762 = vset.pattern.permute.xlu0 0
        %4763 = vperm.xlu0 %4762, %v4228
        %v4764 = vpop.permute.xlu0 %4763
        %4765 = vset.pattern.permute.xlu0 0
        %4766 = vperm.xlu0 %4765, %v4229
        %v4767 = vpop.permute.xlu0 %4766
        %4768 = vset.pattern.permute.xlu0 0
        %4769 = vperm.xlu0 %4768, %v4230
        %v4770 = vpop.permute.xlu0 %4769
        %4771 = vset.pattern.permute.xlu0 0
        %4772 = vperm.xlu0 %4771, %v4231
        %v4773 = vpop.permute.xlu0 %4772
        %4774 = vset.pattern.permute.xlu0 0
        %4775 = vperm.xlu0 %4774, %v4232
        %v4776 = vpop.permute.xlu0 %4775
        %4777 = vset.pattern.permute.xlu0 0
        %4778 = vperm.xlu0 %4777, %v4233
        %v4779 = vpop.permute.xlu0 %4778
        %4780 = vset.pattern.permute.xlu0 0
        %4781 = vperm.xlu0 %4780, %v4234
        %v4782 = vpop.permute.xlu0 %4781
        %4783 = vset.pattern.permute.xlu0 0
        %4784 = vperm.xlu0 %4783, %v4235
        %v4785 = vpop.permute.xlu0 %4784
        %4786 = vset.pattern.permute.xlu0 0
        %4787 = vperm.xlu0 %4786, %v4236
        %v4788 = vpop.permute.xlu0 %4787
        %4789 = vset.pattern.permute.xlu0 0
        %4790 = vperm.xlu0 %4789, %v4237
        %v4791 = vpop.permute.xlu0 %4790
        %4792 = vset.pattern.permute.xlu0 0
        %4793 = vperm.xlu0 %4792, %v4238
        %v4794 = vpop.permute.xlu0 %4793
        %4795 = vset.pattern.permute.xlu0 0
        %4796 = vperm.xlu0 %4795, %v4239
        %v4797 = vpop.permute.xlu0 %4796
        %4798 = vset.pattern.permute.xlu0 0
        %4799 = vperm.xlu0 %4798, %v4240
        %v4800 = vpop.permute.xlu0 %4799
        %4801 = vset.pattern.permute.xlu0 0
        %4802 = vperm.xlu0 %4801, %v4241
        %v4803 = vpop.permute.xlu0 %4802
        %4804 = vset.pattern.permute.xlu0 0
        %4805 = vperm.xlu0 %4804, %v4242
        %v4806 = vpop.permute.xlu0 %4805
        %4807 = vset.pattern.permute.xlu0 0
        %4808 = vperm.xlu0 %4807, %v4243
        %v4809 = vpop.permute.xlu0 %4808
        %4810 = vset.pattern.permute.xlu0 0
        %4811 = vperm.xlu0 %4810, %v4244
        %v4812 = vpop.permute.xlu0 %4811
        %4813 = vset.pattern.permute.xlu0 0
        %4814 = vperm.xlu0 %4813, %v4245
        %v4815 = vpop.permute.xlu0 %4814
        %4816 = vset.pattern.permute.xlu0 0
        %4817 = vperm.xlu0 %4816, %v4246
        %v4818 = vpop.permute.xlu0 %4817
        %4819 = vset.pattern.permute.xlu0 0
        %4820 = vperm.xlu0 %4819, %v4247
        %v4821 = vpop.permute.xlu0 %4820
        %4822 = vset.pattern.permute.xlu0 0
        %4823 = vperm.xlu0 %4822, %v4248
        %v4824 = vpop.permute.xlu0 %4823
        %4825 = vset.pattern.permute.xlu0 0
        %4826 = vperm.xlu0 %4825, %v4249
        %v4827 = vpop.permute.xlu0 %4826
        %4828 = vset.pattern.permute.xlu0 0
        %4829 = vperm.xlu0 %4828, %v4250
        %v4830 = vpop.permute.xlu0 %4829
        %4831 = vset.pattern.permute.xlu0 0
        %4832 = vperm.xlu0 %4831, %v4251
        %v4833 = vpop.permute.xlu0 %4832
        %4834 = vset.pattern.permute.xlu0 0
        %4835 = vperm.xlu0 %4834, %v4252
        %v4836 = vpop.permute.xlu0 %4835
        %4837 = vset.pattern.permute.xlu0 0
        %4838 = vperm.xlu0 %4837, %v4253
        %v4839 = vpop.permute.xlu0 %4838
        %4840 = vset.pattern.permute.xlu0 0
        %4841 = vperm.xlu0 %4840, %v4254
        %v4842 = vpop.permute.xlu0 %4841
        %4843 = vset.pattern.permute.xlu0 0
        %4844 = vperm.xlu0 %4843, %v4255
        %v4845 = vpop.permute.xlu0 %4844
        %4846 = vset.pattern.permute.xlu0 0
        %4847 = vperm.xlu0 %4846, %v4256
        %v4848 = vpop.permute.xlu0 %4847
        %4849 = vset.pattern.permute.xlu0 0
        %4850 = vperm.xlu0 %4849, %v4257
        %v4851 = vpop.permute.xlu0 %4850
        %4852 = vset.pattern.permute.xlu0 0
        %4853 = vperm.xlu0 %4852, %v4258
        %v4854 = vpop.permute.xlu0 %4853
        %4855 = vset.pattern.permute.xlu0 0
        %4856 = vperm.xlu0 %4855, %v4259
        %v4857 = vpop.permute.xlu0 %4856
        %4858 = vset.pattern.permute.xlu0 0
        %4859 = vperm.xlu0 %4858, %v4260
        %v4860 = vpop.permute.xlu0 %4859
        %4861 = vset.pattern.permute.xlu0 0
        %4862 = vperm.xlu0 %4861, %v4261
        %v4863 = vpop.permute.xlu0 %4862
        %4864 = vset.pattern.permute.xlu0 0
        %4865 = vperm.xlu0 %4864, %v4262
        %v4866 = vpop.permute.xlu0 %4865
        %4867 = vset.pattern.permute.xlu0 0
        %4868 = vperm.xlu0 %4867, %v4263
        %v4869 = vpop.permute.xlu0 %4868
        %4870 = vset.pattern.permute.xlu0 0
        %4871 = vperm.xlu0 %4870, %v4264
        %v4872 = vpop.permute.xlu0 %4871
        %4873 = vset.pattern.permute.xlu0 0
        %4874 = vperm.xlu0 %4873, %v4265
        %v4875 = vpop.permute.xlu0 %4874
        %4876 = vset.pattern.permute.xlu0 0
        %4877 = vperm.xlu0 %4876, %v4266
        %v4878 = vpop.permute.xlu0 %4877
        %4879 = vset.pattern.permute.xlu0 0
        %4880 = vperm.xlu0 %4879, %v4267
        %v4881 = vpop.permute.xlu0 %4880
        %4882 = vset.pattern.permute.xlu0 0
        %4883 = vperm.xlu0 %4882, %v4268
        %v4884 = vpop.permute.xlu0 %4883
        %4885 = vset.pattern.permute.xlu0 0
        %4886 = vperm.xlu0 %4885, %v4269
        %v4887 = vpop.permute.xlu0 %4886
        %4888 = vset.pattern.permute.xlu0 0
        %4889 = vperm.xlu0 %4888, %v4270
        %v4890 = vpop.permute.xlu0 %4889
        %4891 = vset.pattern.permute.xlu0 0
        %4892 = vperm.xlu0 %4891, %v4271
        %v4893 = vpop.permute.xlu0 %4892
        %4894 = vset.pattern.permute.xlu0 0
        %4895 = vperm.xlu0 %4894, %v4272
        %v4896 = vpop.permute.xlu0 %4895
        %4897 = vset.pattern.permute.xlu0 0
        %4898 = vperm.xlu0 %4897, %v4273
        %v4899 = vpop.permute.xlu0 %4898
        %4900 = vset.pattern.permute.xlu0 0
        %4901 = vperm.xlu0 %4900, %v4274
        %v4902 = vpop.permute.xlu0 %4901
        %4903 = vset.pattern.permute.xlu0 0
        %4904 = vperm.xlu0 %4903, %v4275
        %v4905 = vpop.permute.xlu0 %4904
        %4906 = vset.pattern.permute.xlu0 0
        %4907 = vperm.xlu0 %4906, %v4276
        %v4908 = vpop.permute.xlu0 %4907
        %4909 = vset.pattern.permute.xlu0 0
        %4910 = vperm.xlu0 %4909, %v4277
        %v4911 = vpop.permute.xlu0 %4910
        %4912 = vset.pattern.permute.xlu0 0
        %4913 = vperm.xlu0 %4912, %v4278
        %v4914 = vpop.permute.xlu0 %4913
        %4915 = vset.pattern.permute.xlu0 0
        %4916 = vperm.xlu0 %4915, %v4279
        %v4917 = vpop.permute.xlu0 %4916
        %4918 = vset.pattern.permute.xlu0 0
        %4919 = vperm.xlu0 %4918, %v4280
        %v4920 = vpop.permute.xlu0 %4919
        %4921 = vset.pattern.permute.xlu0 0
        %4922 = vperm.xlu0 %4921, %v4281
        %v4923 = vpop.permute.xlu0 %4922
        %4924 = vset.pattern.permute.xlu0 0
        %4925 = vperm.xlu0 %4924, %v4282
        %v4926 = vpop.permute.xlu0 %4925
        %4927 = vset.pattern.permute.xlu0 0
        %4928 = vperm.xlu0 %4927, %v4283
        %v4929 = vpop.permute.xlu0 %4928
        %4930 = vset.pattern.permute.xlu0 0
        %4931 = vperm.xlu0 %4930, %v4284
        %v4932 = vpop.permute.xlu0 %4931
        %4933 = vset.pattern.permute.xlu0 0
        %4934 = vperm.xlu0 %4933, %v4285
        %v4935 = vpop.permute.xlu0 %4934
        %4936 = vset.pattern.permute.xlu0 0
        %4937 = vperm.xlu0 %4936, %v4286
        %v4938 = vpop.permute.xlu0 %4937
        %4939 = vset.pattern.permute.xlu0 0
        %4940 = vperm.xlu0 %4939, %v4287
        %v4941 = vpop.permute.xlu0 %4940
        %4942 = vset.pattern.permute.xlu0 0
        %4943 = vperm.xlu0 %4942, %v4288
        %v4944 = vpop.permute.xlu0 %4943
        %4945 = vset.pattern.permute.xlu0 0
        %4946 = vperm.xlu0 %4945, %v4289
        %v4947 = vpop.permute.xlu0 %4946
        %4948 = vset.pattern.permute.xlu0 0
        %4949 = vperm.xlu0 %4948, %v4290
        %v4950 = vpop.permute.xlu0 %4949
        %4951 = vset.pattern.permute.xlu0 0
        %4952 = vperm.xlu0 %4951, %v4291
        %v4953 = vpop.permute.xlu0 %4952
        %4954 = vset.pattern.permute.xlu0 0
        %4955 = vperm.xlu0 %4954, %v4292
        %v4956 = vpop.permute.xlu0 %4955
        %4957 = vset.pattern.permute.xlu0 0
        %4958 = vperm.xlu0 %4957, %v4293
        %v4959 = vpop.permute.xlu0 %4958
        %4960 = vset.pattern.permute.xlu0 0
        %4961 = vperm.xlu0 %4960, %v4294
        %v4962 = vpop.permute.xlu0 %4961
        %4963 = vset.pattern.permute.xlu0 0
        %4964 = vperm.xlu0 %4963, %v4295
        %v4965 = vpop.permute.xlu0 %4964
        %4966 = vset.pattern.permute.xlu0 0
        %4967 = vperm.xlu0 %4966, %v4296
        %v4968 = vpop.permute.xlu0 %4967
        %4969 = vset.pattern.permute.xlu0 0
        %4970 = vperm.xlu0 %4969, %v4297
        %v4971 = vpop.permute.xlu0 %4970
        %4972 = vset.pattern.permute.xlu0 0
        %4973 = vperm.xlu0 %4972, %v4298
        %v4974 = vpop.permute.xlu0 %4973
        %4975 = vset.pattern.permute.xlu0 0
        %4976 = vperm.xlu0 %4975, %v4299
        %v4977 = vpop.permute.xlu0 %4976
        %4978 = vset.pattern.permute.xlu0 0
        %4979 = vperm.xlu0 %4978, %v4300
        %v4980 = vpop.permute.xlu0 %4979
        %4981 = vset.pattern.permute.xlu0 0
        %4982 = vperm.xlu0 %4981, %v4301
        %v4983 = vpop.permute.xlu0 %4982
        %4984 = vset.pattern.permute.xlu0 0
        %4985 = vperm.xlu0 %4984, %v4302
        %v4986 = vpop.permute.xlu0 %4985
        %4987 = vset.pattern.permute.xlu0 0
        %4988 = vperm.xlu0 %4987, %v4303
        %v4989 = vpop.permute.xlu0 %4988
        %4990 = vset.pattern.permute.xlu0 0
        %4991 = vperm.xlu0 %4990, %v4304
        %v4992 = vpop.permute.xlu0 %4991
        %4993 = vset.pattern.permute.xlu0 0
        %4994 = vperm.xlu0 %4993, %v4305
        %v4995 = vpop.permute.xlu0 %4994
        %4996 = vset.pattern.permute.xlu0 0
        %4997 = vperm.xlu0 %4996, %v4306
        %v4998 = vpop.permute.xlu0 %4997
        %4999 = vset.pattern.permute.xlu0 0
        %5000 = vperm.xlu0 %4999, %v4307
        %v5001 = vpop.permute.xlu0 %5000
        %5002 = vset.pattern.permute.xlu0 0
        %5003 = vperm.xlu0 %5002, %v4308
        %v5004 = vpop.permute.xlu0 %5003
        %5005 = vset.pattern.permute.xlu0 0
        %5006 = vperm.xlu0 %5005, %v4309
        %v5007 = vpop.permute.xlu0 %5006
        %5008 = vset.pattern.permute.xlu0 0
        %5009 = vperm.xlu0 %5008, %v4310
        %v5010 = vpop.permute.xlu0 %5009
        %5011 = vset.pattern.permute.xlu0 0
        %5012 = vperm.xlu0 %5011, %v4311
        %v5013 = vpop.permute.xlu0 %5012
        %5014 = vset.pattern.permute.xlu0 0
        %5015 = vperm.xlu0 %5014, %v4312
        %v5016 = vpop.permute.xlu0 %5015
        %5017 = vset.pattern.permute.xlu0 0
        %5018 = vperm.xlu0 %5017, %v4313
        %v5019 = vpop.permute.xlu0 %5018
        %5020 = vset.pattern.permute.xlu0 0
        %5021 = vperm.xlu0 %5020, %v4314
        %v5022 = vpop.permute.xlu0 %5021
        %5023 = vset.pattern.permute.xlu0 0
        %5024 = vperm.xlu0 %5023, %v4315
        %v5025 = vpop.permute.xlu0 %5024
        %5026 = vset.pattern.permute.xlu0 0
        %5027 = vperm.xlu0 %5026, %v4316
        %v5028 = vpop.permute.xlu0 %5027
        %5029 = vset.pattern.permute.xlu0 0
        %5030 = vperm.xlu0 %5029, %v4317
        %v5031 = vpop.permute.xlu0 %5030
        %5032 = vset.pattern.permute.xlu0 0
        %5033 = vperm.xlu0 %5032, %v4318
        %v5034 = vpop.permute.xlu0 %5033
        %5035 = vset.pattern.permute.xlu0 0
        %5036 = vperm.xlu0 %5035, %v4319
        %v5037 = vpop.permute.xlu0 %5036
        %5038 = vset.pattern.permute.xlu0 0
        %5039 = vperm.xlu0 %5038, %v4320
        %v5040 = vpop.permute.xlu0 %5039
        %5041 = vset.pattern.permute.xlu0 0
        %5042 = vperm.xlu0 %5041, %v4321
        %v5043 = vpop.permute.xlu0 %5042
        %5044 = vset.pattern.permute.xlu0 0
        %5045 = vperm.xlu0 %5044, %v4322
        %v5046 = vpop.permute.xlu0 %5045
        %5047 = vset.pattern.permute.xlu0 0
        %5048 = vperm.xlu0 %5047, %v4323
        %v5049 = vpop.permute.xlu0 %5048
        %5050 = vset.pattern.permute.xlu0 0
        %5051 = vperm.xlu0 %5050, %v4324
        %v5052 = vpop.permute.xlu0 %5051
        %5053 = vset.pattern.permute.xlu0 0
        %5054 = vperm.xlu0 %5053, %v4325
        %v5055 = vpop.permute.xlu0 %5054
        %5056 = vset.pattern.permute.xlu0 0
        %5057 = vperm.xlu0 %5056, %v4326
        %v5058 = vpop.permute.xlu0 %5057
        %5059 = vset.pattern.permute.xlu0 0
        %5060 = vperm.xlu0 %5059, %v4327
        %v5061 = vpop.permute.xlu0 %5060
        %5062 = vset.pattern.permute.xlu0 0
        %5063 = vperm.xlu0 %5062, %v4328
        %v5064 = vpop.permute.xlu0 %5063
        %5065 = vset.pattern.permute.xlu0 0
        %5066 = vperm.xlu0 %5065, %v4329
        %v5067 = vpop.permute.xlu0 %5066
        %5068 = vset.pattern.permute.xlu0 0
        %5069 = vperm.xlu0 %5068, %v4330
        %v5070 = vpop.permute.xlu0 %5069
        %5071 = vset.pattern.permute.xlu0 0
        %5072 = vperm.xlu0 %5071, %v4331
        %v5073 = vpop.permute.xlu0 %5072
        %5074 = vset.pattern.permute.xlu0 0
        %5075 = vperm.xlu0 %5074, %v4332
        %v5076 = vpop.permute.xlu0 %5075
        %5077 = vset.pattern.permute.xlu0 0
        %5078 = vperm.xlu0 %5077, %v4333
        %v5079 = vpop.permute.xlu0 %5078
        %5080 = vset.pattern.permute.xlu0 0
        %5081 = vperm.xlu0 %5080, %v4334
        %v5082 = vpop.permute.xlu0 %5081
        %5083 = vset.pattern.permute.xlu0 0
        %5084 = vperm.xlu0 %5083, %v4335
        %v5085 = vpop.permute.xlu0 %5084
        %5086 = vset.pattern.permute.xlu0 0
        %5087 = vperm.xlu0 %5086, %v4336
        %v5088 = vpop.permute.xlu0 %5087
        %5089 = vset.pattern.permute.xlu0 0
        %5090 = vperm.xlu0 %5089, %v4337
        %v5091 = vpop.permute.xlu0 %5090
        %5092 = vset.pattern.permute.xlu0 0
        %5093 = vperm.xlu0 %5092, %v4338
        %v5094 = vpop.permute.xlu0 %5093
        %5095 = vset.pattern.permute.xlu0 0
        %5096 = vperm.xlu0 %5095, %v4339
        %v5097 = vpop.permute.xlu0 %5096
        %5098 = vset.pattern.permute.xlu0 0
        %5099 = vperm.xlu0 %5098, %v4340
        %v5100 = vpop.permute.xlu0 %5099
        %5101 = vset.pattern.permute.xlu0 0
        %5102 = vperm.xlu0 %5101, %v4341
        %v5103 = vpop.permute.xlu0 %5102
        %5104 = vset.pattern.permute.xlu0 0
        %5105 = vperm.xlu0 %5104, %v4342
        %v5106 = vpop.permute.xlu0 %5105
        %5107 = vset.pattern.permute.xlu0 0
        %5108 = vperm.xlu0 %5107, %v4343
        %v5109 = vpop.permute.xlu0 %5108
        %5110 = vset.pattern.permute.xlu0 0
        %5111 = vperm.xlu0 %5110, %v4344
        %v5112 = vpop.permute.xlu0 %5111
        %5113 = vset.pattern.permute.xlu0 0
        %5114 = vperm.xlu0 %5113, %v4345
        %v5115 = vpop.permute.xlu0 %5114
        %5116 = vset.pattern.permute.xlu0 0
        %5117 = vperm.xlu0 %5116, %v4346
        %v5118 = vpop.permute.xlu0 %5117
        %5119 = vset.pattern.permute.xlu0 0
        %5120 = vperm.xlu0 %5119, %v4347
        %v5121 = vpop.permute.xlu0 %5120
        %5122 = vset.pattern.permute.xlu0 0
        %5123 = vperm.xlu0 %5122, %v4348
        %v5124 = vpop.permute.xlu0 %5123
        %5125 = vset.pattern.permute.xlu0 0
        %5126 = vperm.xlu0 %5125, %v4349
        %v5127 = vpop.permute.xlu0 %5126
        %5128 = vset.pattern.permute.xlu0 0
        %5129 = vperm.xlu0 %5128, %v4350
        %v5130 = vpop.permute.xlu0 %5129
        %5131 = vset.pattern.permute.xlu0 0
        %5132 = vperm.xlu0 %5131, %v4351
        %v5133 = vpop.permute.xlu0 %5132
        %5134 = vset.pattern.permute.xlu0 0
        %5135 = vperm.xlu0 %5134, %v4352
        %v5136 = vpop.permute.xlu0 %5135
        %5137 = vset.pattern.permute.xlu0 0
        %5138 = vperm.xlu0 %5137, %v4353
        %v5139 = vpop.permute.xlu0 %5138
        %5140 = vset.pattern.permute.xlu0 0
        %5141 = vperm.xlu0 %5140, %v4354
        %v5142 = vpop.permute.xlu0 %5141
        %5143 = vset.pattern.permute.xlu0 0
        %5144 = vperm.xlu0 %5143, %v4355
        %v5145 = vpop.permute.xlu0 %5144
        %5146 = vset.pattern.permute.xlu0 0
        %5147 = vperm.xlu0 %5146, %v4356
        %v5148 = vpop.permute.xlu0 %5147
        %5149 = vset.pattern.permute.xlu0 0
        %5150 = vperm.xlu0 %5149, %v4357
        %v5151 = vpop.permute.xlu0 %5150
        %5152 = vset.pattern.permute.xlu0 0
        %5153 = vperm.xlu0 %5152, %v4358
        %v5154 = vpop.permute.xlu0 %5153
        %5155 = vset.pattern.permute.xlu0 0
        %5156 = vperm.xlu0 %5155, %v4359
        %v5157 = vpop.permute.xlu0 %5156
        %5158 = vset.pattern.permute.xlu0 0
        %5159 = vperm.xlu0 %5158, %v4360
        %v5160 = vpop.permute.xlu0 %5159
        %5161 = vset.pattern.permute.xlu0 0
        %5162 = vperm.xlu0 %5161, %v4361
        %v5163 = vpop.permute.xlu0 %5162
        %5164 = vset.pattern.permute.xlu0 0
        %5165 = vperm.xlu0 %5164, %v4362
        %v5166 = vpop.permute.xlu0 %5165
        %5167 = vset.pattern.permute.xlu0 0
        %5168 = vperm.xlu0 %5167, %v4363
        %v5169 = vpop.permute.xlu0 %5168
        %5170 = vset.pattern.permute.xlu0 0
        %5171 = vperm.xlu0 %5170, %v4364
        %v5172 = vpop.permute.xlu0 %5171
        %5173 = vset.pattern.permute.xlu0 0
        %5174 = vperm.xlu0 %5173, %v4365
        %v5175 = vpop.permute.xlu0 %5174
        %5176 = vset.pattern.permute.xlu0 0
        %5177 = vperm.xlu0 %5176, %v4366
        %v5178 = vpop.permute.xlu0 %5177
        %5179 = vset.pattern.permute.xlu0 0
        %5180 = vperm.xlu0 %5179, %v4367
        %v5181 = vpop.permute.xlu0 %5180
        %5182 = vset.pattern.permute.xlu0 0
        %5183 = vperm.xlu0 %5182, %v4368
        %v5184 = vpop.permute.xlu0 %5183
        %5185 = vset.pattern.permute.xlu0 0
        %5186 = vperm.xlu0 %5185, %v4369
        %v5187 = vpop.permute.xlu0 %5186
        %5188 = vset.pattern.permute.xlu0 0
        %5189 = vperm.xlu0 %5188, %v4370
        %v5190 = vpop.permute.xlu0 %5189
        %5191 = vset.pattern.permute.xlu0 0
        %5192 = vperm.xlu0 %5191, %v4371
        %v5193 = vpop.permute.xlu0 %5192
        %5194 = vset.pattern.permute.xlu0 0
        %5195 = vperm.xlu0 %5194, %v4372
        %v5196 = vpop.permute.xlu0 %5195
        %5197 = vset.pattern.permute.xlu0 0
        %5198 = vperm.xlu0 %5197, %v4373
        %v5199 = vpop.permute.xlu0 %5198
        %5200 = vset.pattern.permute.xlu0 0
        %5201 = vperm.xlu0 %5200, %v4374
        %v5202 = vpop.permute.xlu0 %5201
        %5203 = vset.pattern.permute.xlu0 0
        %5204 = vperm.xlu0 %5203, %v4375
        %v5205 = vpop.permute.xlu0 %5204
        %5206 = vset.pattern.permute.xlu0 0
        %5207 = vperm.xlu0 %5206, %v4376
        %v5208 = vpop.permute.xlu0 %5207
        %5209 = vset.pattern.permute.xlu0 0
        %5210 = vperm.xlu0 %5209, %v4377
        %v5211 = vpop.permute.xlu0 %5210
        %5212 = vset.pattern.permute.xlu0 0
        %5213 = vperm.xlu0 %5212, %v4378
        %v5214 = vpop.permute.xlu0 %5213
        %5215 = vset.pattern.permute.xlu0 0
        %5216 = vperm.xlu0 %5215, %v4379
        %v5217 = vpop.permute.xlu0 %5216
        %5218 = vset.pattern.permute.xlu0 0
        %5219 = vperm.xlu0 %5218, %v4380
        %v5220 = vpop.permute.xlu0 %5219
        %5221 = vset.pattern.permute.xlu0 0
        %5222 = vperm.xlu0 %5221, %v4381
        %v5223 = vpop.permute.xlu0 %5222
        %5224 = vset.pattern.permute.xlu0 0
        %5225 = vperm.xlu0 %5224, %v4382
        %v5226 = vpop.permute.xlu0 %5225
        %5227 = vset.pattern.permute.xlu0 0
        %5228 = vperm.xlu0 %5227, %v4383
        %v5229 = vpop.permute.xlu0 %5228
        %5230 = vset.pattern.permute.xlu0 0
        %5231 = vperm.xlu0 %5230, %v4384
        %v5232 = vpop.permute.xlu0 %5231
        %5233 = vset.pattern.permute.xlu0 0
        %5234 = vperm.xlu0 %5233, %v4385
        %v5235 = vpop.permute.xlu0 %5234
        %5236 = vset.pattern.permute.xlu0 0
        %5237 = vperm.xlu0 %5236, %v4386
        %v5238 = vpop.permute.xlu0 %5237
        %5239 = vset.pattern.permute.xlu0 0
        %5240 = vperm.xlu0 %5239, %v4387
        %v5241 = vpop.permute.xlu0 %5240
        %5242 = vset.pattern.permute.xlu0 0
        %5243 = vperm.xlu0 %5242, %v4388
        %v5244 = vpop.permute.xlu0 %5243
        %5245 = vset.pattern.permute.xlu0 0
        %5246 = vperm.xlu0 %5245, %v4389
        %v5247 = vpop.permute.xlu0 %5246
        %5248 = vset.pattern.permute.xlu0 0
        %5249 = vperm.xlu0 %5248, %v4390
        %v5250 = vpop.permute.xlu0 %5249
        %5251 = vset.pattern.permute.xlu0 0
        %5252 = vperm.xlu0 %5251, %v4391
        %v5253 = vpop.permute.xlu0 %5252
        %5254 = vset.pattern.permute.xlu0 0
        %5255 = vperm.xlu0 %5254, %v4392
        %v5256 = vpop.permute.xlu0 %5255
        %5257 = vset.pattern.permute.xlu0 0
        %5258 = vperm.xlu0 %5257, %v4393
        %v5259 = vpop.permute.xlu0 %5258
        %5260 = vset.pattern.permute.xlu0 0
        %5261 = vperm.xlu0 %5260, %v4394
        %v5262 = vpop.permute.xlu0 %5261
        %5263 = vset.pattern.permute.xlu0 0
        %5264 = vperm.xlu0 %5263, %v4395
        %v5265 = vpop.permute.xlu0 %5264
        %5266 = vset.pattern.permute.xlu0 0
        %5267 = vperm.xlu0 %5266, %v4396
        %v5268 = vpop.permute.xlu0 %5267
        %5269 = vset.pattern.permute.xlu0 0
        %5270 = vperm.xlu0 %5269, %v4397
        %v5271 = vpop.permute.xlu0 %5270
        %5272 = vset.pattern.permute.xlu0 0
        %5273 = vperm.xlu0 %5272, %v4398
        %v5274 = vpop.permute.xlu0 %5273
        %5275 = vset.pattern.permute.xlu0 0
        %5276 = vperm.xlu0 %5275, %v4399
        %v5277 = vpop.permute.xlu0 %5276
        %5278 = vset.pattern.permute.xlu0 0
        %5279 = vperm.xlu0 %5278, %v4400
        %v5280 = vpop.permute.xlu0 %5279
        %5281 = vset.pattern.permute.xlu0 0
        %5282 = vperm.xlu0 %5281, %v4401
        %v5283 = vpop.permute.xlu0 %5282
        %5284 = vset.pattern.permute.xlu0 0
        %5285 = vperm.xlu0 %5284, %v4402
        %v5286 = vpop.permute.xlu0 %5285
        %5287 = vset.pattern.permute.xlu0 0
        %5288 = vperm.xlu0 %5287, %v4403
        %v5289 = vpop.permute.xlu0 %5288
        %5290 = vset.pattern.permute.xlu0 0
        %5291 = vperm.xlu0 %5290, %v4404
        %v5292 = vpop.permute.xlu0 %5291
        %5293 = vset.pattern.permute.xlu0 0
        %5294 = vperm.xlu0 %5293, %v4405
        %v5295 = vpop.permute.xlu0 %5294
        %5296 = vset.pattern.permute.xlu0 0
        %5297 = vperm.xlu0 %5296, %v4406
        %v5298 = vpop.permute.xlu0 %5297
        %5299 = vset.pattern.permute.xlu0 0
        %5300 = vperm.xlu0 %5299, %v4407
        %v5301 = vpop.permute.xlu0 %5300
        %5302 = vset.pattern.permute.xlu0 0
        %5303 = vperm.xlu0 %5302, %v4408
        %v5304 = vpop.permute.xlu0 %5303
        %5305 = vset.pattern.permute.xlu0 0
        %5306 = vperm.xlu0 %5305, %v4409
        %v5307 = vpop.permute.xlu0 %5306
        %5308 = vset.pattern.permute.xlu0 0
        %5309 = vperm.xlu0 %5308, %v4410
        %v5310 = vpop.permute.xlu0 %5309
        %5311 = vset.pattern.permute.xlu0 0
        %5312 = vperm.xlu0 %5311, %v4411
        %v5313 = vpop.permute.xlu0 %5312
        %5314 = vset.pattern.permute.xlu0 0
        %5315 = vperm.xlu0 %5314, %v4412
        %v5316 = vpop.permute.xlu0 %5315
        %5317 = vset.pattern.permute.xlu0 0
        %5318 = vperm.xlu0 %5317, %v4413
        %v5319 = vpop.permute.xlu0 %5318
        %5320 = vset.pattern.permute.xlu0 0
        %5321 = vperm.xlu0 %5320, %v4414
        %v5322 = vpop.permute.xlu0 %5321
        %5323 = vset.pattern.permute.xlu0 0
        %5324 = vperm.xlu0 %5323, %v4415
        %v5325 = vpop.permute.xlu0 %5324
        %5326 = vset.pattern.permute.xlu0 0
        %5327 = vperm.xlu0 %5326, %v4416
        %v5328 = vpop.permute.xlu0 %5327
        %5329 = vset.pattern.permute.xlu0 0
        %5330 = vperm.xlu0 %5329, %v4417
        %v5331 = vpop.permute.xlu0 %5330
        %5332 = vset.pattern.permute.xlu0 0
        %5333 = vperm.xlu0 %5332, %v4418
        %v5334 = vpop.permute.xlu0 %5333
        %5335 = vset.pattern.permute.xlu0 0
        %5336 = vperm.xlu0 %5335, %v4419
        %v5337 = vpop.permute.xlu0 %5336
        %5338 = vset.pattern.permute.xlu0 0
        %5339 = vperm.xlu0 %5338, %v4420
        %v5340 = vpop.permute.xlu0 %5339
        %5341 = vset.pattern.permute.xlu0 0
        %5342 = vperm.xlu0 %5341, %v4421
        %v5343 = vpop.permute.xlu0 %5342
        %5344 = vset.pattern.permute.xlu0 0
        %5345 = vperm.xlu0 %5344, %v4422
        %v5346 = vpop.permute.xlu0 %5345
        %5347 = vset.pattern.permute.xlu0 0
        %5348 = vperm.xlu0 %5347, %v4423
        %v5349 = vpop.permute.xlu0 %5348
        %5350 = vset.pattern.permute.xlu0 0
        %5351 = vperm.xlu0 %5350, %v4424
        %v5352 = vpop.permute.xlu0 %5351
        %5353 = vset.pattern.permute.xlu0 0
        %5354 = vperm.xlu0 %5353, %v4425
        %v5355 = vpop.permute.xlu0 %5354
        %5356 = vset.pattern.permute.xlu0 0
        %5357 = vperm.xlu0 %5356, %v4426
        %v5358 = vpop.permute.xlu0 %5357
        %5359 = vset.pattern.permute.xlu0 0
        %5360 = vperm.xlu0 %5359, %v4427
        %v5361 = vpop.permute.xlu0 %5360
        %5362 = vset.pattern.permute.xlu0 0
        %5363 = vperm.xlu0 %5362, %v4428
        %v5364 = vpop.permute.xlu0 %5363
        %5365 = vset.pattern.permute.xlu0 0
        %5366 = vperm.xlu0 %5365, %v4429
        %v5367 = vpop.permute.xlu0 %5366
        %5368 = vset.pattern.permute.xlu0 0
        %5369 = vperm.xlu0 %5368, %v4430
        %v5370 = vpop.permute.xlu0 %5369
        %5371 = vset.pattern.permute.xlu0 0
        %5372 = vperm.xlu0 %5371, %v4431
        %v5373 = vpop.permute.xlu0 %5372
        %5374 = vset.pattern.permute.xlu0 0
        %5375 = vperm.xlu0 %5374, %v4432
        %v5376 = vpop.permute.xlu0 %5375
        %5377 = vset.pattern.permute.xlu0 0
        %5378 = vperm.xlu0 %5377, %v4433
        %v5379 = vpop.permute.xlu0 %5378
        %5380 = vset.pattern.permute.xlu0 0
        %5381 = vperm.xlu0 %5380, %v4434
        %v5382 = vpop.permute.xlu0 %5381
        %5383 = vset.pattern.permute.xlu0 0
        %5384 = vperm.xlu0 %5383, %v4435
        %v5385 = vpop.permute.xlu0 %5384
        %5386 = vset.pattern.permute.xlu0 0
        %5387 = vperm.xlu0 %5386, %v4436
        %v5388 = vpop.permute.xlu0 %5387
        %5389 = vset.pattern.permute.xlu0 0
        %5390 = vperm.xlu0 %5389, %v4437
        %v5391 = vpop.permute.xlu0 %5390
        %5392 = vset.pattern.permute.xlu0 0
        %5393 = vperm.xlu0 %5392, %v4438
        %v5394 = vpop.permute.xlu0 %5393
        %5395 = vset.pattern.permute.xlu0 0
        %5396 = vperm.xlu0 %5395, %v4439
        %v5397 = vpop.permute.xlu0 %5396
        %5398 = vset.pattern.permute.xlu0 0
        %5399 = vperm.xlu0 %5398, %v4440
        %v5400 = vpop.permute.xlu0 %5399
        %5401 = vset.pattern.permute.xlu0 0
        %5402 = vperm.xlu0 %5401, %v4441
        %v5403 = vpop.permute.xlu0 %5402
        %5404 = vset.pattern.permute.xlu0 0
        %5405 = vperm.xlu0 %5404, %v4442
        %v5406 = vpop.permute.xlu0 %5405
        %5407 = vset.pattern.permute.xlu0 0
        %5408 = vperm.xlu0 %5407, %v4443
        %v5409 = vpop.permute.xlu0 %5408
        %5410 = vset.pattern.permute.xlu0 0
        %5411 = vperm.xlu0 %5410, %v4444
        %v5412 = vpop.permute.xlu0 %5411
        %5413 = vset.pattern.permute.xlu0 0
        %5414 = vperm.xlu0 %5413, %v4445
        %v5415 = vpop.permute.xlu0 %5414
        %5416 = vset.pattern.permute.xlu0 0
        %5417 = vperm.xlu0 %5416, %v4446
        %v5418 = vpop.permute.xlu0 %5417
        %5419 = vset.pattern.permute.xlu0 0
        %5420 = vperm.xlu0 %5419, %v4447
        %v5421 = vpop.permute.xlu0 %5420
        %5422 = vset.pattern.permute.xlu0 0
        %5423 = vperm.xlu0 %5422, %v4448
        %v5424 = vpop.permute.xlu0 %5423
        %5425 = vset.pattern.permute.xlu0 0
        %5426 = vperm.xlu0 %5425, %v4449
        %v5427 = vpop.permute.xlu0 %5426
        %5428 = vset.pattern.permute.xlu0 0
        %5429 = vperm.xlu0 %5428, %v4450
        %v5430 = vpop.permute.xlu0 %5429
        %5431 = vset.pattern.permute.xlu0 0
        %5432 = vperm.xlu0 %5431, %v4451
        %v5433 = vpop.permute.xlu0 %5432
        %5434 = vset.pattern.permute.xlu0 0
        %5435 = vperm.xlu0 %5434, %v4452
        %v5436 = vpop.permute.xlu0 %5435
        %5437 = vset.pattern.permute.xlu0 0
        %5438 = vperm.xlu0 %5437, %v4453
        %v5439 = vpop.permute.xlu0 %5438
        %5440 = vset.pattern.permute.xlu0 0
        %5441 = vperm.xlu0 %5440, %v4454
        %v5442 = vpop.permute.xlu0 %5441
        %5443 = vset.pattern.permute.xlu0 0
        %5444 = vperm.xlu0 %5443, %v4455
        %v5445 = vpop.permute.xlu0 %5444
        %5446 = vset.pattern.permute.xlu0 0
        %5447 = vperm.xlu0 %5446, %v4456
        %v5448 = vpop.permute.xlu0 %5447
        %5449 = vset.pattern.permute.xlu0 0
        %5450 = vperm.xlu0 %5449, %v4457
        %v5451 = vpop.permute.xlu0 %5450
        %5452 = vset.pattern.permute.xlu0 0
        %5453 = vperm.xlu0 %5452, %v4458
        %v5454 = vpop.permute.xlu0 %5453
        %5455 = vset.pattern.permute.xlu0 0
        %5456 = vperm.xlu0 %5455, %v4459
        %v5457 = vpop.permute.xlu0 %5456
        %5458 = vset.pattern.permute.xlu0 0
        %5459 = vperm.xlu0 %5458, %v4460
        %v5460 = vpop.permute.xlu0 %5459
        %5461 = vset.pattern.permute.xlu0 0
        %5462 = vperm.xlu0 %5461, %v4461
        %v5463 = vpop.permute.xlu0 %5462
        %5464 = vset.pattern.permute.xlu0 0
        %5465 = vperm.xlu0 %5464, %v4462
        %v5466 = vpop.permute.xlu0 %5465
        %5467 = vset.pattern.permute.xlu0 0
        %5468 = vperm.xlu0 %5467, %v4463
        %v5469 = vpop.permute.xlu0 %5468
        %5470 = vset.pattern.permute.xlu0 0
        %5471 = vperm.xlu0 %5470, %v4464
        %v5472 = vpop.permute.xlu0 %5471
        %5473 = vset.pattern.permute.xlu0 0
        %5474 = vperm.xlu0 %5473, %v4465
        %v5475 = vpop.permute.xlu0 %5474
        %5476 = vset.pattern.permute.xlu0 0
        %5477 = vperm.xlu0 %5476, %v4466
        %v5478 = vpop.permute.xlu0 %5477
        %5479 = vset.pattern.permute.xlu0 0
        %5480 = vperm.xlu0 %5479, %v4467
        %v5481 = vpop.permute.xlu0 %5480
        %5482 = vset.pattern.permute.xlu0 0
        %5483 = vperm.xlu0 %5482, %v4468
        %v5484 = vpop.permute.xlu0 %5483
        %5485 = vset.pattern.permute.xlu0 0
        %5486 = vperm.xlu0 %5485, %v4469
        %v5487 = vpop.permute.xlu0 %5486
        %5488 = vset.pattern.permute.xlu0 0
        %5489 = vperm.xlu0 %5488, %v4470
        %v5490 = vpop.permute.xlu0 %5489
        %5491 = vset.pattern.permute.xlu0 0
        %5492 = vperm.xlu0 %5491, %v4471
        %v5493 = vpop.permute.xlu0 %5492
        %5494 = vset.pattern.permute.xlu0 0
        %5495 = vperm.xlu0 %5494, %v4472
        %v5496 = vpop.permute.xlu0 %5495
        %v5497 = vlaneseq
        %v5498 = vand.u32 %v5497, 127
        %v5499 = vlaneseq
        %v5500 = vshrl.u32 %v5499, 7
        %v5501 = vsub.s32 %v5498, %v5500
        %v5502 = vrot.slane %v4731, %v5501
        %v5503 = vadd.s32 %v5498, 4294967288
        %v5504 = vlaneseq
        %v5505 = vshrl.u32 %v5504, 7
        %v5506 = vsub.s32 %v5503, %v5505
        %v5507 = vrot.slane %v4734, %v5506
        %vm5508 = vcmask 130112
        %v5509 = vsel %vm5508, %v5507, %v5502
        %v5510 = vadd.s32 %v5498, 4294967280
        %v5511 = vlaneseq
        %v5512 = vshrl.u32 %v5511, 7
        %v5513 = vsub.s32 %v5510, %v5512
        %v5514 = vrot.slane %v4737, %v5513
        %vm5515 = vcmask 195712
        %v5516 = vsel %vm5515, %v5514, %v5509
        %v5517 = vadd.s32 %v5498, 4294967272
        %v5518 = vlaneseq
        %v5519 = vshrl.u32 %v5518, 7
        %v5520 = vsub.s32 %v5517, %v5519
        %v5521 = vrot.slane %v4740, %v5520
        %vm5522 = vcmask 261312
        %v5523 = vsel %vm5522, %v5521, %v5516
        %v5524 = vadd.s32 %v5498, 4294967264
        %v5525 = vlaneseq
        %v5526 = vshrl.u32 %v5525, 7
        %v5527 = vsub.s32 %v5524, %v5526
        %v5528 = vrot.slane %v4743, %v5527
        %vm5529 = vcmask 326912
        %v5530 = vsel %vm5529, %v5528, %v5523
        %v5531 = vadd.s32 %v5498, 4294967256
        %v5532 = vlaneseq
        %v5533 = vshrl.u32 %v5532, 7
        %v5534 = vsub.s32 %v5531, %v5533
        %v5535 = vrot.slane %v4746, %v5534
        %vm5536 = vcmask 392512
        %v5537 = vsel %vm5536, %v5535, %v5530
        %v5538 = vadd.s32 %v5498, 4294967248
        %v5539 = vlaneseq
        %v5540 = vshrl.u32 %v5539, 7
        %v5541 = vsub.s32 %v5538, %v5540
        %v5542 = vrot.slane %v4749, %v5541
        %vm5543 = vcmask 458112
        %v5544 = vsel %vm5543, %v5542, %v5537
        %v5545 = vadd.s32 %v5498, 4294967240
        %v5546 = vlaneseq
        %v5547 = vshrl.u32 %v5546, 7
        %v5548 = vsub.s32 %v5545, %v5547
        %v5549 = vrot.slane %v4752, %v5548
        %vm5550 = vcmask 523712
        %v5551 = vsel %vm5550, %v5549, %v5544
        %v5552 = vadd.s32 %v5498, 4294967232
        %v5553 = vlaneseq
        %v5554 = vshrl.u32 %v5553, 7
        %v5555 = vsub.s32 %v5552, %v5554
        %v5556 = vrot.slane %v4755, %v5555
        %vm5557 = vcmask 589312
        %v5558 = vsel %vm5557, %v5556, %v5551
        %v5559 = vadd.s32 %v5498, 4294967224
        %v5560 = vlaneseq
        %v5561 = vshrl.u32 %v5560, 7
        %v5562 = vsub.s32 %v5559, %v5561
        %v5563 = vrot.slane %v4758, %v5562
        %vm5564 = vcmask 654912
        %v5565 = vsel %vm5564, %v5563, %v5558
        %v5566 = vadd.s32 %v5498, 4294967216
        %v5567 = vlaneseq
        %v5568 = vshrl.u32 %v5567, 7
        %v5569 = vsub.s32 %v5566, %v5568
        %v5570 = vrot.slane %v4761, %v5569
        %vm5571 = vcmask 720512
        %v5572 = vsel %vm5571, %v5570, %v5565
        %v5573 = vadd.s32 %v5498, 4294967208
        %v5574 = vlaneseq
        %v5575 = vshrl.u32 %v5574, 7
        %v5576 = vsub.s32 %v5573, %v5575
        %v5577 = vrot.slane %v4764, %v5576
        %vm5578 = vcmask 786112
        %v5579 = vsel %vm5578, %v5577, %v5572
        %v5580 = vadd.s32 %v5498, 4294967200
        %v5581 = vlaneseq
        %v5582 = vshrl.u32 %v5581, 7
        %v5583 = vsub.s32 %v5580, %v5582
        %v5584 = vrot.slane %v4767, %v5583
        %vm5585 = vcmask 851712
        %v5586 = vsel %vm5585, %v5584, %v5579
        %v5587 = vadd.s32 %v5498, 4294967192
        %v5588 = vlaneseq
        %v5589 = vshrl.u32 %v5588, 7
        %v5590 = vsub.s32 %v5587, %v5589
        %v5591 = vrot.slane %v4770, %v5590
        %vm5592 = vcmask 917312
        %v5593 = vsel %vm5592, %v5591, %v5586
        %v5594 = vadd.s32 %v5498, 4294967184
        %v5595 = vlaneseq
        %v5596 = vshrl.u32 %v5595, 7
        %v5597 = vsub.s32 %v5594, %v5596
        %v5598 = vrot.slane %v4773, %v5597
        %vm5599 = vcmask 982912
        %v5600 = vsel %vm5599, %v5598, %v5593
        %v5601 = vadd.s32 %v5498, 4294967176
        %v5602 = vlaneseq
        %v5603 = vshrl.u32 %v5602, 7
        %v5604 = vsub.s32 %v5601, %v5603
        %v5605 = vrot.slane %v4776, %v5604
        %vm5606 = vcmask 1048512
        %v5607 = vsel %vm5606, %v5605, %v5600
        %v5608 = vlaneseq
        %v5609 = vshrl.u32 %v5608, 7
        %v5610 = vsub.s32 %v5498, %v5609
        %v5611 = vrot.slane %v4779, %v5610
        %v5612 = vlaneseq
        %v5613 = vshrl.u32 %v5612, 7
        %v5614 = vsub.s32 %v5503, %v5613
        %v5615 = vrot.slane %v4782, %v5614
        %v5616 = vsel %vm5508, %v5615, %v5611
        %v5617 = vlaneseq
        %v5618 = vshrl.u32 %v5617, 7
        %v5619 = vsub.s32 %v5510, %v5618
        %v5620 = vrot.slane %v4785, %v5619
        %v5621 = vsel %vm5515, %v5620, %v5616
        %v5622 = vlaneseq
        %v5623 = vshrl.u32 %v5622, 7
        %v5624 = vsub.s32 %v5517, %v5623
        %v5625 = vrot.slane %v4788, %v5624
        %v5626 = vsel %vm5522, %v5625, %v5621
        %v5627 = vlaneseq
        %v5628 = vshrl.u32 %v5627, 7
        %v5629 = vsub.s32 %v5524, %v5628
        %v5630 = vrot.slane %v4791, %v5629
        %v5631 = vsel %vm5529, %v5630, %v5626
        %v5632 = vlaneseq
        %v5633 = vshrl.u32 %v5632, 7
        %v5634 = vsub.s32 %v5531, %v5633
        %v5635 = vrot.slane %v4794, %v5634
        %v5636 = vsel %vm5536, %v5635, %v5631
        %v5637 = vlaneseq
        %v5638 = vshrl.u32 %v5637, 7
        %v5639 = vsub.s32 %v5538, %v5638
        %v5640 = vrot.slane %v4797, %v5639
        %v5641 = vsel %vm5543, %v5640, %v5636
        %v5642 = vlaneseq
        %v5643 = vshrl.u32 %v5642, 7
        %v5644 = vsub.s32 %v5545, %v5643
        %v5645 = vrot.slane %v4800, %v5644
        %v5646 = vsel %vm5550, %v5645, %v5641
        %v5647 = vlaneseq
        %v5648 = vshrl.u32 %v5647, 7
        %v5649 = vsub.s32 %v5552, %v5648
        %v5650 = vrot.slane %v4803, %v5649
        %v5651 = vsel %vm5557, %v5650, %v5646
        %v5652 = vlaneseq
        %v5653 = vshrl.u32 %v5652, 7
        %v5654 = vsub.s32 %v5559, %v5653
        %v5655 = vrot.slane %v4806, %v5654
        %v5656 = vsel %vm5564, %v5655, %v5651
        %v5657 = vlaneseq
        %v5658 = vshrl.u32 %v5657, 7
        %v5659 = vsub.s32 %v5566, %v5658
        %v5660 = vrot.slane %v4809, %v5659
        %v5661 = vsel %vm5571, %v5660, %v5656
        %v5662 = vlaneseq
        %v5663 = vshrl.u32 %v5662, 7
        %v5664 = vsub.s32 %v5573, %v5663
        %v5665 = vrot.slane %v4812, %v5664
        %v5666 = vsel %vm5578, %v5665, %v5661
        %v5667 = vlaneseq
        %v5668 = vshrl.u32 %v5667, 7
        %v5669 = vsub.s32 %v5580, %v5668
        %v5670 = vrot.slane %v4815, %v5669
        %v5671 = vsel %vm5585, %v5670, %v5666
        %v5672 = vlaneseq
        %v5673 = vshrl.u32 %v5672, 7
        %v5674 = vsub.s32 %v5587, %v5673
        %v5675 = vrot.slane %v4818, %v5674
        %v5676 = vsel %vm5592, %v5675, %v5671
        %v5677 = vlaneseq
        %v5678 = vshrl.u32 %v5677, 7
        %v5679 = vsub.s32 %v5594, %v5678
        %v5680 = vrot.slane %v4821, %v5679
        %v5681 = vsel %vm5599, %v5680, %v5676
        %v5682 = vlaneseq
        %v5683 = vshrl.u32 %v5682, 7
        %v5684 = vsub.s32 %v5601, %v5683
        %v5685 = vrot.slane %v4824, %v5684
        %v5686 = vsel %vm5606, %v5685, %v5681
        %v5687 = vlaneseq
        %v5688 = vshrl.u32 %v5687, 7
        %v5689 = vsub.s32 %v5498, %v5688
        %v5690 = vrot.slane %v4827, %v5689
        %v5691 = vlaneseq
        %v5692 = vshrl.u32 %v5691, 7
        %v5693 = vsub.s32 %v5503, %v5692
        %v5694 = vrot.slane %v4830, %v5693
        %v5695 = vsel %vm5508, %v5694, %v5690
        %v5696 = vlaneseq
        %v5697 = vshrl.u32 %v5696, 7
        %v5698 = vsub.s32 %v5510, %v5697
        %v5699 = vrot.slane %v4833, %v5698
        %v5700 = vsel %vm5515, %v5699, %v5695
        %v5701 = vlaneseq
        %v5702 = vshrl.u32 %v5701, 7
        %v5703 = vsub.s32 %v5517, %v5702
        %v5704 = vrot.slane %v4836, %v5703
        %v5705 = vsel %vm5522, %v5704, %v5700
        %v5706 = vlaneseq
        %v5707 = vshrl.u32 %v5706, 7
        %v5708 = vsub.s32 %v5524, %v5707
        %v5709 = vrot.slane %v4839, %v5708
        %v5710 = vsel %vm5529, %v5709, %v5705
        %v5711 = vlaneseq
        %v5712 = vshrl.u32 %v5711, 7
        %v5713 = vsub.s32 %v5531, %v5712
        %v5714 = vrot.slane %v4842, %v5713
        %v5715 = vsel %vm5536, %v5714, %v5710
        %v5716 = vlaneseq
        %v5717 = vshrl.u32 %v5716, 7
        %v5718 = vsub.s32 %v5538, %v5717
        %v5719 = vrot.slane %v4845, %v5718
        %v5720 = vsel %vm5543, %v5719, %v5715
        %v5721 = vlaneseq
        %v5722 = vshrl.u32 %v5721, 7
        %v5723 = vsub.s32 %v5545, %v5722
        %v5724 = vrot.slane %v4848, %v5723
        %v5725 = vsel %vm5550, %v5724, %v5720
        %v5726 = vlaneseq
        %v5727 = vshrl.u32 %v5726, 7
        %v5728 = vsub.s32 %v5552, %v5727
        %v5729 = vrot.slane %v4851, %v5728
        %v5730 = vsel %vm5557, %v5729, %v5725
        %v5731 = vlaneseq
        %v5732 = vshrl.u32 %v5731, 7
        %v5733 = vsub.s32 %v5559, %v5732
        %v5734 = vrot.slane %v4854, %v5733
        %v5735 = vsel %vm5564, %v5734, %v5730
        %v5736 = vlaneseq
        %v5737 = vshrl.u32 %v5736, 7
        %v5738 = vsub.s32 %v5566, %v5737
        %v5739 = vrot.slane %v4857, %v5738
        %v5740 = vsel %vm5571, %v5739, %v5735
        %v5741 = vlaneseq
        %v5742 = vshrl.u32 %v5741, 7
        %v5743 = vsub.s32 %v5573, %v5742
        %v5744 = vrot.slane %v4860, %v5743
        %v5745 = vsel %vm5578, %v5744, %v5740
        %v5746 = vlaneseq
        %v5747 = vshrl.u32 %v5746, 7
        %v5748 = vsub.s32 %v5580, %v5747
        %v5749 = vrot.slane %v4863, %v5748
        %v5750 = vsel %vm5585, %v5749, %v5745
        %v5751 = vlaneseq
        %v5752 = vshrl.u32 %v5751, 7
        %v5753 = vsub.s32 %v5587, %v5752
        %v5754 = vrot.slane %v4866, %v5753
        %v5755 = vsel %vm5592, %v5754, %v5750
        %v5756 = vlaneseq
        %v5757 = vshrl.u32 %v5756, 7
        %v5758 = vsub.s32 %v5594, %v5757
        %v5759 = vrot.slane %v4869, %v5758
        %v5760 = vsel %vm5599, %v5759, %v5755
        %v5761 = vlaneseq
        %v5762 = vshrl.u32 %v5761, 7
        %v5763 = vsub.s32 %v5601, %v5762
        %v5764 = vrot.slane %v4872, %v5763
        %v5765 = vsel %vm5606, %v5764, %v5760
        %v5766 = vlaneseq
        %v5767 = vshrl.u32 %v5766, 7
        %v5768 = vsub.s32 %v5498, %v5767
        %v5769 = vrot.slane %v4875, %v5768
        %v5770 = vlaneseq
        %v5771 = vshrl.u32 %v5770, 7
        %v5772 = vsub.s32 %v5503, %v5771
        %v5773 = vrot.slane %v4878, %v5772
        %v5774 = vsel %vm5508, %v5773, %v5769
        %v5775 = vlaneseq
        %v5776 = vshrl.u32 %v5775, 7
        %v5777 = vsub.s32 %v5510, %v5776
        %v5778 = vrot.slane %v4881, %v5777
        %v5779 = vsel %vm5515, %v5778, %v5774
        %v5780 = vlaneseq
        %v5781 = vshrl.u32 %v5780, 7
        %v5782 = vsub.s32 %v5517, %v5781
        %v5783 = vrot.slane %v4884, %v5782
        %v5784 = vsel %vm5522, %v5783, %v5779
        %v5785 = vlaneseq
        %v5786 = vshrl.u32 %v5785, 7
        %v5787 = vsub.s32 %v5524, %v5786
        %v5788 = vrot.slane %v4887, %v5787
        %v5789 = vsel %vm5529, %v5788, %v5784
        %v5790 = vlaneseq
        %v5791 = vshrl.u32 %v5790, 7
        %v5792 = vsub.s32 %v5531, %v5791
        %v5793 = vrot.slane %v4890, %v5792
        %v5794 = vsel %vm5536, %v5793, %v5789
        %v5795 = vlaneseq
        %v5796 = vshrl.u32 %v5795, 7
        %v5797 = vsub.s32 %v5538, %v5796
        %v5798 = vrot.slane %v4893, %v5797
        %v5799 = vsel %vm5543, %v5798, %v5794
        %v5800 = vlaneseq
        %v5801 = vshrl.u32 %v5800, 7
        %v5802 = vsub.s32 %v5545, %v5801
        %v5803 = vrot.slane %v4896, %v5802
        %v5804 = vsel %vm5550, %v5803, %v5799
        %v5805 = vlaneseq
        %v5806 = vshrl.u32 %v5805, 7
        %v5807 = vsub.s32 %v5552, %v5806
        %v5808 = vrot.slane %v4899, %v5807
        %v5809 = vsel %vm5557, %v5808, %v5804
        %v5810 = vlaneseq
        %v5811 = vshrl.u32 %v5810, 7
        %v5812 = vsub.s32 %v5559, %v5811
        %v5813 = vrot.slane %v4902, %v5812
        %v5814 = vsel %vm5564, %v5813, %v5809
        %v5815 = vlaneseq
        %v5816 = vshrl.u32 %v5815, 7
        %v5817 = vsub.s32 %v5566, %v5816
        %v5818 = vrot.slane %v4905, %v5817
        %v5819 = vsel %vm5571, %v5818, %v5814
        %v5820 = vlaneseq
        %v5821 = vshrl.u32 %v5820, 7
        %v5822 = vsub.s32 %v5573, %v5821
        %v5823 = vrot.slane %v4908, %v5822
        %v5824 = vsel %vm5578, %v5823, %v5819
        %v5825 = vlaneseq
        %v5826 = vshrl.u32 %v5825, 7
        %v5827 = vsub.s32 %v5580, %v5826
        %v5828 = vrot.slane %v4911, %v5827
        %v5829 = vsel %vm5585, %v5828, %v5824
        %v5830 = vlaneseq
        %v5831 = vshrl.u32 %v5830, 7
        %v5832 = vsub.s32 %v5587, %v5831
        %v5833 = vrot.slane %v4914, %v5832
        %v5834 = vsel %vm5592, %v5833, %v5829
        %v5835 = vlaneseq
        %v5836 = vshrl.u32 %v5835, 7
        %v5837 = vsub.s32 %v5594, %v5836
        %v5838 = vrot.slane %v4917, %v5837
        %v5839 = vsel %vm5599, %v5838, %v5834
        %v5840 = vlaneseq
        %v5841 = vshrl.u32 %v5840, 7
        %v5842 = vsub.s32 %v5601, %v5841
        %v5843 = vrot.slane %v4920, %v5842
        %v5844 = vsel %vm5606, %v5843, %v5839
        %v5845 = vlaneseq
        %v5846 = vshrl.u32 %v5845, 7
        %v5847 = vsub.s32 %v5498, %v5846
        %v5848 = vrot.slane %v4923, %v5847
        %v5849 = vlaneseq
        %v5850 = vshrl.u32 %v5849, 7
        %v5851 = vsub.s32 %v5503, %v5850
        %v5852 = vrot.slane %v4926, %v5851
        %v5853 = vsel %vm5508, %v5852, %v5848
        %v5854 = vlaneseq
        %v5855 = vshrl.u32 %v5854, 7
        %v5856 = vsub.s32 %v5510, %v5855
        %v5857 = vrot.slane %v4929, %v5856
        %v5858 = vsel %vm5515, %v5857, %v5853
        %v5859 = vlaneseq
        %v5860 = vshrl.u32 %v5859, 7
        %v5861 = vsub.s32 %v5517, %v5860
        %v5862 = vrot.slane %v4932, %v5861
        %v5863 = vsel %vm5522, %v5862, %v5858
        %v5864 = vlaneseq
        %v5865 = vshrl.u32 %v5864, 7
        %v5866 = vsub.s32 %v5524, %v5865
        %v5867 = vrot.slane %v4935, %v5866
        %v5868 = vsel %vm5529, %v5867, %v5863
        %v5869 = vlaneseq
        %v5870 = vshrl.u32 %v5869, 7
        %v5871 = vsub.s32 %v5531, %v5870
        %v5872 = vrot.slane %v4938, %v5871
        %v5873 = vsel %vm5536, %v5872, %v5868
        %v5874 = vlaneseq
        %v5875 = vshrl.u32 %v5874, 7
        %v5876 = vsub.s32 %v5538, %v5875
        %v5877 = vrot.slane %v4941, %v5876
        %v5878 = vsel %vm5543, %v5877, %v5873
        %v5879 = vlaneseq
        %v5880 = vshrl.u32 %v5879, 7
        %v5881 = vsub.s32 %v5545, %v5880
        %v5882 = vrot.slane %v4944, %v5881
        %v5883 = vsel %vm5550, %v5882, %v5878
        %v5884 = vlaneseq
        %v5885 = vshrl.u32 %v5884, 7
        %v5886 = vsub.s32 %v5552, %v5885
        %v5887 = vrot.slane %v4947, %v5886
        %v5888 = vsel %vm5557, %v5887, %v5883
        %v5889 = vlaneseq
        %v5890 = vshrl.u32 %v5889, 7
        %v5891 = vsub.s32 %v5559, %v5890
        %v5892 = vrot.slane %v4950, %v5891
        %v5893 = vsel %vm5564, %v5892, %v5888
        %v5894 = vlaneseq
        %v5895 = vshrl.u32 %v5894, 7
        %v5896 = vsub.s32 %v5566, %v5895
        %v5897 = vrot.slane %v4953, %v5896
        %v5898 = vsel %vm5571, %v5897, %v5893
        %v5899 = vlaneseq
        %v5900 = vshrl.u32 %v5899, 7
        %v5901 = vsub.s32 %v5573, %v5900
        %v5902 = vrot.slane %v4956, %v5901
        %v5903 = vsel %vm5578, %v5902, %v5898
        %v5904 = vlaneseq
        %v5905 = vshrl.u32 %v5904, 7
        %v5906 = vsub.s32 %v5580, %v5905
        %v5907 = vrot.slane %v4959, %v5906
        %v5908 = vsel %vm5585, %v5907, %v5903
        %v5909 = vlaneseq
        %v5910 = vshrl.u32 %v5909, 7
        %v5911 = vsub.s32 %v5587, %v5910
        %v5912 = vrot.slane %v4962, %v5911
        %v5913 = vsel %vm5592, %v5912, %v5908
        %v5914 = vlaneseq
        %v5915 = vshrl.u32 %v5914, 7
        %v5916 = vsub.s32 %v5594, %v5915
        %v5917 = vrot.slane %v4965, %v5916
        %v5918 = vsel %vm5599, %v5917, %v5913
        %v5919 = vlaneseq
        %v5920 = vshrl.u32 %v5919, 7
        %v5921 = vsub.s32 %v5601, %v5920
        %v5922 = vrot.slane %v4968, %v5921
        %v5923 = vsel %vm5606, %v5922, %v5918
        %v5924 = vlaneseq
        %v5925 = vshrl.u32 %v5924, 7
        %v5926 = vsub.s32 %v5498, %v5925
        %v5927 = vrot.slane %v4971, %v5926
        %v5928 = vlaneseq
        %v5929 = vshrl.u32 %v5928, 7
        %v5930 = vsub.s32 %v5503, %v5929
        %v5931 = vrot.slane %v4974, %v5930
        %v5932 = vsel %vm5508, %v5931, %v5927
        %v5933 = vlaneseq
        %v5934 = vshrl.u32 %v5933, 7
        %v5935 = vsub.s32 %v5510, %v5934
        %v5936 = vrot.slane %v4977, %v5935
        %v5937 = vsel %vm5515, %v5936, %v5932
        %v5938 = vlaneseq
        %v5939 = vshrl.u32 %v5938, 7
        %v5940 = vsub.s32 %v5517, %v5939
        %v5941 = vrot.slane %v4980, %v5940
        %v5942 = vsel %vm5522, %v5941, %v5937
        %v5943 = vlaneseq
        %v5944 = vshrl.u32 %v5943, 7
        %v5945 = vsub.s32 %v5524, %v5944
        %v5946 = vrot.slane %v4983, %v5945
        %v5947 = vsel %vm5529, %v5946, %v5942
        %v5948 = vlaneseq
        %v5949 = vshrl.u32 %v5948, 7
        %v5950 = vsub.s32 %v5531, %v5949
        %v5951 = vrot.slane %v4986, %v5950
        %v5952 = vsel %vm5536, %v5951, %v5947
        %v5953 = vlaneseq
        %v5954 = vshrl.u32 %v5953, 7
        %v5955 = vsub.s32 %v5538, %v5954
        %v5956 = vrot.slane %v4989, %v5955
        %v5957 = vsel %vm5543, %v5956, %v5952
        %v5958 = vlaneseq
        %v5959 = vshrl.u32 %v5958, 7
        %v5960 = vsub.s32 %v5545, %v5959
        %v5961 = vrot.slane %v4992, %v5960
        %v5962 = vsel %vm5550, %v5961, %v5957
        %v5963 = vlaneseq
        %v5964 = vshrl.u32 %v5963, 7
        %v5965 = vsub.s32 %v5552, %v5964
        %v5966 = vrot.slane %v4995, %v5965
        %v5967 = vsel %vm5557, %v5966, %v5962
        %v5968 = vlaneseq
        %v5969 = vshrl.u32 %v5968, 7
        %v5970 = vsub.s32 %v5559, %v5969
        %v5971 = vrot.slane %v4998, %v5970
        %v5972 = vsel %vm5564, %v5971, %v5967
        %v5973 = vlaneseq
        %v5974 = vshrl.u32 %v5973, 7
        %v5975 = vsub.s32 %v5566, %v5974
        %v5976 = vrot.slane %v5001, %v5975
        %v5977 = vsel %vm5571, %v5976, %v5972
        %v5978 = vlaneseq
        %v5979 = vshrl.u32 %v5978, 7
        %v5980 = vsub.s32 %v5573, %v5979
        %v5981 = vrot.slane %v5004, %v5980
        %v5982 = vsel %vm5578, %v5981, %v5977
        %v5983 = vlaneseq
        %v5984 = vshrl.u32 %v5983, 7
        %v5985 = vsub.s32 %v5580, %v5984
        %v5986 = vrot.slane %v5007, %v5985
        %v5987 = vsel %vm5585, %v5986, %v5982
        %v5988 = vlaneseq
        %v5989 = vshrl.u32 %v5988, 7
        %v5990 = vsub.s32 %v5587, %v5989
        %v5991 = vrot.slane %v5010, %v5990
        %v5992 = vsel %vm5592, %v5991, %v5987
        %v5993 = vlaneseq
        %v5994 = vshrl.u32 %v5993, 7
        %v5995 = vsub.s32 %v5594, %v5994
        %v5996 = vrot.slane %v5013, %v5995
        %v5997 = vsel %vm5599, %v5996, %v5992
        %v5998 = vlaneseq
        %v5999 = vshrl.u32 %v5998, 7
        %v6000 = vsub.s32 %v5601, %v5999
        %v6001 = vrot.slane %v5016, %v6000
        %v6002 = vsel %vm5606, %v6001, %v5997
        %v6003 = vlaneseq
        %v6004 = vshrl.u32 %v6003, 7
        %v6005 = vsub.s32 %v5498, %v6004
        %v6006 = vrot.slane %v5019, %v6005
        %v6007 = vlaneseq
        %v6008 = vshrl.u32 %v6007, 7
        %v6009 = vsub.s32 %v5503, %v6008
        %v6010 = vrot.slane %v5022, %v6009
        %v6011 = vsel %vm5508, %v6010, %v6006
        %v6012 = vlaneseq
        %v6013 = vshrl.u32 %v6012, 7
        %v6014 = vsub.s32 %v5510, %v6013
        %v6015 = vrot.slane %v5025, %v6014
        %v6016 = vsel %vm5515, %v6015, %v6011
        %v6017 = vlaneseq
        %v6018 = vshrl.u32 %v6017, 7
        %v6019 = vsub.s32 %v5517, %v6018
        %v6020 = vrot.slane %v5028, %v6019
        %v6021 = vsel %vm5522, %v6020, %v6016
        %v6022 = vlaneseq
        %v6023 = vshrl.u32 %v6022, 7
        %v6024 = vsub.s32 %v5524, %v6023
        %v6025 = vrot.slane %v5031, %v6024
        %v6026 = vsel %vm5529, %v6025, %v6021
        %v6027 = vlaneseq
        %v6028 = vshrl.u32 %v6027, 7
        %v6029 = vsub.s32 %v5531, %v6028
        %v6030 = vrot.slane %v5034, %v6029
        %v6031 = vsel %vm5536, %v6030, %v6026
        %v6032 = vlaneseq
        %v6033 = vshrl.u32 %v6032, 7
        %v6034 = vsub.s32 %v5538, %v6033
        %v6035 = vrot.slane %v5037, %v6034
        %v6036 = vsel %vm5543, %v6035, %v6031
        %v6037 = vlaneseq
        %v6038 = vshrl.u32 %v6037, 7
        %v6039 = vsub.s32 %v5545, %v6038
        %v6040 = vrot.slane %v5040, %v6039
        %v6041 = vsel %vm5550, %v6040, %v6036
        %v6042 = vlaneseq
        %v6043 = vshrl.u32 %v6042, 7
        %v6044 = vsub.s32 %v5552, %v6043
        %v6045 = vrot.slane %v5043, %v6044
        %v6046 = vsel %vm5557, %v6045, %v6041
        %v6047 = vlaneseq
        %v6048 = vshrl.u32 %v6047, 7
        %v6049 = vsub.s32 %v5559, %v6048
        %v6050 = vrot.slane %v5046, %v6049
        %v6051 = vsel %vm5564, %v6050, %v6046
        %v6052 = vlaneseq
        %v6053 = vshrl.u32 %v6052, 7
        %v6054 = vsub.s32 %v5566, %v6053
        %v6055 = vrot.slane %v5049, %v6054
        %v6056 = vsel %vm5571, %v6055, %v6051
        %v6057 = vlaneseq
        %v6058 = vshrl.u32 %v6057, 7
        %v6059 = vsub.s32 %v5573, %v6058
        %v6060 = vrot.slane %v5052, %v6059
        %v6061 = vsel %vm5578, %v6060, %v6056
        %v6062 = vlaneseq
        %v6063 = vshrl.u32 %v6062, 7
        %v6064 = vsub.s32 %v5580, %v6063
        %v6065 = vrot.slane %v5055, %v6064
        %v6066 = vsel %vm5585, %v6065, %v6061
        %v6067 = vlaneseq
        %v6068 = vshrl.u32 %v6067, 7
        %v6069 = vsub.s32 %v5587, %v6068
        %v6070 = vrot.slane %v5058, %v6069
        %v6071 = vsel %vm5592, %v6070, %v6066
        %v6072 = vlaneseq
        %v6073 = vshrl.u32 %v6072, 7
        %v6074 = vsub.s32 %v5594, %v6073
        %v6075 = vrot.slane %v5061, %v6074
        %v6076 = vsel %vm5599, %v6075, %v6071
        %v6077 = vlaneseq
        %v6078 = vshrl.u32 %v6077, 7
        %v6079 = vsub.s32 %v5601, %v6078
        %v6080 = vrot.slane %v5064, %v6079
        %v6081 = vsel %vm5606, %v6080, %v6076
        %v6082 = vlaneseq
        %v6083 = vshrl.u32 %v6082, 7
        %v6084 = vsub.s32 %v5498, %v6083
        %v6085 = vrot.slane %v5067, %v6084
        %v6086 = vlaneseq
        %v6087 = vshrl.u32 %v6086, 7
        %v6088 = vsub.s32 %v5503, %v6087
        %v6089 = vrot.slane %v5070, %v6088
        %v6090 = vsel %vm5508, %v6089, %v6085
        %v6091 = vlaneseq
        %v6092 = vshrl.u32 %v6091, 7
        %v6093 = vsub.s32 %v5510, %v6092
        %v6094 = vrot.slane %v5073, %v6093
        %v6095 = vsel %vm5515, %v6094, %v6090
        %v6096 = vlaneseq
        %v6097 = vshrl.u32 %v6096, 7
        %v6098 = vsub.s32 %v5517, %v6097
        %v6099 = vrot.slane %v5076, %v6098
        %v6100 = vsel %vm5522, %v6099, %v6095
        %v6101 = vlaneseq
        %v6102 = vshrl.u32 %v6101, 7
        %v6103 = vsub.s32 %v5524, %v6102
        %v6104 = vrot.slane %v5079, %v6103
        %v6105 = vsel %vm5529, %v6104, %v6100
        %v6106 = vlaneseq
        %v6107 = vshrl.u32 %v6106, 7
        %v6108 = vsub.s32 %v5531, %v6107
        %v6109 = vrot.slane %v5082, %v6108
        %v6110 = vsel %vm5536, %v6109, %v6105
        %v6111 = vlaneseq
        %v6112 = vshrl.u32 %v6111, 7
        %v6113 = vsub.s32 %v5538, %v6112
        %v6114 = vrot.slane %v5085, %v6113
        %v6115 = vsel %vm5543, %v6114, %v6110
        %v6116 = vlaneseq
        %v6117 = vshrl.u32 %v6116, 7
        %v6118 = vsub.s32 %v5545, %v6117
        %v6119 = vrot.slane %v5088, %v6118
        %v6120 = vsel %vm5550, %v6119, %v6115
        %v6121 = vlaneseq
        %v6122 = vshrl.u32 %v6121, 7
        %v6123 = vsub.s32 %v5552, %v6122
        %v6124 = vrot.slane %v5091, %v6123
        %v6125 = vsel %vm5557, %v6124, %v6120
        %v6126 = vlaneseq
        %v6127 = vshrl.u32 %v6126, 7
        %v6128 = vsub.s32 %v5559, %v6127
        %v6129 = vrot.slane %v5094, %v6128
        %v6130 = vsel %vm5564, %v6129, %v6125
        %v6131 = vlaneseq
        %v6132 = vshrl.u32 %v6131, 7
        %v6133 = vsub.s32 %v5566, %v6132
        %v6134 = vrot.slane %v5097, %v6133
        %v6135 = vsel %vm5571, %v6134, %v6130
        %v6136 = vlaneseq
        %v6137 = vshrl.u32 %v6136, 7
        %v6138 = vsub.s32 %v5573, %v6137
        %v6139 = vrot.slane %v5100, %v6138
        %v6140 = vsel %vm5578, %v6139, %v6135
        %v6141 = vlaneseq
        %v6142 = vshrl.u32 %v6141, 7
        %v6143 = vsub.s32 %v5580, %v6142
        %v6144 = vrot.slane %v5103, %v6143
        %v6145 = vsel %vm5585, %v6144, %v6140
        %v6146 = vlaneseq
        %v6147 = vshrl.u32 %v6146, 7
        %v6148 = vsub.s32 %v5587, %v6147
        %v6149 = vrot.slane %v5106, %v6148
        %v6150 = vsel %vm5592, %v6149, %v6145
        %v6151 = vlaneseq
        %v6152 = vshrl.u32 %v6151, 7
        %v6153 = vsub.s32 %v5594, %v6152
        %v6154 = vrot.slane %v5109, %v6153
        %v6155 = vsel %vm5599, %v6154, %v6150
        %v6156 = vlaneseq
        %v6157 = vshrl.u32 %v6156, 7
        %v6158 = vsub.s32 %v5601, %v6157
        %v6159 = vrot.slane %v5112, %v6158
        %v6160 = vsel %vm5606, %v6159, %v6155
        %v6161 = vlaneseq
        %v6162 = vshrl.u32 %v6161, 7
        %v6163 = vsub.s32 %v5498, %v6162
        %v6164 = vrot.slane %v5115, %v6163
        %v6165 = vlaneseq
        %v6166 = vshrl.u32 %v6165, 7
        %v6167 = vsub.s32 %v5503, %v6166
        %v6168 = vrot.slane %v5118, %v6167
        %v6169 = vsel %vm5508, %v6168, %v6164
        %v6170 = vlaneseq
        %v6171 = vshrl.u32 %v6170, 7
        %v6172 = vsub.s32 %v5510, %v6171
        %v6173 = vrot.slane %v5121, %v6172
        %v6174 = vsel %vm5515, %v6173, %v6169
        %v6175 = vlaneseq
        %v6176 = vshrl.u32 %v6175, 7
        %v6177 = vsub.s32 %v5517, %v6176
        %v6178 = vrot.slane %v5124, %v6177
        %v6179 = vsel %vm5522, %v6178, %v6174
        %v6180 = vlaneseq
        %v6181 = vshrl.u32 %v6180, 7
        %v6182 = vsub.s32 %v5524, %v6181
        %v6183 = vrot.slane %v5127, %v6182
        %v6184 = vsel %vm5529, %v6183, %v6179
        %v6185 = vlaneseq
        %v6186 = vshrl.u32 %v6185, 7
        %v6187 = vsub.s32 %v5531, %v6186
        %v6188 = vrot.slane %v5130, %v6187
        %v6189 = vsel %vm5536, %v6188, %v6184
        %v6190 = vlaneseq
        %v6191 = vshrl.u32 %v6190, 7
        %v6192 = vsub.s32 %v5538, %v6191
        %v6193 = vrot.slane %v5133, %v6192
        %v6194 = vsel %vm5543, %v6193, %v6189
        %v6195 = vlaneseq
        %v6196 = vshrl.u32 %v6195, 7
        %v6197 = vsub.s32 %v5545, %v6196
        %v6198 = vrot.slane %v5136, %v6197
        %v6199 = vsel %vm5550, %v6198, %v6194
        %v6200 = vlaneseq
        %v6201 = vshrl.u32 %v6200, 7
        %v6202 = vsub.s32 %v5552, %v6201
        %v6203 = vrot.slane %v5139, %v6202
        %v6204 = vsel %vm5557, %v6203, %v6199
        %v6205 = vlaneseq
        %v6206 = vshrl.u32 %v6205, 7
        %v6207 = vsub.s32 %v5559, %v6206
        %v6208 = vrot.slane %v5142, %v6207
        %v6209 = vsel %vm5564, %v6208, %v6204
        %v6210 = vlaneseq
        %v6211 = vshrl.u32 %v6210, 7
        %v6212 = vsub.s32 %v5566, %v6211
        %v6213 = vrot.slane %v5145, %v6212
        %v6214 = vsel %vm5571, %v6213, %v6209
        %v6215 = vlaneseq
        %v6216 = vshrl.u32 %v6215, 7
        %v6217 = vsub.s32 %v5573, %v6216
        %v6218 = vrot.slane %v5148, %v6217
        %v6219 = vsel %vm5578, %v6218, %v6214
        %v6220 = vlaneseq
        %v6221 = vshrl.u32 %v6220, 7
        %v6222 = vsub.s32 %v5580, %v6221
        %v6223 = vrot.slane %v5151, %v6222
        %v6224 = vsel %vm5585, %v6223, %v6219
        %v6225 = vlaneseq
        %v6226 = vshrl.u32 %v6225, 7
        %v6227 = vsub.s32 %v5587, %v6226
        %v6228 = vrot.slane %v5154, %v6227
        %v6229 = vsel %vm5592, %v6228, %v6224
        %v6230 = vlaneseq
        %v6231 = vshrl.u32 %v6230, 7
        %v6232 = vsub.s32 %v5594, %v6231
        %v6233 = vrot.slane %v5157, %v6232
        %v6234 = vsel %vm5599, %v6233, %v6229
        %v6235 = vlaneseq
        %v6236 = vshrl.u32 %v6235, 7
        %v6237 = vsub.s32 %v5601, %v6236
        %v6238 = vrot.slane %v5160, %v6237
        %v6239 = vsel %vm5606, %v6238, %v6234
        %v6240 = vlaneseq
        %v6241 = vshrl.u32 %v6240, 7
        %v6242 = vsub.s32 %v5498, %v6241
        %v6243 = vrot.slane %v5163, %v6242
        %v6244 = vlaneseq
        %v6245 = vshrl.u32 %v6244, 7
        %v6246 = vsub.s32 %v5503, %v6245
        %v6247 = vrot.slane %v5166, %v6246
        %v6248 = vsel %vm5508, %v6247, %v6243
        %v6249 = vlaneseq
        %v6250 = vshrl.u32 %v6249, 7
        %v6251 = vsub.s32 %v5510, %v6250
        %v6252 = vrot.slane %v5169, %v6251
        %v6253 = vsel %vm5515, %v6252, %v6248
        %v6254 = vlaneseq
        %v6255 = vshrl.u32 %v6254, 7
        %v6256 = vsub.s32 %v5517, %v6255
        %v6257 = vrot.slane %v5172, %v6256
        %v6258 = vsel %vm5522, %v6257, %v6253
        %v6259 = vlaneseq
        %v6260 = vshrl.u32 %v6259, 7
        %v6261 = vsub.s32 %v5524, %v6260
        %v6262 = vrot.slane %v5175, %v6261
        %v6263 = vsel %vm5529, %v6262, %v6258
        %v6264 = vlaneseq
        %v6265 = vshrl.u32 %v6264, 7
        %v6266 = vsub.s32 %v5531, %v6265
        %v6267 = vrot.slane %v5178, %v6266
        %v6268 = vsel %vm5536, %v6267, %v6263
        %v6269 = vlaneseq
        %v6270 = vshrl.u32 %v6269, 7
        %v6271 = vsub.s32 %v5538, %v6270
        %v6272 = vrot.slane %v5181, %v6271
        %v6273 = vsel %vm5543, %v6272, %v6268
        %v6274 = vlaneseq
        %v6275 = vshrl.u32 %v6274, 7
        %v6276 = vsub.s32 %v5545, %v6275
        %v6277 = vrot.slane %v5184, %v6276
        %v6278 = vsel %vm5550, %v6277, %v6273
        %v6279 = vlaneseq
        %v6280 = vshrl.u32 %v6279, 7
        %v6281 = vsub.s32 %v5552, %v6280
        %v6282 = vrot.slane %v5187, %v6281
        %v6283 = vsel %vm5557, %v6282, %v6278
        %v6284 = vlaneseq
        %v6285 = vshrl.u32 %v6284, 7
        %v6286 = vsub.s32 %v5559, %v6285
        %v6287 = vrot.slane %v5190, %v6286
        %v6288 = vsel %vm5564, %v6287, %v6283
        %v6289 = vlaneseq
        %v6290 = vshrl.u32 %v6289, 7
        %v6291 = vsub.s32 %v5566, %v6290
        %v6292 = vrot.slane %v5193, %v6291
        %v6293 = vsel %vm5571, %v6292, %v6288
        %v6294 = vlaneseq
        %v6295 = vshrl.u32 %v6294, 7
        %v6296 = vsub.s32 %v5573, %v6295
        %v6297 = vrot.slane %v5196, %v6296
        %v6298 = vsel %vm5578, %v6297, %v6293
        %v6299 = vlaneseq
        %v6300 = vshrl.u32 %v6299, 7
        %v6301 = vsub.s32 %v5580, %v6300
        %v6302 = vrot.slane %v5199, %v6301
        %v6303 = vsel %vm5585, %v6302, %v6298
        %v6304 = vlaneseq
        %v6305 = vshrl.u32 %v6304, 7
        %v6306 = vsub.s32 %v5587, %v6305
        %v6307 = vrot.slane %v5202, %v6306
        %v6308 = vsel %vm5592, %v6307, %v6303
        %v6309 = vlaneseq
        %v6310 = vshrl.u32 %v6309, 7
        %v6311 = vsub.s32 %v5594, %v6310
        %v6312 = vrot.slane %v5205, %v6311
        %v6313 = vsel %vm5599, %v6312, %v6308
        %v6314 = vlaneseq
        %v6315 = vshrl.u32 %v6314, 7
        %v6316 = vsub.s32 %v5601, %v6315
        %v6317 = vrot.slane %v5208, %v6316
        %v6318 = vsel %vm5606, %v6317, %v6313
        %v6319 = vlaneseq
        %v6320 = vshrl.u32 %v6319, 7
        %v6321 = vsub.s32 %v5498, %v6320
        %v6322 = vrot.slane %v5211, %v6321
        %v6323 = vlaneseq
        %v6324 = vshrl.u32 %v6323, 7
        %v6325 = vsub.s32 %v5503, %v6324
        %v6326 = vrot.slane %v5214, %v6325
        %v6327 = vsel %vm5508, %v6326, %v6322
        %v6328 = vlaneseq
        %v6329 = vshrl.u32 %v6328, 7
        %v6330 = vsub.s32 %v5510, %v6329
        %v6331 = vrot.slane %v5217, %v6330
        %v6332 = vsel %vm5515, %v6331, %v6327
        %v6333 = vlaneseq
        %v6334 = vshrl.u32 %v6333, 7
        %v6335 = vsub.s32 %v5517, %v6334
        %v6336 = vrot.slane %v5220, %v6335
        %v6337 = vsel %vm5522, %v6336, %v6332
        %v6338 = vlaneseq
        %v6339 = vshrl.u32 %v6338, 7
        %v6340 = vsub.s32 %v5524, %v6339
        %v6341 = vrot.slane %v5223, %v6340
        %v6342 = vsel %vm5529, %v6341, %v6337
        %v6343 = vlaneseq
        %v6344 = vshrl.u32 %v6343, 7
        %v6345 = vsub.s32 %v5531, %v6344
        %v6346 = vrot.slane %v5226, %v6345
        %v6347 = vsel %vm5536, %v6346, %v6342
        %v6348 = vlaneseq
        %v6349 = vshrl.u32 %v6348, 7
        %v6350 = vsub.s32 %v5538, %v6349
        %v6351 = vrot.slane %v5229, %v6350
        %v6352 = vsel %vm5543, %v6351, %v6347
        %v6353 = vlaneseq
        %v6354 = vshrl.u32 %v6353, 7
        %v6355 = vsub.s32 %v5545, %v6354
        %v6356 = vrot.slane %v5232, %v6355
        %v6357 = vsel %vm5550, %v6356, %v6352
        %v6358 = vlaneseq
        %v6359 = vshrl.u32 %v6358, 7
        %v6360 = vsub.s32 %v5552, %v6359
        %v6361 = vrot.slane %v5235, %v6360
        %v6362 = vsel %vm5557, %v6361, %v6357
        %v6363 = vlaneseq
        %v6364 = vshrl.u32 %v6363, 7
        %v6365 = vsub.s32 %v5559, %v6364
        %v6366 = vrot.slane %v5238, %v6365
        %v6367 = vsel %vm5564, %v6366, %v6362
        %v6368 = vlaneseq
        %v6369 = vshrl.u32 %v6368, 7
        %v6370 = vsub.s32 %v5566, %v6369
        %v6371 = vrot.slane %v5241, %v6370
        %v6372 = vsel %vm5571, %v6371, %v6367
        %v6373 = vlaneseq
        %v6374 = vshrl.u32 %v6373, 7
        %v6375 = vsub.s32 %v5573, %v6374
        %v6376 = vrot.slane %v5244, %v6375
        %v6377 = vsel %vm5578, %v6376, %v6372
        %v6378 = vlaneseq
        %v6379 = vshrl.u32 %v6378, 7
        %v6380 = vsub.s32 %v5580, %v6379
        %v6381 = vrot.slane %v5247, %v6380
        %v6382 = vsel %vm5585, %v6381, %v6377
        %v6383 = vlaneseq
        %v6384 = vshrl.u32 %v6383, 7
        %v6385 = vsub.s32 %v5587, %v6384
        %v6386 = vrot.slane %v5250, %v6385
        %v6387 = vsel %vm5592, %v6386, %v6382
        %v6388 = vlaneseq
        %v6389 = vshrl.u32 %v6388, 7
        %v6390 = vsub.s32 %v5594, %v6389
        %v6391 = vrot.slane %v5253, %v6390
        %v6392 = vsel %vm5599, %v6391, %v6387
        %v6393 = vlaneseq
        %v6394 = vshrl.u32 %v6393, 7
        %v6395 = vsub.s32 %v5601, %v6394
        %v6396 = vrot.slane %v5256, %v6395
        %v6397 = vsel %vm5606, %v6396, %v6392
        %v6398 = vlaneseq
        %v6399 = vshrl.u32 %v6398, 7
        %v6400 = vsub.s32 %v5498, %v6399
        %v6401 = vrot.slane %v5259, %v6400
        %v6402 = vlaneseq
        %v6403 = vshrl.u32 %v6402, 7
        %v6404 = vsub.s32 %v5503, %v6403
        %v6405 = vrot.slane %v5262, %v6404
        %v6406 = vsel %vm5508, %v6405, %v6401
        %v6407 = vlaneseq
        %v6408 = vshrl.u32 %v6407, 7
        %v6409 = vsub.s32 %v5510, %v6408
        %v6410 = vrot.slane %v5265, %v6409
        %v6411 = vsel %vm5515, %v6410, %v6406
        %v6412 = vlaneseq
        %v6413 = vshrl.u32 %v6412, 7
        %v6414 = vsub.s32 %v5517, %v6413
        %v6415 = vrot.slane %v5268, %v6414
        %v6416 = vsel %vm5522, %v6415, %v6411
        %v6417 = vlaneseq
        %v6418 = vshrl.u32 %v6417, 7
        %v6419 = vsub.s32 %v5524, %v6418
        %v6420 = vrot.slane %v5271, %v6419
        %v6421 = vsel %vm5529, %v6420, %v6416
        %v6422 = vlaneseq
        %v6423 = vshrl.u32 %v6422, 7
        %v6424 = vsub.s32 %v5531, %v6423
        %v6425 = vrot.slane %v5274, %v6424
        %v6426 = vsel %vm5536, %v6425, %v6421
        %v6427 = vlaneseq
        %v6428 = vshrl.u32 %v6427, 7
        %v6429 = vsub.s32 %v5538, %v6428
        %v6430 = vrot.slane %v5277, %v6429
        %v6431 = vsel %vm5543, %v6430, %v6426
        %v6432 = vlaneseq
        %v6433 = vshrl.u32 %v6432, 7
        %v6434 = vsub.s32 %v5545, %v6433
        %v6435 = vrot.slane %v5280, %v6434
        %v6436 = vsel %vm5550, %v6435, %v6431
        %v6437 = vlaneseq
        %v6438 = vshrl.u32 %v6437, 7
        %v6439 = vsub.s32 %v5552, %v6438
        %v6440 = vrot.slane %v5283, %v6439
        %v6441 = vsel %vm5557, %v6440, %v6436
        %v6442 = vlaneseq
        %v6443 = vshrl.u32 %v6442, 7
        %v6444 = vsub.s32 %v5559, %v6443
        %v6445 = vrot.slane %v5286, %v6444
        %v6446 = vsel %vm5564, %v6445, %v6441
        %v6447 = vlaneseq
        %v6448 = vshrl.u32 %v6447, 7
        %v6449 = vsub.s32 %v5566, %v6448
        %v6450 = vrot.slane %v5289, %v6449
        %v6451 = vsel %vm5571, %v6450, %v6446
        %v6452 = vlaneseq
        %v6453 = vshrl.u32 %v6452, 7
        %v6454 = vsub.s32 %v5573, %v6453
        %v6455 = vrot.slane %v5292, %v6454
        %v6456 = vsel %vm5578, %v6455, %v6451
        %v6457 = vlaneseq
        %v6458 = vshrl.u32 %v6457, 7
        %v6459 = vsub.s32 %v5580, %v6458
        %v6460 = vrot.slane %v5295, %v6459
        %v6461 = vsel %vm5585, %v6460, %v6456
        %v6462 = vlaneseq
        %v6463 = vshrl.u32 %v6462, 7
        %v6464 = vsub.s32 %v5587, %v6463
        %v6465 = vrot.slane %v5298, %v6464
        %v6466 = vsel %vm5592, %v6465, %v6461
        %v6467 = vlaneseq
        %v6468 = vshrl.u32 %v6467, 7
        %v6469 = vsub.s32 %v5594, %v6468
        %v6470 = vrot.slane %v5301, %v6469
        %v6471 = vsel %vm5599, %v6470, %v6466
        %v6472 = vlaneseq
        %v6473 = vshrl.u32 %v6472, 7
        %v6474 = vsub.s32 %v5601, %v6473
        %v6475 = vrot.slane %v5304, %v6474
        %v6476 = vsel %vm5606, %v6475, %v6471
        %v6477 = vlaneseq
        %v6478 = vshrl.u32 %v6477, 7
        %v6479 = vsub.s32 %v5498, %v6478
        %v6480 = vrot.slane %v5307, %v6479
        %v6481 = vlaneseq
        %v6482 = vshrl.u32 %v6481, 7
        %v6483 = vsub.s32 %v5503, %v6482
        %v6484 = vrot.slane %v5310, %v6483
        %v6485 = vsel %vm5508, %v6484, %v6480
        %v6486 = vlaneseq
        %v6487 = vshrl.u32 %v6486, 7
        %v6488 = vsub.s32 %v5510, %v6487
        %v6489 = vrot.slane %v5313, %v6488
        %v6490 = vsel %vm5515, %v6489, %v6485
        %v6491 = vlaneseq
        %v6492 = vshrl.u32 %v6491, 7
        %v6493 = vsub.s32 %v5517, %v6492
        %v6494 = vrot.slane %v5316, %v6493
        %v6495 = vsel %vm5522, %v6494, %v6490
        %v6496 = vlaneseq
        %v6497 = vshrl.u32 %v6496, 7
        %v6498 = vsub.s32 %v5524, %v6497
        %v6499 = vrot.slane %v5319, %v6498
        %v6500 = vsel %vm5529, %v6499, %v6495
        %v6501 = vlaneseq
        %v6502 = vshrl.u32 %v6501, 7
        %v6503 = vsub.s32 %v5531, %v6502
        %v6504 = vrot.slane %v5322, %v6503
        %v6505 = vsel %vm5536, %v6504, %v6500
        %v6506 = vlaneseq
        %v6507 = vshrl.u32 %v6506, 7
        %v6508 = vsub.s32 %v5538, %v6507
        %v6509 = vrot.slane %v5325, %v6508
        %v6510 = vsel %vm5543, %v6509, %v6505
        %v6511 = vlaneseq
        %v6512 = vshrl.u32 %v6511, 7
        %v6513 = vsub.s32 %v5545, %v6512
        %v6514 = vrot.slane %v5328, %v6513
        %v6515 = vsel %vm5550, %v6514, %v6510
        %v6516 = vlaneseq
        %v6517 = vshrl.u32 %v6516, 7
        %v6518 = vsub.s32 %v5552, %v6517
        %v6519 = vrot.slane %v5331, %v6518
        %v6520 = vsel %vm5557, %v6519, %v6515
        %v6521 = vlaneseq
        %v6522 = vshrl.u32 %v6521, 7
        %v6523 = vsub.s32 %v5559, %v6522
        %v6524 = vrot.slane %v5334, %v6523
        %v6525 = vsel %vm5564, %v6524, %v6520
        %v6526 = vlaneseq
        %v6527 = vshrl.u32 %v6526, 7
        %v6528 = vsub.s32 %v5566, %v6527
        %v6529 = vrot.slane %v5337, %v6528
        %v6530 = vsel %vm5571, %v6529, %v6525
        %v6531 = vlaneseq
        %v6532 = vshrl.u32 %v6531, 7
        %v6533 = vsub.s32 %v5573, %v6532
        %v6534 = vrot.slane %v5340, %v6533
        %v6535 = vsel %vm5578, %v6534, %v6530
        %v6536 = vlaneseq
        %v6537 = vshrl.u32 %v6536, 7
        %v6538 = vsub.s32 %v5580, %v6537
        %v6539 = vrot.slane %v5343, %v6538
        %v6540 = vsel %vm5585, %v6539, %v6535
        %v6541 = vlaneseq
        %v6542 = vshrl.u32 %v6541, 7
        %v6543 = vsub.s32 %v5587, %v6542
        %v6544 = vrot.slane %v5346, %v6543
        %v6545 = vsel %vm5592, %v6544, %v6540
        %v6546 = vlaneseq
        %v6547 = vshrl.u32 %v6546, 7
        %v6548 = vsub.s32 %v5594, %v6547
        %v6549 = vrot.slane %v5349, %v6548
        %v6550 = vsel %vm5599, %v6549, %v6545
        %v6551 = vlaneseq
        %v6552 = vshrl.u32 %v6551, 7
        %v6553 = vsub.s32 %v5601, %v6552
        %v6554 = vrot.slane %v5352, %v6553
        %v6555 = vsel %vm5606, %v6554, %v6550
        %v6556 = vlaneseq
        %v6557 = vshrl.u32 %v6556, 7
        %v6558 = vsub.s32 %v5498, %v6557
        %v6559 = vrot.slane %v5355, %v6558
        %v6560 = vlaneseq
        %v6561 = vshrl.u32 %v6560, 7
        %v6562 = vsub.s32 %v5503, %v6561
        %v6563 = vrot.slane %v5358, %v6562
        %v6564 = vsel %vm5508, %v6563, %v6559
        %v6565 = vlaneseq
        %v6566 = vshrl.u32 %v6565, 7
        %v6567 = vsub.s32 %v5510, %v6566
        %v6568 = vrot.slane %v5361, %v6567
        %v6569 = vsel %vm5515, %v6568, %v6564
        %v6570 = vlaneseq
        %v6571 = vshrl.u32 %v6570, 7
        %v6572 = vsub.s32 %v5517, %v6571
        %v6573 = vrot.slane %v5364, %v6572
        %v6574 = vsel %vm5522, %v6573, %v6569
        %v6575 = vlaneseq
        %v6576 = vshrl.u32 %v6575, 7
        %v6577 = vsub.s32 %v5524, %v6576
        %v6578 = vrot.slane %v5367, %v6577
        %v6579 = vsel %vm5529, %v6578, %v6574
        %v6580 = vlaneseq
        %v6581 = vshrl.u32 %v6580, 7
        %v6582 = vsub.s32 %v5531, %v6581
        %v6583 = vrot.slane %v5370, %v6582
        %v6584 = vsel %vm5536, %v6583, %v6579
        %v6585 = vlaneseq
        %v6586 = vshrl.u32 %v6585, 7
        %v6587 = vsub.s32 %v5538, %v6586
        %v6588 = vrot.slane %v5373, %v6587
        %v6589 = vsel %vm5543, %v6588, %v6584
        %v6590 = vlaneseq
        %v6591 = vshrl.u32 %v6590, 7
        %v6592 = vsub.s32 %v5545, %v6591
        %v6593 = vrot.slane %v5376, %v6592
        %v6594 = vsel %vm5550, %v6593, %v6589
        %v6595 = vlaneseq
        %v6596 = vshrl.u32 %v6595, 7
        %v6597 = vsub.s32 %v5552, %v6596
        %v6598 = vrot.slane %v5379, %v6597
        %v6599 = vsel %vm5557, %v6598, %v6594
        %v6600 = vlaneseq
        %v6601 = vshrl.u32 %v6600, 7
        %v6602 = vsub.s32 %v5559, %v6601
        %v6603 = vrot.slane %v5382, %v6602
        %v6604 = vsel %vm5564, %v6603, %v6599
        %v6605 = vlaneseq
        %v6606 = vshrl.u32 %v6605, 7
        %v6607 = vsub.s32 %v5566, %v6606
        %v6608 = vrot.slane %v5385, %v6607
        %v6609 = vsel %vm5571, %v6608, %v6604
        %v6610 = vlaneseq
        %v6611 = vshrl.u32 %v6610, 7
        %v6612 = vsub.s32 %v5573, %v6611
        %v6613 = vrot.slane %v5388, %v6612
        %v6614 = vsel %vm5578, %v6613, %v6609
        %v6615 = vlaneseq
        %v6616 = vshrl.u32 %v6615, 7
        %v6617 = vsub.s32 %v5580, %v6616
        %v6618 = vrot.slane %v5391, %v6617
        %v6619 = vsel %vm5585, %v6618, %v6614
        %v6620 = vlaneseq
        %v6621 = vshrl.u32 %v6620, 7
        %v6622 = vsub.s32 %v5587, %v6621
        %v6623 = vrot.slane %v5394, %v6622
        %v6624 = vsel %vm5592, %v6623, %v6619
        %v6625 = vlaneseq
        %v6626 = vshrl.u32 %v6625, 7
        %v6627 = vsub.s32 %v5594, %v6626
        %v6628 = vrot.slane %v5397, %v6627
        %v6629 = vsel %vm5599, %v6628, %v6624
        %v6630 = vlaneseq
        %v6631 = vshrl.u32 %v6630, 7
        %v6632 = vsub.s32 %v5601, %v6631
        %v6633 = vrot.slane %v5400, %v6632
        %v6634 = vsel %vm5606, %v6633, %v6629
        %v6635 = vlaneseq
        %v6636 = vshrl.u32 %v6635, 7
        %v6637 = vsub.s32 %v5498, %v6636
        %v6638 = vrot.slane %v5403, %v6637
        %v6639 = vlaneseq
        %v6640 = vshrl.u32 %v6639, 7
        %v6641 = vsub.s32 %v5503, %v6640
        %v6642 = vrot.slane %v5406, %v6641
        %v6643 = vsel %vm5508, %v6642, %v6638
        %v6644 = vlaneseq
        %v6645 = vshrl.u32 %v6644, 7
        %v6646 = vsub.s32 %v5510, %v6645
        %v6647 = vrot.slane %v5409, %v6646
        %v6648 = vsel %vm5515, %v6647, %v6643
        %v6649 = vlaneseq
        %v6650 = vshrl.u32 %v6649, 7
        %v6651 = vsub.s32 %v5517, %v6650
        %v6652 = vrot.slane %v5412, %v6651
        %v6653 = vsel %vm5522, %v6652, %v6648
        %v6654 = vlaneseq
        %v6655 = vshrl.u32 %v6654, 7
        %v6656 = vsub.s32 %v5524, %v6655
        %v6657 = vrot.slane %v5415, %v6656
        %v6658 = vsel %vm5529, %v6657, %v6653
        %v6659 = vlaneseq
        %v6660 = vshrl.u32 %v6659, 7
        %v6661 = vsub.s32 %v5531, %v6660
        %v6662 = vrot.slane %v5418, %v6661
        %v6663 = vsel %vm5536, %v6662, %v6658
        %v6664 = vlaneseq
        %v6665 = vshrl.u32 %v6664, 7
        %v6666 = vsub.s32 %v5538, %v6665
        %v6667 = vrot.slane %v5421, %v6666
        %v6668 = vsel %vm5543, %v6667, %v6663
        %v6669 = vlaneseq
        %v6670 = vshrl.u32 %v6669, 7
        %v6671 = vsub.s32 %v5545, %v6670
        %v6672 = vrot.slane %v5424, %v6671
        %v6673 = vsel %vm5550, %v6672, %v6668
        %v6674 = vlaneseq
        %v6675 = vshrl.u32 %v6674, 7
        %v6676 = vsub.s32 %v5552, %v6675
        %v6677 = vrot.slane %v5427, %v6676
        %v6678 = vsel %vm5557, %v6677, %v6673
        %v6679 = vlaneseq
        %v6680 = vshrl.u32 %v6679, 7
        %v6681 = vsub.s32 %v5559, %v6680
        %v6682 = vrot.slane %v5430, %v6681
        %v6683 = vsel %vm5564, %v6682, %v6678
        %v6684 = vlaneseq
        %v6685 = vshrl.u32 %v6684, 7
        %v6686 = vsub.s32 %v5566, %v6685
        %v6687 = vrot.slane %v5433, %v6686
        %v6688 = vsel %vm5571, %v6687, %v6683
        %v6689 = vlaneseq
        %v6690 = vshrl.u32 %v6689, 7
        %v6691 = vsub.s32 %v5573, %v6690
        %v6692 = vrot.slane %v5436, %v6691
        %v6693 = vsel %vm5578, %v6692, %v6688
        %v6694 = vlaneseq
        %v6695 = vshrl.u32 %v6694, 7
        %v6696 = vsub.s32 %v5580, %v6695
        %v6697 = vrot.slane %v5439, %v6696
        %v6698 = vsel %vm5585, %v6697, %v6693
        %v6699 = vlaneseq
        %v6700 = vshrl.u32 %v6699, 7
        %v6701 = vsub.s32 %v5587, %v6700
        %v6702 = vrot.slane %v5442, %v6701
        %v6703 = vsel %vm5592, %v6702, %v6698
        %v6704 = vlaneseq
        %v6705 = vshrl.u32 %v6704, 7
        %v6706 = vsub.s32 %v5594, %v6705
        %v6707 = vrot.slane %v5445, %v6706
        %v6708 = vsel %vm5599, %v6707, %v6703
        %v6709 = vlaneseq
        %v6710 = vshrl.u32 %v6709, 7
        %v6711 = vsub.s32 %v5601, %v6710
        %v6712 = vrot.slane %v5448, %v6711
        %v6713 = vsel %vm5606, %v6712, %v6708
        %v6714 = vlaneseq
        %v6715 = vshrl.u32 %v6714, 7
        %v6716 = vsub.s32 %v5498, %v6715
        %v6717 = vrot.slane %v5451, %v6716
        %v6718 = vlaneseq
        %v6719 = vshrl.u32 %v6718, 7
        %v6720 = vsub.s32 %v5503, %v6719
        %v6721 = vrot.slane %v5454, %v6720
        %v6722 = vsel %vm5508, %v6721, %v6717
        %v6723 = vlaneseq
        %v6724 = vshrl.u32 %v6723, 7
        %v6725 = vsub.s32 %v5510, %v6724
        %v6726 = vrot.slane %v5457, %v6725
        %v6727 = vsel %vm5515, %v6726, %v6722
        %v6728 = vlaneseq
        %v6729 = vshrl.u32 %v6728, 7
        %v6730 = vsub.s32 %v5517, %v6729
        %v6731 = vrot.slane %v5460, %v6730
        %v6732 = vsel %vm5522, %v6731, %v6727
        %v6733 = vlaneseq
        %v6734 = vshrl.u32 %v6733, 7
        %v6735 = vsub.s32 %v5524, %v6734
        %v6736 = vrot.slane %v5463, %v6735
        %v6737 = vsel %vm5529, %v6736, %v6732
        %v6738 = vlaneseq
        %v6739 = vshrl.u32 %v6738, 7
        %v6740 = vsub.s32 %v5531, %v6739
        %v6741 = vrot.slane %v5466, %v6740
        %v6742 = vsel %vm5536, %v6741, %v6737
        %v6743 = vlaneseq
        %v6744 = vshrl.u32 %v6743, 7
        %v6745 = vsub.s32 %v5538, %v6744
        %v6746 = vrot.slane %v5469, %v6745
        %v6747 = vsel %vm5543, %v6746, %v6742
        %v6748 = vlaneseq
        %v6749 = vshrl.u32 %v6748, 7
        %v6750 = vsub.s32 %v5545, %v6749
        %v6751 = vrot.slane %v5472, %v6750
        %v6752 = vsel %vm5550, %v6751, %v6747
        %v6753 = vlaneseq
        %v6754 = vshrl.u32 %v6753, 7
        %v6755 = vsub.s32 %v5552, %v6754
        %v6756 = vrot.slane %v5475, %v6755
        %v6757 = vsel %vm5557, %v6756, %v6752
        %v6758 = vlaneseq
        %v6759 = vshrl.u32 %v6758, 7
        %v6760 = vsub.s32 %v5559, %v6759
        %v6761 = vrot.slane %v5478, %v6760
        %v6762 = vsel %vm5564, %v6761, %v6757
        %v6763 = vlaneseq
        %v6764 = vshrl.u32 %v6763, 7
        %v6765 = vsub.s32 %v5566, %v6764
        %v6766 = vrot.slane %v5481, %v6765
        %v6767 = vsel %vm5571, %v6766, %v6762
        %v6768 = vlaneseq
        %v6769 = vshrl.u32 %v6768, 7
        %v6770 = vsub.s32 %v5573, %v6769
        %v6771 = vrot.slane %v5484, %v6770
        %v6772 = vsel %vm5578, %v6771, %v6767
        %v6773 = vlaneseq
        %v6774 = vshrl.u32 %v6773, 7
        %v6775 = vsub.s32 %v5580, %v6774
        %v6776 = vrot.slane %v5487, %v6775
        %v6777 = vsel %vm5585, %v6776, %v6772
        %v6778 = vlaneseq
        %v6779 = vshrl.u32 %v6778, 7
        %v6780 = vsub.s32 %v5587, %v6779
        %v6781 = vrot.slane %v5490, %v6780
        %v6782 = vsel %vm5592, %v6781, %v6777
        %v6783 = vlaneseq
        %v6784 = vshrl.u32 %v6783, 7
        %v6785 = vsub.s32 %v5594, %v6784
        %v6786 = vrot.slane %v5493, %v6785
        %v6787 = vsel %vm5599, %v6786, %v6782
        %v6788 = vlaneseq
        %v6789 = vshrl.u32 %v6788, 7
        %v6790 = vsub.s32 %v5601, %v6789
        %v6791 = vrot.slane %v5496, %v6790
        %v6792 = vsel %vm5606, %v6791, %v6787
        %vm6793 = vcmask 1041409
        %v6794 = vsel %vm6793, %v5686, %v5607
        %vm6795 = vcmask 1042434
        %v6796 = vsel %vm6795, %v5765, %v6794
        %vm6797 = vcmask 1043459
        %v6798 = vsel %vm6797, %v5844, %v6796
        %vm6799 = vcmask 1044484
        %v6800 = vsel %vm6799, %v5923, %v6798
        %vm6801 = vcmask 1045509
        %v6802 = vsel %vm6801, %v6002, %v6800
        %vm6803 = vcmask 1046534
        %v6804 = vsel %vm6803, %v6081, %v6802
        %vm6805 = vcmask 1047559
        %v6806 = vsel %vm6805, %v6160, %v6804
        %v6807 = vsel %vm6793, %v6318, %v6239
        %v6808 = vsel %vm6795, %v6397, %v6807
        %v6809 = vsel %vm6797, %v6476, %v6808
        %v6810 = vsel %vm6799, %v6555, %v6809
        %v6811 = vsel %vm6801, %v6634, %v6810
        %v6812 = vsel %vm6803, %v6713, %v6811
        %v6813 = vsel %vm6805, %v6792, %v6812
        %6816 = vst [vmem:[%s420] sm:$0xff] %v6806
        %6817 = vst [vmem:[%s420 + $0x8] sm:$0xff] %v6813
        %s6818 = sand.u32 %s267, 1
        %s6819 = scalar_lea.sflag [#allocation5], %s6818
        %s6820 = sand.u32 %s267, 1
        %s6821 = smul.addr %s6820, 16
        %s6822 = scalar_lea.vmem [#allocation4], %s6821
        // Predicated region
        $region61: #{tpu_custom_call.1} parent=55 // pred_check
          %p6823 = pneg %p277
        $region62: #{tpu_custom_call.1} parent=55 // pred_check_branch
          %6825 = sbr.rel (%p6823) target = $region64
        $region63: #{tpu_custom_call.1} parent=55 // pred_region
          %s6826 = smul.u32 2, %s30
          %s6828 = ssub.s32 256, 256
          %6829 = vsyncadd %s6819, %s6828
          %s6830 = sadd.s32 %s31, %s6826
          %s6831 = smul.addr %s29, 2
          %s6832 = sadd.s32 %s6830, %s6831
          %s6833 = smul.addr %s6832, 128
          %s6834 = scalar_lea.hbm %s9, %s6833
          %s6835 = sshll.u32 %s6822, 4
          %s6836 = int_to_ptr.vmem [resolvable:$true] %s6835
          %6841 = dma.vmem_to_hbm [thread:$0]  %s6836, 256, %s6834, %s6819, 128, 128, 8
        $region64: #{tpu_custom_call.1} parent=55 // pred_fallthru
          _
      $region56: #{tpu_custom_call.1} parent=5 // pred_fallthru
        _
      %p6842 = scmp.le.s32.totalorder 2, %s19
      // Predicated region
      $region65: #{tpu_custom_call.1} parent=5 // pred_check
        %p6843 = pneg %p6842
      $region66: #{tpu_custom_call.1} parent=5 // pred_check_branch
        %6845 = sbr.rel (%p6843) target = $region68
      $region67: #{tpu_custom_call.1} parent=5 // pred_region
        %s6846 = ssub.s32 %s19, 2
        // Predicated region
        $region69: #{tpu_custom_call.1} parent=67 // pred_check
          %p6847 = pneg %p283
        $region70: #{tpu_custom_call.1} parent=67 // pred_check_branch
          %6849 = sbr.rel (%p6847) target = $region72
        $region71: #{tpu_custom_call.1} parent=67 // pred_region
          %s6850 = sand.u32 %s268, 1
          %s6851 = scalar_lea.sflag [#allocation5], %s6850
          %s6852 = sand.u32 %s268, 1
          %s6853 = smul.addr %s6852, 16
          %s6854 = scalar_lea.vmem [#allocation4], %s6853
          %6855 = dma.done %s6851, 256
        $region72: #{tpu_custom_call.1} parent=67 // pred_fallthru
          _
      $region68: #{tpu_custom_call.1} parent=5 // pred_fallthru
        _
    $region6: #{tpu_custom_call.1} parent=1 // loop_footer
      %s23 = sadd.s32 1, %s19
    $region7: #{tpu_custom_call.1} parent=1 // loop_footer_branch
      %18 = sbr.rel target = $region3
    $region8: #{tpu_custom_call.1} parent=1 // loop_exit
      _
    %6856 = vsyncpa [#allocation5], 1
    %s6857 = scalar_lea.sflag [#allocation5], 1
    %6858 = vsyncpa %s6857, 1

</llo_original>
